<compile_context>
chip_gen: v6e
topology: v6e:2x2x1
jax: 0.10.0
libtpu: 0.0.40
codegen_flags: <defaults>
</compile_context>

<pallas_src>
import jax
import jax.numpy as jnp
from jax import lax
from jax.experimental import pallas as pl
from jax.experimental.pallas import tpu as pltpu


def _round_up(x, m):
    return ((x + m - 1) // m) * m


def decoder_kernel(x0_ref, h0_ref, a0_ref, gh0_ref, w_big_ref,
                   b_hn_ref, b_tpx_ref, b_tp_ref, y_ref,
                   x_scr, h_scr, a_scr, gh_scr):
    """One (batch_block, time_chunk) tile of the GRU decoder recurrence.

    Padded shapes (f32 unless noted):
      x0_ref   : (Bb, Dp)          x_0 = gt[:, 0, :]
      h0_ref   : (Bb, Hp)          initial hidden state
      a0_ref   : (Bb, 3Hp)         x_0 @ W_x + [b_ir+b_hr | b_iz+b_hz | b_in]
      gh0_ref  : (Bb, 3Hp)         h_0 @ W_h
      w_big_ref: (Hp, 6Hp+Dp)      [W_h | W_tp@W_x | W_tp]   (f32 or bf16)
      b_hn_ref : (1, Hp)           b_hn (inside the r-multiply)
      b_tpx_ref: (1, 3Hp)          b_tp @ W_x
      b_tp_ref : (1, Dp)           b_tp
      y_ref    : (Bb, Tc*Dp)       outputs for this time chunk (lane-dense)
      *_scr    : VMEM carries of x / h / a / gh across time chunks
    """
    Bb, Dp = x0_ref.shape
    Hp = h0_ref.shape[-1]
    G = 3 * Hp
    Tc = y_ref.shape[-1] // Dp

    # First time-chunk of each batch block: load the recurrent state.
    @pl.when(pl.program_id(1) == 0)
    def _init():
        x_scr[...] = x0_ref[...]
        h_scr[...] = h0_ref[...]
        a_scr[...] = a0_ref[...]
        gh_scr[...] = gh0_ref[...]

    # Constants hoisted out of the recurrence (JAX does not CSE broadcasts).
    w_big = w_big_ref[...]
    b_hn = jnp.broadcast_to(b_hn_ref[...], (Bb, Hp))
    b_tpx = jnp.broadcast_to(b_tpx_ref[...], (Bb, G))
    b_tp = jnp.broadcast_to(b_tp_ref[...], (Bb, Dp))

    x = x_scr[...]
    h = h_scr[...]
    a = a_scr[...]      # x-path gate pre-activation (includes gate biases)
    gh = gh_scr[...]    # h-path gate pre-activation

    # Static unroll over the chunk: static 128-aligned lane offsets -> wide
    # unmasked stores; chunk length is bounded (<= 32) by the wrapper.
    for t in range(Tc):
        r = jax.nn.sigmoid(a[:, 0:Hp] + gh[:, 0:Hp])
        z = jax.nn.sigmoid(a[:, Hp:2 * Hp] + gh[:, Hp:2 * Hp])
        n = jnp.tanh(a[:, 2 * Hp:G] + r * (gh[:, 2 * Hp:G] + b_hn))
        h = (1.0 - z) * n + z * h
        # Single fused MXU matmul per step: [gh' | a-increment | x-increment].
        fused = jnp.dot(h.astype(w_big.dtype), w_big,
                        preferred_element_type=jnp.float32)
        gh = fused[:, 0:G]
        a = a + fused[:, G:2 * G] + b_tpx
        x = x + fused[:, 2 * G:] + b_tp
        y_ref[:, t * Dp:(t + 1) * Dp] = x

    # Carry the state to the next time chunk.
    x_scr[...] = x
    h_scr[...] = h
    a_scr[...] = a
    gh_scr[...] = gh


def decoder_forward(h, time_steps, gt, params, *, batch_block=None,
                    time_chunk=None, weights_dtype=jnp.bfloat16):
    """Pallas-backed Decoder.forward (epoch = inf path). Returns (B, T, D) f32."""
    B, H = h.shape
    D = gt.shape[-1]
    T = int(time_steps)
    Hp = _round_up(H, 128)
    Dp = _round_up(D, 128)
    G = 3 * Hp
    f32 = jnp.float32
    hi = lax.Precision.HIGHEST

    w_ih_t = params["w_ih"].T.astype(f32)   # (D, 3H), gate cols [r|z|n]
    w_hh_t = params["w_hh"].T.astype(f32)   # (H, 3H)
    b_ih = params["b_ih"].astype(f32)       # (3H,)
    b_hh = params["b_hh"].astype(f32)       # (3H,)
    w_tp_t = params["w_tp"].T.astype(f32)   # (H, D)
    b_tp = params["b_tp"].astype(f32)       # (D,)

    def pad_gate_cols(w, rows, rows_p):
        # (rows, 3H) -> (rows_p, 3Hp), each gate in its own Hp-wide lane block.
        out = jnp.zeros((rows_p, G), f32)
        out = out.at[:rows, 0:H].set(w[:, 0:H])                    # r
        out = out.at[:rows, Hp:Hp + H].set(w[:, H:2 * H])          # z
        out = out.at[:rows, 2 * Hp:2 * Hp + H].set(w[:, 2 * H:])   # n
        return out

    w_x = pad_gate_cols(w_ih_t, D, Dp)      # (Dp, G)   x -> gates
    w_h = pad_gate_cols(w_hh_t, H, Hp)      # (Hp, G)   h -> gates
    w_tp_p = jnp.zeros((Hp, Dp), f32).at[:H, :D].set(w_tp_t)

    b_gates = jnp.zeros((1, G), f32)
    b_gates = b_gates.at[0, 0:H].set(b_ih[0:H] + b_hh[0:H])                   # r
    b_gates = b_gates.at[0, Hp:Hp + H].set(b_ih[H:2 * H] + b_hh[H:2 * H])     # z
    b_gates = b_gates.at[0, 2 * Hp:2 * Hp + H].set(b_ih[2 * H:])              # b_in
    b_hn_p = jnp.zeros((1, Hp), f32).at[0, :H].set(b_hh[2 * H:])              # b_hn
    b_tp_p = jnp.zeros((1, Dp), f32).at[0, :D].set(b_tp)

    # Critical-path fusion: a_{t+1} = a_t + (h_{t+1} @ W_tp + b_tp) @ W_x
    #                               = a_t + h_{t+1} @ (W_tp @ W_x) + b_tp @ W_x
    w_tpx = jnp.dot(w_tp_p, w_x, precision=hi)                 # (Hp, G)
    b_tpx = jnp.dot(b_tp_p, w_x, precision=hi)                 # (1, G)
    # Single fused per-step weight: h_new @ [W_h | W_tp@W_x | W_tp].
    w_big = jnp.concatenate([w_h, w_tpx, w_tp_p], axis=1).astype(weights_dtype)

    # ---- batch padding / blocking (sublane-aligned; >=2 blocks on big B) ----
    Bp = _round_up(B, 8)
    if batch_block is None:
        bb = Bp if Bp < 16 else min(_round_up((Bp + 1) // 2, 8), 256)
    else:
        bb = min(_round_up(max(int(batch_block), 1), 8), Bp)
    Bp = _round_up(Bp, bb)
    nb = Bp // bb

    x0_p = jnp.zeros((Bp, Dp), f32).at[:B, :D].set(gt[:, 0, :].astype(f32))
    h0_p = jnp.zeros((Bp, Hp), f32).at[:B, :H].set(h.astype(f32))

    wd = weights_dtype
    a0_p = jnp.dot(x0_p.astype(wd), w_x.astype(wd), precision=hi,
                   preferred_element_type=f32) + b_gates
    gh0_p = jnp.dot(h0_p.astype(wd), w_h.astype(wd), precision=hi,
                    preferred_element_type=f32)

    # ---- time chunking: bounds Y VMEM residency, overlaps writeback DMA ----
    if time_chunk is None:
        budget = 4 << 20                         # bytes of Y per chunk block
        tc = max(1, min(T, 32, budget // (bb * Dp * 4)))
    else:
        tc = max(1, min(int(time_chunk), T))
    ntc = -(-T // tc)
    Tpad = ntc * tc

    # Explicit scoped-VMEM limit sized from the actual blocks (+headroom).
    wbytes = jnp.dtype(weights_dtype).itemsize
    block_in = ((bb * Dp + bb * Hp + 2 * bb * G) * 4
                + Hp * (2 * G + Dp) * wbytes + (Hp + G + Dp) * 4)
    block_out = bb * tc * Dp * 4
    scratch = bb * (Dp + Hp + 2 * G) * 4
    vmem_limit = int(min(max(32 << 20, 2 * (2 * (block_in + block_out) + scratch)),
                         128 << 20))

    const = lambda i, t: (0, 0)
    batch = lambda i, t: (i, 0)

    y_flat = pl.pallas_call(
        decoder_kernel,
        out_shape=jax.ShapeDtypeStruct((Bp, Tpad * Dp), f32),
        grid=(nb, ntc),
        in_specs=[
            pl.BlockSpec((bb, Dp), batch),            # x0
            pl.BlockSpec((bb, Hp), batch),            # h0
            pl.BlockSpec((bb, G), batch),             # a0
            pl.BlockSpec((bb, G), batch),             # gh0
            pl.BlockSpec((Hp, 2 * G + Dp), const),    # fused step weight
            pl.BlockSpec((1, Hp), const),             # b_hn
            pl.BlockSpec((1, G), const),              # b_tp @ W_x
            pl.BlockSpec((1, Dp), const),             # b_tp
        ],
        out_specs=pl.BlockSpec((bb, tc * Dp), lambda i, t: (i, t)),
        scratch_shapes=[
            pltpu.VMEM((bb, Dp), f32),   # x carry
            pltpu.VMEM((bb, Hp), f32),   # h carry
            pltpu.VMEM((bb, G), f32),    # a carry
            pltpu.VMEM((bb, G), f32),    # gh carry
        ],
        compiler_params=pltpu.CompilerParams(
            dimension_semantics=("parallel", "arbitrary"),
            vmem_limit_bytes=vmem_limit,
        ),
    )(x0_p, h0_p, a0_p, gh0_p, w_big, b_hn_p, b_tpx, b_tp_p)

    # (Bp, Tpad*Dp) --free row-major reshape--> (B, T, Dp) --lane slice--> D.
    return y_flat[:B, :T * Dp].reshape(B, T, Dp)[:, :, :D]


def decoder_reference(h0, time_steps, gt, params):
    """Pure-JAX reference for the same deterministic (epoch=inf) forward."""
    H = h0.shape[-1]
    hi = lax.Precision.HIGHEST
    x = gt[:, 0, :].astype(jnp.float32)
    h = h0.astype(jnp.float32)
    ys = []
    for _ in range(time_steps):
        gi = jnp.dot(x, params["w_ih"].T, precision=hi) + params["b_ih"]
        gh = jnp.dot(h, params["w_hh"].T, precision=hi) + params["b_hh"]
        r = jax.nn.sigmoid(gi[:, :H] + gh[:, :H])
        z = jax.nn.sigmoid(gi[:, H:2 * H] + gh[:, H:2 * H])
        n = jnp.tanh(gi[:, 2 * H:] + r * gh[:, 2 * H:])
        h = (1.0 - z) * n + z * h
        x = x + jnp.dot(h, params["w_tp"].T, precision=hi) + params["b_tp"]
        ys.append(x[:, None, :])
    return jnp.concatenate(ys, axis=1)


def init_params(key, hidden_size, input_size):
    """Deterministic init mimicking PyTorch's U(-1/sqrt(H), 1/sqrt(H)) shapes."""
    k = 1.0 / jnp.sqrt(jnp.float32(hidden_size))
    keys = jax.random.split(key, 6)
    u = lambda kk, shape: jax.random.uniform(kk, shape, jnp.float32, -k, k)
    return {
        "w_ih": u(keys[0], (3 * hidden_size, input_size)),   # GRUCell.weight_ih
        "w_hh": u(keys[1], (3 * hidden_size, hidden_size)),  # GRUCell.weight_hh
        "b_ih": u(keys[2], (3 * hidden_size,)),              # GRUCell.bias_ih
        "b_hh": u(keys[3], (3 * hidden_size,)),              # GRUCell.bias_hh
        "w_tp": u(keys[4], (input_size, hidden_size)),       # tp.weight
        "b_tp": u(keys[5], (input_size,)),                   # tp.bias
    }


if __name__ == "__main__":
    B, T, D, H = 2, 8, 16, 32   # batch, time_steps, input_size, hidden_size

    key = jax.random.PRNGKey(0)
    k_h, k_gt, k_p = jax.random.split(key, 3)
    h0 = jax.random.normal(k_h, (B, H), jnp.float32)
    gt = jax.random.normal(k_gt, (B, T, D), jnp.float32)
    params = init_params(k_p, H, D)

    y_ref = decoder_reference(h0, T, gt, params)

    # 1) f32 weights: numerically faithful path.
    y32 = jax.block_until_ready(
        decoder_forward(h0, T, gt, params, weights_dtype=jnp.float32))
    assert y32.shape == (B, T, D)
    assert jnp.allclose(y32, y_ref, atol=2e-2, rtol=2e-2), "f32 mismatch"

    # 2) bf16 weights (default): MXU-native fast path, f32 state/accumulation.
    ybf = jax.block_until_ready(decoder_forward(h0, T, gt, params))
    assert ybf.shape == (B, T, D)
    assert jnp.allclose(ybf, y_ref, atol=1e-1, rtol=1e-1), "bf16 mismatch"

    # 3) Multi batch-block + multi time-chunk path: carried VMEM state,
    #    megacore-parallel batch axis, padded batch rows and padded time.
    B2, T2 = 20, 10
    k_h2, k_gt2 = jax.random.split(jax.random.PRNGKey(1), 2)
    h02 = jax.random.normal(k_h2, (B2, H), jnp.float32)
    gt2 = jax.random.normal(k_gt2, (B2, T2, D), jnp.float32)
    y2 = jax.block_until_ready(
        decoder_forward(h02, T2, gt2, params, weights_dtype=jnp.float32,
                        time_chunk=3))
    y2_ref = decoder_reference(h02, T2, gt2, params)
    assert y2.shape == (B2, T2, D)
    assert jnp.allclose(y2, y2_ref, atol=2e-2, rtol=2e-2), "chunked mismatch"

    print("KERNEL_OK")
</pallas_src>

<mosaic_0001>
module attributes {stable_mosaic.version = 11 : i64} {
  func.func @decoder_kernel(%arg0: i32, %arg1: i32, %arg2: memref<8x128xf32, #tpu.memory_space<vmem>>, %arg3: memref<8x128xf32, #tpu.memory_space<vmem>>, %arg4: memref<8x384xf32, #tpu.memory_space<vmem>>, %arg5: memref<8x384xf32, #tpu.memory_space<vmem>>, %arg6: memref<128x896xf32, #tpu.memory_space<vmem>>, %arg7: memref<1x128xf32, #tpu.memory_space<vmem>>, %arg8: memref<1x384xf32, #tpu.memory_space<vmem>>, %arg9: memref<1x128xf32, #tpu.memory_space<vmem>>, %arg10: memref<8x1024xf32, #tpu.memory_space<vmem>>, %arg11: memref<8x128xf32, #tpu.memory_space<vmem>>, %arg12: memref<8x128xf32, #tpu.memory_space<vmem>>, %arg13: memref<8x384xf32, #tpu.memory_space<vmem>>, %arg14: memref<8x384xf32, #tpu.memory_space<vmem>>) attributes {dimension_semantics = [#tpu.dimension_semantics<parallel>, #tpu.dimension_semantics<arbitrary>], iteration_bounds = array<i64: 1, 1>, scalar_prefetch = 0 : i64, scratch_operands = 4 : i64, tpu.core_type = #tpu.core_type<tc>, window_params = [{transform_indices = @transform_0, window_bounds = array<i64: 8, 128>}, {transform_indices = @transform_1, window_bounds = array<i64: 8, 128>}, {transform_indices = @transform_2, window_bounds = array<i64: 8, 384>}, {transform_indices = @transform_3, window_bounds = array<i64: 8, 384>}, {pipeline_mode = #tpu.pipeline_mode<synchronous>, transform_indices = @transform_4, window_bounds = array<i64: 128, 896>}, {pipeline_mode = #tpu.pipeline_mode<synchronous>, transform_indices = @transform_5, window_bounds = array<i64: 1, 128>}, {pipeline_mode = #tpu.pipeline_mode<synchronous>, transform_indices = @transform_6, window_bounds = array<i64: 1, 384>}, {pipeline_mode = #tpu.pipeline_mode<synchronous>, transform_indices = @transform_7, window_bounds = array<i64: 1, 128>}, {transform_indices = @transform_8, window_bounds = array<i64: 8, 1024>}]} {
    %c0_i32 = arith.constant 0 : i32
    %0 = arith.cmpi eq, %arg1, %c0_i32 : i32
    %1 = arith.extui %0 : i1 to i32
    %c0_i32_0 = arith.constant 0 : i32
    %2 = arith.cmpi ne, %1, %c0_i32_0 : i32
    scf.if %2 {
      %c0_64 = arith.constant 0 : index
      %c0_65 = arith.constant 0 : index
      %309 = vector.load %arg2[%c0_64, %c0_65] : memref<8x128xf32, #tpu.memory_space<vmem>>, vector<8x128xf32>
      %c0_66 = arith.constant 0 : index
      %c0_67 = arith.constant 0 : index
      %310 = vector.load %arg11[%c0_66, %c0_67] : memref<8x128xf32, #tpu.memory_space<vmem>>, vector<8x128xf32>
      tpu.vector_store %arg11[%c0_66, %c0_67], %309 {strides = array<i32>} : memref<8x128xf32, #tpu.memory_space<vmem>>, vector<8x128xf32>,
      %c0_68 = arith.constant 0 : index
      %c0_69 = arith.constant 0 : index
      %311 = vector.load %arg3[%c0_68, %c0_69] : memref<8x128xf32, #tpu.memory_space<vmem>>, vector<8x128xf32>
      %c0_70 = arith.constant 0 : index
      %c0_71 = arith.constant 0 : index
      %312 = vector.load %arg12[%c0_70, %c0_71] : memref<8x128xf32, #tpu.memory_space<vmem>>, vector<8x128xf32>
      tpu.vector_store %arg12[%c0_70, %c0_71], %311 {strides = array<i32>} : memref<8x128xf32, #tpu.memory_space<vmem>>, vector<8x128xf32>,
      %c0_72 = arith.constant 0 : index
      %c0_73 = arith.constant 0 : index
      %313 = vector.load %arg4[%c0_72, %c0_73] : memref<8x384xf32, #tpu.memory_space<vmem>>, vector<8x384xf32>
      %c0_74 = arith.constant 0 : index
      %c0_75 = arith.constant 0 : index
      %314 = vector.load %arg13[%c0_74, %c0_75] : memref<8x384xf32, #tpu.memory_space<vmem>>, vector<8x384xf32>
      tpu.vector_store %arg13[%c0_74, %c0_75], %313 {strides = array<i32>} : memref<8x384xf32, #tpu.memory_space<vmem>>, vector<8x384xf32>,
      %c0_76 = arith.constant 0 : index
      %c0_77 = arith.constant 0 : index
      %315 = vector.load %arg5[%c0_76, %c0_77] : memref<8x384xf32, #tpu.memory_space<vmem>>, vector<8x384xf32>
      %c0_78 = arith.constant 0 : index
      %c0_79 = arith.constant 0 : index
      %316 = vector.load %arg14[%c0_78, %c0_79] : memref<8x384xf32, #tpu.memory_space<vmem>>, vector<8x384xf32>
      tpu.vector_store %arg14[%c0_78, %c0_79], %315 {strides = array<i32>} : memref<8x384xf32, #tpu.memory_space<vmem>>, vector<8x384xf32>,
    } else {
    }
    %c0 = arith.constant 0 : index
    %c0_1 = arith.constant 0 : index
    %3 = vector.load %arg6[%c0, %c0_1] : memref<128x896xf32, #tpu.memory_space<vmem>>, vector<128x896xf32>
    %c0_2 = arith.constant 0 : index
    %c0_3 = arith.constant 0 : index
    %4 = vector.load %arg7[%c0_2, %c0_3] : memref<1x128xf32, #tpu.memory_space<vmem>>, vector<1x128xf32>
    %5 = vector.shape_cast %4 : vector<1x128xf32> to vector<1x128xf32>
    %6 = vector.broadcast %5 : vector<1x128xf32> to vector<8x128xf32>
    %c0_4 = arith.constant 0 : index
    %c0_5 = arith.constant 0 : index
    %7 = vector.load %arg8[%c0_4, %c0_5] : memref<1x384xf32, #tpu.memory_space<vmem>>, vector<1x384xf32>
    %8 = vector.shape_cast %7 : vector<1x384xf32> to vector<1x384xf32>
    %9 = vector.broadcast %8 : vector<1x384xf32> to vector<8x384xf32>
    %c0_6 = arith.constant 0 : index
    %c0_7 = arith.constant 0 : index
    %10 = vector.load %arg9[%c0_6, %c0_7] : memref<1x128xf32, #tpu.memory_space<vmem>>, vector<1x128xf32>
    %11 = vector.shape_cast %10 : vector<1x128xf32> to vector<1x128xf32>
    %12 = vector.broadcast %11 : vector<1x128xf32> to vector<8x128xf32>
    %c0_8 = arith.constant 0 : index
    %c0_9 = arith.constant 0 : index
    %13 = vector.load %arg11[%c0_8, %c0_9] : memref<8x128xf32, #tpu.memory_space<vmem>>, vector<8x128xf32>
    %c0_10 = arith.constant 0 : index
    %c0_11 = arith.constant 0 : index
    %14 = vector.load %arg12[%c0_10, %c0_11] : memref<8x128xf32, #tpu.memory_space<vmem>>, vector<8x128xf32>
    %c0_12 = arith.constant 0 : index
    %c0_13 = arith.constant 0 : index
    %15 = vector.load %arg13[%c0_12, %c0_13] : memref<8x384xf32, #tpu.memory_space<vmem>>, vector<8x384xf32>
    %c0_14 = arith.constant 0 : index
    %c0_15 = arith.constant 0 : index
    %16 = vector.load %arg14[%c0_14, %c0_15] : memref<8x384xf32, #tpu.memory_space<vmem>>, vector<8x384xf32>
    %17 = vector.extract_strided_slice %15 {offsets = [0, 0], sizes = [8, 128], strides = [1, 1]} : vector<8x384xf32> to vector<8x128xf32>
    %18 = vector.extract_strided_slice %16 {offsets = [0, 0], sizes = [8, 128], strides = [1, 1]} : vector<8x384xf32> to vector<8x128xf32>
    %19 = arith.addf %17, %18 : vector<8x128xf32>
    %20 = arith.negf %19 : vector<8x128xf32>
    %21 = math.exp %20 : vector<8x128xf32>
    %cst = arith.constant 1.000000e+00 : f32
    %22 = vector.broadcast %cst : f32 to vector<8x128xf32>
    %23 = arith.addf %22, %21 : vector<8x128xf32>
    %24 = arith.divf %22, %23 : vector<8x128xf32>
    %25 = vector.extract_strided_slice %15 {offsets = [0, 128], sizes = [8, 128], strides = [1, 1]} : vector<8x384xf32> to vector<8x128xf32>
    %26 = vector.extract_strided_slice %16 {offsets = [0, 128], sizes = [8, 128], strides = [1, 1]} : vector<8x384xf32> to vector<8x128xf32>
    %27 = arith.addf %25, %26 : vector<8x128xf32>
    %28 = arith.negf %27 : vector<8x128xf32>
    %29 = math.exp %28 : vector<8x128xf32>
    %cst_16 = arith.constant 1.000000e+00 : f32
    %30 = vector.broadcast %cst_16 : f32 to vector<8x128xf32>
    %31 = arith.addf %30, %29 : vector<8x128xf32>
    %32 = arith.divf %30, %31 : vector<8x128xf32>
    %33 = vector.extract_strided_slice %15 {offsets = [0, 256], sizes = [8, 128], strides = [1, 1]} : vector<8x384xf32> to vector<8x128xf32>
    %34 = vector.extract_strided_slice %16 {offsets = [0, 256], sizes = [8, 128], strides = [1, 1]} : vector<8x384xf32> to vector<8x128xf32>
    %35 = arith.addf %34, %6 : vector<8x128xf32>
    %36 = arith.mulf %24, %35 : vector<8x128xf32>
    %37 = arith.addf %33, %36 : vector<8x128xf32>
    %38 = math.tanh %37 : vector<8x128xf32>
    %cst_17 = arith.constant 1.000000e+00 : f32
    %39 = vector.broadcast %cst_17 : f32 to vector<8x128xf32>
    %40 = arith.subf %39, %32 : vector<8x128xf32>
    %41 = arith.mulf %40, %38 : vector<8x128xf32>
    %42 = arith.mulf %32, %14 : vector<8x128xf32>
    %43 = arith.addf %41, %42 : vector<8x128xf32>
    %cst_18 = arith.constant dense<0.000000e+00> : vector<8x896xf32>
    %44 = tpu.matmul %43, %3, %cst_18 {dimension_numbers = #tpu.dot_dimension_numbers<[1], [0], [0], [1], [0, 0, 1, 1], [], []>} : vector<8x128xf32>, vector<128x896xf32>, vector<8x896xf32> -> vector<8x896xf32>
    %45 = vector.extract_strided_slice %44 {offsets = [0, 0], sizes = [8, 384], strides = [1, 1]} : vector<8x896xf32> to vector<8x384xf32>
    %46 = vector.extract_strided_slice %44 {offsets = [0, 384], sizes = [8, 384], strides = [1, 1]} : vector<8x896xf32> to vector<8x384xf32>
    %47 = arith.addf %15, %46 : vector<8x384xf32>
    %48 = arith.addf %47, %9 : vector<8x384xf32>
    %49 = vector.extract_strided_slice %44 {offsets = [0, 768], sizes = [8, 128], strides = [1, 1]} : vector<8x896xf32> to vector<8x128xf32>
    %50 = arith.addf %13, %49 : vector<8x128xf32>
    %51 = arith.addf %50, %12 : vector<8x128xf32>
    %c0_19 = arith.constant 0 : index
    %c0_20 = arith.constant 0 : index
    %52 = vector.load %arg10[%c0_19, %c0_20] : memref<8x1024xf32, #tpu.memory_space<vmem>>, vector<8x128xf32>
    tpu.vector_store %arg10[%c0_19, %c0_20], %51 {strides = array<i32>} : memref<8x1024xf32, #tpu.memory_space<vmem>>, vector<8x128xf32>,
    %53 = vector.extract_strided_slice %48 {offsets = [0, 0], sizes = [8, 128], strides = [1, 1]} : vector<8x384xf32> to vector<8x128xf32>
    %54 = vector.extract_strided_slice %45 {offsets = [0, 0], sizes = [8, 128], strides = [1, 1]} : vector<8x384xf32> to vector<8x128xf32>
    %55 = arith.addf %53, %54 : vector<8x128xf32>
    %56 = arith.negf %55 : vector<8x128xf32>
    %57 = math.exp %56 : vector<8x128xf32>
    %cst_21 = arith.constant 1.000000e+00 : f32
    %58 = vector.broadcast %cst_21 : f32 to vector<8x128xf32>
    %59 = arith.addf %58, %57 : vector<8x128xf32>
    %60 = arith.divf %58, %59 : vector<8x128xf32>
    %61 = vector.extract_strided_slice %48 {offsets = [0, 128], sizes = [8, 128], strides = [1, 1]} : vector<8x384xf32> to vector<8x128xf32>
    %62 = vector.extract_strided_slice %45 {offsets = [0, 128], sizes = [8, 128], strides = [1, 1]} : vector<8x384xf32> to vector<8x128xf32>
    %63 = arith.addf %61, %62 : vector<8x128xf32>
    %64 = arith.negf %63 : vector<8x128xf32>
    %65 = math.exp %64 : vector<8x128xf32>
    %cst_22 = arith.constant 1.000000e+00 : f32
    %66 = vector.broadcast %cst_22 : f32 to vector<8x128xf32>
    %67 = arith.addf %66, %65 : vector<8x128xf32>
    %68 = arith.divf %66, %67 : vector<8x128xf32>
    %69 = vector.extract_strided_slice %48 {offsets = [0, 256], sizes = [8, 128], strides = [1, 1]} : vector<8x384xf32> to vector<8x128xf32>
    %70 = vector.extract_strided_slice %45 {offsets = [0, 256], sizes = [8, 128], strides = [1, 1]} : vector<8x384xf32> to vector<8x128xf32>
    %71 = arith.addf %70, %6 : vector<8x128xf32>
    %72 = arith.mulf %60, %71 : vector<8x128xf32>
    %73 = arith.addf %69, %72 : vector<8x128xf32>
    %74 = math.tanh %73 : vector<8x128xf32>
    %cst_23 = arith.constant 1.000000e+00 : f32
    %75 = vector.broadcast %cst_23 : f32 to vector<8x128xf32>
    %76 = arith.subf %75, %68 : vector<8x128xf32>
    %77 = arith.mulf %76, %74 : vector<8x128xf32>
    %78 = arith.mulf %68, %43 : vector<8x128xf32>
    %79 = arith.addf %77, %78 : vector<8x128xf32>
    %cst_24 = arith.constant dense<0.000000e+00> : vector<8x896xf32>
    %80 = tpu.matmul %79, %3, %cst_24 {dimension_numbers = #tpu.dot_dimension_numbers<[1], [0], [0], [1], [0, 0, 1, 1], [], []>} : vector<8x128xf32>, vector<128x896xf32>, vector<8x896xf32> -> vector<8x896xf32>
    %81 = vector.extract_strided_slice %80 {offsets = [0, 0], sizes = [8, 384], strides = [1, 1]} : vector<8x896xf32> to vector<8x384xf32>
    %82 = vector.extract_strided_slice %80 {offsets = [0, 384], sizes = [8, 384], strides = [1, 1]} : vector<8x896xf32> to vector<8x384xf32>
    %83 = arith.addf %48, %82 : vector<8x384xf32>
    %84 = arith.addf %83, %9 : vector<8x384xf32>
    %85 = vector.extract_strided_slice %80 {offsets = [0, 768], sizes = [8, 128], strides = [1, 1]} : vector<8x896xf32> to vector<8x128xf32>
    %86 = arith.addf %51, %85 : vector<8x128xf32>
    %87 = arith.addf %86, %12 : vector<8x128xf32>
    %c0_25 = arith.constant 0 : index
    %c128 = arith.constant 128 : index
    %88 = vector.load %arg10[%c0_25, %c128] : memref<8x1024xf32, #tpu.memory_space<vmem>>, vector<8x128xf32>
    tpu.vector_store %arg10[%c0_25, %c128], %87 {strides = array<i32>} : memref<8x1024xf32, #tpu.memory_space<vmem>>, vector<8x128xf32>,
    %89 = vector.extract_strided_slice %84 {offsets = [0, 0], sizes = [8, 128], strides = [1, 1]} : vector<8x384xf32> to vector<8x128xf32>
    %90 = vector.extract_strided_slice %81 {offsets = [0, 0], sizes = [8, 128], strides = [1, 1]} : vector<8x384xf32> to vector<8x128xf32>
    %91 = arith.addf %89, %90 : vector<8x128xf32>
    %92 = arith.negf %91 : vector<8x128xf32>
    %93 = math.exp %92 : vector<8x128xf32>
    %cst_26 = arith.constant 1.000000e+00 : f32
    %94 = vector.broadcast %cst_26 : f32 to vector<8x128xf32>
    %95 = arith.addf %94, %93 : vector<8x128xf32>
    %96 = arith.divf %94, %95 : vector<8x128xf32>
    %97 = vector.extract_strided_slice %84 {offsets = [0, 128], sizes = [8, 128], strides = [1, 1]} : vector<8x384xf32> to vector<8x128xf32>
    %98 = vector.extract_strided_slice %81 {offsets = [0, 128], sizes = [8, 128], strides = [1, 1]} : vector<8x384xf32> to vector<8x128xf32>
    %99 = arith.addf %97, %98 : vector<8x128xf32>
    %100 = arith.negf %99 : vector<8x128xf32>
    %101 = math.exp %100 : vector<8x128xf32>
    %cst_27 = arith.constant 1.000000e+00 : f32
    %102 = vector.broadcast %cst_27 : f32 to vector<8x128xf32>
    %103 = arith.addf %102, %101 : vector<8x128xf32>
    %104 = arith.divf %102, %103 : vector<8x128xf32>
    %105 = vector.extract_strided_slice %84 {offsets = [0, 256], sizes = [8, 128], strides = [1, 1]} : vector<8x384xf32> to vector<8x128xf32>
    %106 = vector.extract_strided_slice %81 {offsets = [0, 256], sizes = [8, 128], strides = [1, 1]} : vector<8x384xf32> to vector<8x128xf32>
    %107 = arith.addf %106, %6 : vector<8x128xf32>
    %108 = arith.mulf %96, %107 : vector<8x128xf32>
    %109 = arith.addf %105, %108 : vector<8x128xf32>
    %110 = math.tanh %109 : vector<8x128xf32>
    %cst_28 = arith.constant 1.000000e+00 : f32
    %111 = vector.broadcast %cst_28 : f32 to vector<8x128xf32>
    %112 = arith.subf %111, %104 : vector<8x128xf32>
    %113 = arith.mulf %112, %110 : vector<8x128xf32>
    %114 = arith.mulf %104, %79 : vector<8x128xf32>
    %115 = arith.addf %113, %114 : vector<8x128xf32>
    %cst_29 = arith.constant dense<0.000000e+00> : vector<8x896xf32>
    %116 = tpu.matmul %115, %3, %cst_29 {dimension_numbers = #tpu.dot_dimension_numbers<[1], [0], [0], [1], [0, 0, 1, 1], [], []>} : vector<8x128xf32>, vector<128x896xf32>, vector<8x896xf32> -> vector<8x896xf32>
    %117 = vector.extract_strided_slice %116 {offsets = [0, 0], sizes = [8, 384], strides = [1, 1]} : vector<8x896xf32> to vector<8x384xf32>
    %118 = vector.extract_strided_slice %116 {offsets = [0, 384], sizes = [8, 384], strides = [1, 1]} : vector<8x896xf32> to vector<8x384xf32>
    %119 = arith.addf %84, %118 : vector<8x384xf32>
    %120 = arith.addf %119, %9 : vector<8x384xf32>
    %121 = vector.extract_strided_slice %116 {offsets = [0, 768], sizes = [8, 128], strides = [1, 1]} : vector<8x896xf32> to vector<8x128xf32>
    %122 = arith.addf %87, %121 : vector<8x128xf32>
    %123 = arith.addf %122, %12 : vector<8x128xf32>
    %c0_30 = arith.constant 0 : index
    %c256 = arith.constant 256 : index
    %124 = vector.load %arg10[%c0_30, %c256] : memref<8x1024xf32, #tpu.memory_space<vmem>>, vector<8x128xf32>
    tpu.vector_store %arg10[%c0_30, %c256], %123 {strides = array<i32>} : memref<8x1024xf32, #tpu.memory_space<vmem>>, vector<8x128xf32>,
    %125 = vector.extract_strided_slice %120 {offsets = [0, 0], sizes = [8, 128], strides = [1, 1]} : vector<8x384xf32> to vector<8x128xf32>
    %126 = vector.extract_strided_slice %117 {offsets = [0, 0], sizes = [8, 128], strides = [1, 1]} : vector<8x384xf32> to vector<8x128xf32>
    %127 = arith.addf %125, %126 : vector<8x128xf32>
    %128 = arith.negf %127 : vector<8x128xf32>
    %129 = math.exp %128 : vector<8x128xf32>
    %cst_31 = arith.constant 1.000000e+00 : f32
    %130 = vector.broadcast %cst_31 : f32 to vector<8x128xf32>
    %131 = arith.addf %130, %129 : vector<8x128xf32>
    %132 = arith.divf %130, %131 : vector<8x128xf32>
    %133 = vector.extract_strided_slice %120 {offsets = [0, 128], sizes = [8, 128], strides = [1, 1]} : vector<8x384xf32> to vector<8x128xf32>
    %134 = vector.extract_strided_slice %117 {offsets = [0, 128], sizes = [8, 128], strides = [1, 1]} : vector<8x384xf32> to vector<8x128xf32>
    %135 = arith.addf %133, %134 : vector<8x128xf32>
    %136 = arith.negf %135 : vector<8x128xf32>
    %137 = math.exp %136 : vector<8x128xf32>
    %cst_32 = arith.constant 1.000000e+00 : f32
    %138 = vector.broadcast %cst_32 : f32 to vector<8x128xf32>
    %139 = arith.addf %138, %137 : vector<8x128xf32>
    %140 = arith.divf %138, %139 : vector<8x128xf32>
    %141 = vector.extract_strided_slice %120 {offsets = [0, 256], sizes = [8, 128], strides = [1, 1]} : vector<8x384xf32> to vector<8x128xf32>
    %142 = vector.extract_strided_slice %117 {offsets = [0, 256], sizes = [8, 128], strides = [1, 1]} : vector<8x384xf32> to vector<8x128xf32>
    %143 = arith.addf %142, %6 : vector<8x128xf32>
    %144 = arith.mulf %132, %143 : vector<8x128xf32>
    %145 = arith.addf %141, %144 : vector<8x128xf32>
    %146 = math.tanh %145 : vector<8x128xf32>
    %cst_33 = arith.constant 1.000000e+00 : f32
    %147 = vector.broadcast %cst_33 : f32 to vector<8x128xf32>
    %148 = arith.subf %147, %140 : vector<8x128xf32>
    %149 = arith.mulf %148, %146 : vector<8x128xf32>
    %150 = arith.mulf %140, %115 : vector<8x128xf32>
    %151 = arith.addf %149, %150 : vector<8x128xf32>
    %cst_34 = arith.constant dense<0.000000e+00> : vector<8x896xf32>
    %152 = tpu.matmul %151, %3, %cst_34 {dimension_numbers = #tpu.dot_dimension_numbers<[1], [0], [0], [1], [0, 0, 1, 1], [], []>} : vector<8x128xf32>, vector<128x896xf32>, vector<8x896xf32> -> vector<8x896xf32>
    %153 = vector.extract_strided_slice %152 {offsets = [0, 0], sizes = [8, 384], strides = [1, 1]} : vector<8x896xf32> to vector<8x384xf32>
    %154 = vector.extract_strided_slice %152 {offsets = [0, 384], sizes = [8, 384], strides = [1, 1]} : vector<8x896xf32> to vector<8x384xf32>
    %155 = arith.addf %120, %154 : vector<8x384xf32>
    %156 = arith.addf %155, %9 : vector<8x384xf32>
    %157 = vector.extract_strided_slice %152 {offsets = [0, 768], sizes = [8, 128], strides = [1, 1]} : vector<8x896xf32> to vector<8x128xf32>
    %158 = arith.addf %123, %157 : vector<8x128xf32>
    %159 = arith.addf %158, %12 : vector<8x128xf32>
    %c0_35 = arith.constant 0 : index
    %c384 = arith.constant 384 : index
    %160 = vector.load %arg10[%c0_35, %c384] : memref<8x1024xf32, #tpu.memory_space<vmem>>, vector<8x128xf32>
    tpu.vector_store %arg10[%c0_35, %c384], %159 {strides = array<i32>} : memref<8x1024xf32, #tpu.memory_space<vmem>>, vector<8x128xf32>,
    %161 = vector.extract_strided_slice %156 {offsets = [0, 0], sizes = [8, 128], strides = [1, 1]} : vector<8x384xf32> to vector<8x128xf32>
    %162 = vector.extract_strided_slice %153 {offsets = [0, 0], sizes = [8, 128], strides = [1, 1]} : vector<8x384xf32> to vector<8x128xf32>
    %163 = arith.addf %161, %162 : vector<8x128xf32>
    %164 = arith.negf %163 : vector<8x128xf32>
    %165 = math.exp %164 : vector<8x128xf32>
    %cst_36 = arith.constant 1.000000e+00 : f32
    %166 = vector.broadcast %cst_36 : f32 to vector<8x128xf32>
    %167 = arith.addf %166, %165 : vector<8x128xf32>
    %168 = arith.divf %166, %167 : vector<8x128xf32>
    %169 = vector.extract_strided_slice %156 {offsets = [0, 128], sizes = [8, 128], strides = [1, 1]} : vector<8x384xf32> to vector<8x128xf32>
    %170 = vector.extract_strided_slice %153 {offsets = [0, 128], sizes = [8, 128], strides = [1, 1]} : vector<8x384xf32> to vector<8x128xf32>
    %171 = arith.addf %169, %170 : vector<8x128xf32>
    %172 = arith.negf %171 : vector<8x128xf32>
    %173 = math.exp %172 : vector<8x128xf32>
    %cst_37 = arith.constant 1.000000e+00 : f32
    %174 = vector.broadcast %cst_37 : f32 to vector<8x128xf32>
    %175 = arith.addf %174, %173 : vector<8x128xf32>
    %176 = arith.divf %174, %175 : vector<8x128xf32>
    %177 = vector.extract_strided_slice %156 {offsets = [0, 256], sizes = [8, 128], strides = [1, 1]} : vector<8x384xf32> to vector<8x128xf32>
    %178 = vector.extract_strided_slice %153 {offsets = [0, 256], sizes = [8, 128], strides = [1, 1]} : vector<8x384xf32> to vector<8x128xf32>
    %179 = arith.addf %178, %6 : vector<8x128xf32>
    %180 = arith.mulf %168, %179 : vector<8x128xf32>
    %181 = arith.addf %177, %180 : vector<8x128xf32>
    %182 = math.tanh %181 : vector<8x128xf32>
    %cst_38 = arith.constant 1.000000e+00 : f32
    %183 = vector.broadcast %cst_38 : f32 to vector<8x128xf32>
    %184 = arith.subf %183, %176 : vector<8x128xf32>
    %185 = arith.mulf %184, %182 : vector<8x128xf32>
    %186 = arith.mulf %176, %151 : vector<8x128xf32>
    %187 = arith.addf %185, %186 : vector<8x128xf32>
    %cst_39 = arith.constant dense<0.000000e+00> : vector<8x896xf32>
    %188 = tpu.matmul %187, %3, %cst_39 {dimension_numbers = #tpu.dot_dimension_numbers<[1], [0], [0], [1], [0, 0, 1, 1], [], []>} : vector<8x128xf32>, vector<128x896xf32>, vector<8x896xf32> -> vector<8x896xf32>
    %189 = vector.extract_strided_slice %188 {offsets = [0, 0], sizes = [8, 384], strides = [1, 1]} : vector<8x896xf32> to vector<8x384xf32>
    %190 = vector.extract_strided_slice %188 {offsets = [0, 384], sizes = [8, 384], strides = [1, 1]} : vector<8x896xf32> to vector<8x384xf32>
    %191 = arith.addf %156, %190 : vector<8x384xf32>
    %192 = arith.addf %191, %9 : vector<8x384xf32>
    %193 = vector.extract_strided_slice %188 {offsets = [0, 768], sizes = [8, 128], strides = [1, 1]} : vector<8x896xf32> to vector<8x128xf32>
    %194 = arith.addf %159, %193 : vector<8x128xf32>
    %195 = arith.addf %194, %12 : vector<8x128xf32>
    %c0_40 = arith.constant 0 : index
    %c512 = arith.constant 512 : index
    %196 = vector.load %arg10[%c0_40, %c512] : memref<8x1024xf32, #tpu.memory_space<vmem>>, vector<8x128xf32>
    tpu.vector_store %arg10[%c0_40, %c512], %195 {strides = array<i32>} : memref<8x1024xf32, #tpu.memory_space<vmem>>, vector<8x128xf32>,
    %197 = vector.extract_strided_slice %192 {offsets = [0, 0], sizes = [8, 128], strides = [1, 1]} : vector<8x384xf32> to vector<8x128xf32>
    %198 = vector.extract_strided_slice %189 {offsets = [0, 0], sizes = [8, 128], strides = [1, 1]} : vector<8x384xf32> to vector<8x128xf32>
    %199 = arith.addf %197, %198 : vector<8x128xf32>
    %200 = arith.negf %199 : vector<8x128xf32>
    %201 = math.exp %200 : vector<8x128xf32>
    %cst_41 = arith.constant 1.000000e+00 : f32
    %202 = vector.broadcast %cst_41 : f32 to vector<8x128xf32>
    %203 = arith.addf %202, %201 : vector<8x128xf32>
    %204 = arith.divf %202, %203 : vector<8x128xf32>
    %205 = vector.extract_strided_slice %192 {offsets = [0, 128], sizes = [8, 128], strides = [1, 1]} : vector<8x384xf32> to vector<8x128xf32>
    %206 = vector.extract_strided_slice %189 {offsets = [0, 128], sizes = [8, 128], strides = [1, 1]} : vector<8x384xf32> to vector<8x128xf32>
    %207 = arith.addf %205, %206 : vector<8x128xf32>
    %208 = arith.negf %207 : vector<8x128xf32>
    %209 = math.exp %208 : vector<8x128xf32>
    %cst_42 = arith.constant 1.000000e+00 : f32
    %210 = vector.broadcast %cst_42 : f32 to vector<8x128xf32>
    %211 = arith.addf %210, %209 : vector<8x128xf32>
    %212 = arith.divf %210, %211 : vector<8x128xf32>
    %213 = vector.extract_strided_slice %192 {offsets = [0, 256], sizes = [8, 128], strides = [1, 1]} : vector<8x384xf32> to vector<8x128xf32>
    %214 = vector.extract_strided_slice %189 {offsets = [0, 256], sizes = [8, 128], strides = [1, 1]} : vector<8x384xf32> to vector<8x128xf32>
    %215 = arith.addf %214, %6 : vector<8x128xf32>
    %216 = arith.mulf %204, %215 : vector<8x128xf32>
    %217 = arith.addf %213, %216 : vector<8x128xf32>
    %218 = math.tanh %217 : vector<8x128xf32>
    %cst_43 = arith.constant 1.000000e+00 : f32
    %219 = vector.broadcast %cst_43 : f32 to vector<8x128xf32>
    %220 = arith.subf %219, %212 : vector<8x128xf32>
    %221 = arith.mulf %220, %218 : vector<8x128xf32>
    %222 = arith.mulf %212, %187 : vector<8x128xf32>
    %223 = arith.addf %221, %222 : vector<8x128xf32>
    %cst_44 = arith.constant dense<0.000000e+00> : vector<8x896xf32>
    %224 = tpu.matmul %223, %3, %cst_44 {dimension_numbers = #tpu.dot_dimension_numbers<[1], [0], [0], [1], [0, 0, 1, 1], [], []>} : vector<8x128xf32>, vector<128x896xf32>, vector<8x896xf32> -> vector<8x896xf32>
    %225 = vector.extract_strided_slice %224 {offsets = [0, 0], sizes = [8, 384], strides = [1, 1]} : vector<8x896xf32> to vector<8x384xf32>
    %226 = vector.extract_strided_slice %224 {offsets = [0, 384], sizes = [8, 384], strides = [1, 1]} : vector<8x896xf32> to vector<8x384xf32>
    %227 = arith.addf %192, %226 : vector<8x384xf32>
    %228 = arith.addf %227, %9 : vector<8x384xf32>
    %229 = vector.extract_strided_slice %224 {offsets = [0, 768], sizes = [8, 128], strides = [1, 1]} : vector<8x896xf32> to vector<8x128xf32>
    %230 = arith.addf %195, %229 : vector<8x128xf32>
    %231 = arith.addf %230, %12 : vector<8x128xf32>
    %c0_45 = arith.constant 0 : index
    %c640 = arith.constant 640 : index
    %232 = vector.load %arg10[%c0_45, %c640] : memref<8x1024xf32, #tpu.memory_space<vmem>>, vector<8x128xf32>
    tpu.vector_store %arg10[%c0_45, %c640], %231 {strides = array<i32>} : memref<8x1024xf32, #tpu.memory_space<vmem>>, vector<8x128xf32>,
    %233 = vector.extract_strided_slice %228 {offsets = [0, 0], sizes = [8, 128], strides = [1, 1]} : vector<8x384xf32> to vector<8x128xf32>
    %234 = vector.extract_strided_slice %225 {offsets = [0, 0], sizes = [8, 128], strides = [1, 1]} : vector<8x384xf32> to vector<8x128xf32>
    %235 = arith.addf %233, %234 : vector<8x128xf32>
    %236 = arith.negf %235 : vector<8x128xf32>
    %237 = math.exp %236 : vector<8x128xf32>
    %cst_46 = arith.constant 1.000000e+00 : f32
    %238 = vector.broadcast %cst_46 : f32 to vector<8x128xf32>
    %239 = arith.addf %238, %237 : vector<8x128xf32>
    %240 = arith.divf %238, %239 : vector<8x128xf32>
    %241 = vector.extract_strided_slice %228 {offsets = [0, 128], sizes = [8, 128], strides = [1, 1]} : vector<8x384xf32> to vector<8x128xf32>
    %242 = vector.extract_strided_slice %225 {offsets = [0, 128], sizes = [8, 128], strides = [1, 1]} : vector<8x384xf32> to vector<8x128xf32>
    %243 = arith.addf %241, %242 : vector<8x128xf32>
    %244 = arith.negf %243 : vector<8x128xf32>
    %245 = math.exp %244 : vector<8x128xf32>
    %cst_47 = arith.constant 1.000000e+00 : f32
    %246 = vector.broadcast %cst_47 : f32 to vector<8x128xf32>
    %247 = arith.addf %246, %245 : vector<8x128xf32>
    %248 = arith.divf %246, %247 : vector<8x128xf32>
    %249 = vector.extract_strided_slice %228 {offsets = [0, 256], sizes = [8, 128], strides = [1, 1]} : vector<8x384xf32> to vector<8x128xf32>
    %250 = vector.extract_strided_slice %225 {offsets = [0, 256], sizes = [8, 128], strides = [1, 1]} : vector<8x384xf32> to vector<8x128xf32>
    %251 = arith.addf %250, %6 : vector<8x128xf32>
    %252 = arith.mulf %240, %251 : vector<8x128xf32>
    %253 = arith.addf %249, %252 : vector<8x128xf32>
    %254 = math.tanh %253 : vector<8x128xf32>
    %cst_48 = arith.constant 1.000000e+00 : f32
    %255 = vector.broadcast %cst_48 : f32 to vector<8x128xf32>
    %256 = arith.subf %255, %248 : vector<8x128xf32>
    %257 = arith.mulf %256, %254 : vector<8x128xf32>
    %258 = arith.mulf %248, %223 : vector<8x128xf32>
    %259 = arith.addf %257, %258 : vector<8x128xf32>
    %cst_49 = arith.constant dense<0.000000e+00> : vector<8x896xf32>
    %260 = tpu.matmul %259, %3, %cst_49 {dimension_numbers = #tpu.dot_dimension_numbers<[1], [0], [0], [1], [0, 0, 1, 1], [], []>} : vector<8x128xf32>, vector<128x896xf32>, vector<8x896xf32> -> vector<8x896xf32>
    %261 = vector.extract_strided_slice %260 {offsets = [0, 0], sizes = [8, 384], strides = [1, 1]} : vector<8x896xf32> to vector<8x384xf32>
    %262 = vector.extract_strided_slice %260 {offsets = [0, 384], sizes = [8, 384], strides = [1, 1]} : vector<8x896xf32> to vector<8x384xf32>
    %263 = arith.addf %228, %262 : vector<8x384xf32>
    %264 = arith.addf %263, %9 : vector<8x384xf32>
    %265 = vector.extract_strided_slice %260 {offsets = [0, 768], sizes = [8, 128], strides = [1, 1]} : vector<8x896xf32> to vector<8x128xf32>
    %266 = arith.addf %231, %265 : vector<8x128xf32>
    %267 = arith.addf %266, %12 : vector<8x128xf32>
    %c0_50 = arith.constant 0 : index
    %c768 = arith.constant 768 : index
    %268 = vector.load %arg10[%c0_50, %c768] : memref<8x1024xf32, #tpu.memory_space<vmem>>, vector<8x128xf32>
    tpu.vector_store %arg10[%c0_50, %c768], %267 {strides = array<i32>} : memref<8x1024xf32, #tpu.memory_space<vmem>>, vector<8x128xf32>,
    %269 = vector.extract_strided_slice %264 {offsets = [0, 0], sizes = [8, 128], strides = [1, 1]} : vector<8x384xf32> to vector<8x128xf32>
    %270 = vector.extract_strided_slice %261 {offsets = [0, 0], sizes = [8, 128], strides = [1, 1]} : vector<8x384xf32> to vector<8x128xf32>
    %271 = arith.addf %269, %270 : vector<8x128xf32>
    %272 = arith.negf %271 : vector<8x128xf32>
    %273 = math.exp %272 : vector<8x128xf32>
    %cst_51 = arith.constant 1.000000e+00 : f32
    %274 = vector.broadcast %cst_51 : f32 to vector<8x128xf32>
    %275 = arith.addf %274, %273 : vector<8x128xf32>
    %276 = arith.divf %274, %275 : vector<8x128xf32>
    %277 = vector.extract_strided_slice %264 {offsets = [0, 128], sizes = [8, 128], strides = [1, 1]} : vector<8x384xf32> to vector<8x128xf32>
    %278 = vector.extract_strided_slice %261 {offsets = [0, 128], sizes = [8, 128], strides = [1, 1]} : vector<8x384xf32> to vector<8x128xf32>
    %279 = arith.addf %277, %278 : vector<8x128xf32>
    %280 = arith.negf %279 : vector<8x128xf32>
    %281 = math.exp %280 : vector<8x128xf32>
    %cst_52 = arith.constant 1.000000e+00 : f32
    %282 = vector.broadcast %cst_52 : f32 to vector<8x128xf32>
    %283 = arith.addf %282, %281 : vector<8x128xf32>
    %284 = arith.divf %282, %283 : vector<8x128xf32>
    %285 = vector.extract_strided_slice %264 {offsets = [0, 256], sizes = [8, 128], strides = [1, 1]} : vector<8x384xf32> to vector<8x128xf32>
    %286 = vector.extract_strided_slice %261 {offsets = [0, 256], sizes = [8, 128], strides = [1, 1]} : vector<8x384xf32> to vector<8x128xf32>
    %287 = arith.addf %286, %6 : vector<8x128xf32>
    %288 = arith.mulf %276, %287 : vector<8x128xf32>
    %289 = arith.addf %285, %288 : vector<8x128xf32>
    %290 = math.tanh %289 : vector<8x128xf32>
    %cst_53 = arith.constant 1.000000e+00 : f32
    %291 = vector.broadcast %cst_53 : f32 to vector<8x128xf32>
    %292 = arith.subf %291, %284 : vector<8x128xf32>
    %293 = arith.mulf %292, %290 : vector<8x128xf32>
    %294 = arith.mulf %284, %259 : vector<8x128xf32>
    %295 = arith.addf %293, %294 : vector<8x128xf32>
    %cst_54 = arith.constant dense<0.000000e+00> : vector<8x896xf32>
    %296 = tpu.matmul %295, %3, %cst_54 {dimension_numbers = #tpu.dot_dimension_numbers<[1], [0], [0], [1], [0, 0, 1, 1], [], []>} : vector<8x128xf32>, vector<128x896xf32>, vector<8x896xf32> -> vector<8x896xf32>
    %297 = vector.extract_strided_slice %296 {offsets = [0, 0], sizes = [8, 384], strides = [1, 1]} : vector<8x896xf32> to vector<8x384xf32>
    %298 = vector.extract_strided_slice %296 {offsets = [0, 384], sizes = [8, 384], strides = [1, 1]} : vector<8x896xf32> to vector<8x384xf32>
    %299 = arith.addf %264, %298 : vector<8x384xf32>
    %300 = arith.addf %299, %9 : vector<8x384xf32>
    %301 = vector.extract_strided_slice %296 {offsets = [0, 768], sizes = [8, 128], strides = [1, 1]} : vector<8x896xf32> to vector<8x128xf32>
    %302 = arith.addf %267, %301 : vector<8x128xf32>
    %303 = arith.addf %302, %12 : vector<8x128xf32>
    %c0_55 = arith.constant 0 : index
    %c896 = arith.constant 896 : index
    %304 = vector.load %arg10[%c0_55, %c896] : memref<8x1024xf32, #tpu.memory_space<vmem>>, vector<8x128xf32>
    tpu.vector_store %arg10[%c0_55, %c896], %303 {strides = array<i32>} : memref<8x1024xf32, #tpu.memory_space<vmem>>, vector<8x128xf32>,
    %c0_56 = arith.constant 0 : index
    %c0_57 = arith.constant 0 : index
    %305 = vector.load %arg11[%c0_56, %c0_57] : memref<8x128xf32, #tpu.memory_space<vmem>>, vector<8x128xf32>
    tpu.vector_store %arg11[%c0_56, %c0_57], %303 {strides = array<i32>} : memref<8x128xf32, #tpu.memory_space<vmem>>, vector<8x128xf32>,
    %c0_58 = arith.constant 0 : index
    %c0_59 = arith.constant 0 : index
    %306 = vector.load %arg12[%c0_58, %c0_59] : memref<8x128xf32, #tpu.memory_space<vmem>>, vector<8x128xf32>
    tpu.vector_store %arg12[%c0_58, %c0_59], %295 {strides = array<i32>} : memref<8x128xf32, #tpu.memory_space<vmem>>, vector<8x128xf32>,
    %c0_60 = arith.constant 0 : index
    %c0_61 = arith.constant 0 : index
    %307 = vector.load %arg13[%c0_60, %c0_61] : memref<8x384xf32, #tpu.memory_space<vmem>>, vector<8x384xf32>
    tpu.vector_store %arg13[%c0_60, %c0_61], %300 {strides = array<i32>} : memref<8x384xf32, #tpu.memory_space<vmem>>, vector<8x384xf32>,
    %c0_62 = arith.constant 0 : index
    %c0_63 = arith.constant 0 : index
    %308 = vector.load %arg14[%c0_62, %c0_63] : memref<8x384xf32, #tpu.memory_space<vmem>>, vector<8x384xf32>
    tpu.vector_store %arg14[%c0_62, %c0_63], %297 {strides = array<i32>} : memref<8x384xf32, #tpu.memory_space<vmem>>, vector<8x384xf32>,
    return
  }
  func.func @transform_0(%arg0: i32, %arg1: i32) -> (i32, i32) {
    %c0_i32 = arith.constant 0 : i32
    %c0_i32_0 = arith.constant 0 : i32
    return %arg0, %c0_i32 : i32, i32
  }
  func.func @transform_1(%arg0: i32, %arg1: i32) -> (i32, i32) {
    %c0_i32 = arith.constant 0 : i32
    %c0_i32_0 = arith.constant 0 : i32
    return %arg0, %c0_i32 : i32, i32
  }
  func.func @transform_2(%arg0: i32, %arg1: i32) -> (i32, i32) {
    %c0_i32 = arith.constant 0 : i32
    %c0_i32_0 = arith.constant 0 : i32
    return %arg0, %c0_i32 : i32, i32
  }
  func.func @transform_3(%arg0: i32, %arg1: i32) -> (i32, i32) {
    %c0_i32 = arith.constant 0 : i32
    %c0_i32_0 = arith.constant 0 : i32
    return %arg0, %c0_i32 : i32, i32
  }
  func.func @transform_4(%arg0: i32, %arg1: i32) -> (i32, i32) {
    %c0_i32 = arith.constant 0 : i32
    %c0_i32_0 = arith.constant 0 : i32
    %c0_i32_1 = arith.constant 0 : i32
    return %c0_i32, %c0_i32_0 : i32, i32
  }
  func.func @transform_5(%arg0: i32, %arg1: i32) -> (i32, i32) {
    %c0_i32 = arith.constant 0 : i32
    %c0_i32_0 = arith.constant 0 : i32
    %c0_i32_1 = arith.constant 0 : i32
    return %c0_i32, %c0_i32_0 : i32, i32
  }
  func.func @transform_6(%arg0: i32, %arg1: i32) -> (i32, i32) {
    %c0_i32 = arith.constant 0 : i32
    %c0_i32_0 = arith.constant 0 : i32
    %c0_i32_1 = arith.constant 0 : i32
    return %c0_i32, %c0_i32_0 : i32, i32
  }
  func.func @transform_7(%arg0: i32, %arg1: i32) -> (i32, i32) {
    %c0_i32 = arith.constant 0 : i32
    %c0_i32_0 = arith.constant 0 : i32
    %c0_i32_1 = arith.constant 0 : i32
    return %c0_i32, %c0_i32_0 : i32, i32
  }
  func.func @transform_8(%arg0: i32, %arg1: i32) -> (i32, i32) {
    %c0_i32 = arith.constant 0 : i32
    return %arg0, %arg1 : i32, i32
  }
}

</mosaic_0001>

<llo_original>
// kernel: tpu_custom_call.1
$region0: #{tpu_custom_call.1}
  #allocation0 [shape = 'u32[]', space=smem, size = 0x4, offset = 0x4, fixed_abs, tag = 'smem constant byte address 0x4 - core index']
  #allocation1 [shape = 'u32[144,128]{1,0:T(1,128)}', space=vmem, size = 0x12000, scoped, tag = 'internal scratch']
  #allocation2 [shape = 'f32[8,128]{1,0:T(8,128)}', space=vmem, size = 0x1000, scoped, tag = 'scratch operand']
  #allocation3 [shape = 'f32[8,128]{1,0:T(8,128)}', space=vmem, size = 0x1000, scoped, tag = 'scratch operand']
  #allocation4 [shape = 'f32[8,384]{1,0:T(8,128)}', space=vmem, size = 0x3000, scoped, tag = 'scratch operand']
  #allocation5 [shape = 'f32[8,384]{1,0:T(8,128)}', space=vmem, size = 0x3000, scoped, tag = 'scratch operand']
  %s0 = inlined_call_operand.hbm [shape: f32[8,128], index: 0, kind: input, shape index: {}]
  %s1 = inlined_call_operand.hbm [shape: f32[8,128], index: 1, kind: input, shape index: {}]
  %s2 = inlined_call_operand.hbm [shape: f32[8,384], index: 2, kind: input, shape index: {}]
  %s3 = inlined_call_operand.hbm [shape: f32[8,384], index: 3, kind: input, shape index: {}]
  %s4 = inlined_call_operand.hbm [shape: f32[128,896], index: 4, kind: input, shape index: {}]
  %s5 = inlined_call_operand.vmem [shape: f32[1,128], index: 5, kind: input, shape index: {}]
  %s6 = inlined_call_operand.vmem [shape: f32[1,384], index: 6, kind: input, shape index: {}]
  %s7 = inlined_call_operand.vmem [shape: f32[1,128], index: 7, kind: input, shape index: {}]
  %s8 = inlined_call_operand.hbm [shape: f32[8,1024], index: 8, kind: output, shape index: {}]
  %s9 = sld [smem:[#allocation0]]
  $region66: #{tpu_custom_call.1} parent=0
    _
  %s11 = ssub.s32 1, %s9
  %s12 = scalar_select 0, %s11, %s9
  $region1: #{tpu_custom_call.1} parent=0
    #allocation6 [shape = 'u8[4096]{0}', space=vmem, size = 0x1000, scoped, tag = 'input window, operand 0, single buffered']
    #allocation7 [shape = 's32[1]{0}', space=sflag, size = 0x4, scoped, tag = 'scoped memory for tpu_custom_call.1']
    #allocation8 [shape = 's32[1]{0}', space=sflag, size = 0x4, scoped, tag = 'scoped memory for tpu_custom_call.1']
    #allocation9 [shape = 'u8[4096]{0}', space=vmem, size = 0x1000, scoped, tag = 'input window, operand 1, single buffered']
    #allocation10 [shape = 's32[1]{0}', space=sflag, size = 0x4, scoped, tag = 'scoped memory for tpu_custom_call.1']
    #allocation11 [shape = 'u8[12288]{0}', space=vmem, size = 0x3000, scoped, tag = 'input window, operand 2, single buffered']
    #allocation12 [shape = 'u8[12288]{0}', space=vmem, size = 0x3000, scoped, tag = 'input window, operand 3, single buffered']
    #allocation13 [shape = 's32[1]{0}', space=sflag, size = 0x4, scoped, tag = 'scoped memory for tpu_custom_call.1']
    #allocation14 [shape = 'u8[458752]{0}', space=vmem, size = 0x70000, scoped, tag = 'input window, operand 4, single buffered']
    #allocation15 [shape = 'u8[32768]{0}', space=vmem, size = 0x8000, scoped, tag = 'output window, operand 0, single buffered']
    %13 = vsyncpa [#allocation7], 0
    %14 = vsyncpa [#allocation10], 0
    %15 = vsyncpa [#allocation13], 0
    %16 = vsyncpa [#allocation8], 0
    // Predicated region
    $region2: #{tpu_custom_call.1} parent=1 // pred_check
      _
    $region3: #{tpu_custom_call.1} parent=1 // pred_check_branch
      %18 = sbr.rel (0) target = $region5
    $region4: #{tpu_custom_call.1} parent=1 // pred_region
      %s20 = ssub.s32 128, 128
      %21 = vsyncadd [#allocation7], %s20
      %s23 = sshll.u32 [#allocation6], 4
      %s24 = int_to_ptr.vmem [resolvable:$true] %s23
      %26 = dma.hbm_to_vmem [thread:$0]  %s0, 128, %s24, [#allocation7]
    $region5: #{tpu_custom_call.1} parent=1 // pred_fallthru
      _
    // Predicated region
    $region6: #{tpu_custom_call.1} parent=1 // pred_check
      _
    $region7: #{tpu_custom_call.1} parent=1 // pred_check_branch
      %28 = sbr.rel (0) target = $region9
    $region8: #{tpu_custom_call.1} parent=1 // pred_region
      %s30 = ssub.s32 128, 128
      %31 = vsyncadd [#allocation10], %s30
      %s33 = sshll.u32 [#allocation9], 4
      %s34 = int_to_ptr.vmem [resolvable:$true] %s33
      %36 = dma.hbm_to_vmem [thread:$0]  %s1, 128, %s34, [#allocation10]
    $region9: #{tpu_custom_call.1} parent=1 // pred_fallthru
      _
    // Predicated region
    $region10: #{tpu_custom_call.1} parent=1 // pred_check
      _
    $region11: #{tpu_custom_call.1} parent=1 // pred_check_branch
      %38 = sbr.rel (0) target = $region13
    $region12: #{tpu_custom_call.1} parent=1 // pred_region
      %s40 = ssub.s32 384, 384
      %41 = vsyncadd [#allocation10], %s40
      %s43 = sshll.u32 [#allocation11], 4
      %s44 = int_to_ptr.vmem [resolvable:$true] %s43
      %46 = dma.hbm_to_vmem [thread:$0]  %s2, 384, %s44, [#allocation10]
    $region13: #{tpu_custom_call.1} parent=1 // pred_fallthru
      _
    // Predicated region
    $region14: #{tpu_custom_call.1} parent=1 // pred_check
      _
    $region15: #{tpu_custom_call.1} parent=1 // pred_check_branch
      %48 = sbr.rel (0) target = $region17
    $region16: #{tpu_custom_call.1} parent=1 // pred_region
      %s50 = ssub.s32 384, 384
      %51 = vsyncadd [#allocation13], %s50
      %s53 = sshll.u32 [#allocation12], 4
      %s54 = int_to_ptr.vmem [resolvable:$true] %s53
      %56 = dma.hbm_to_vmem [thread:$0]  %s3, 384, %s54, [#allocation13]
    $region17: #{tpu_custom_call.1} parent=1 // pred_fallthru
      _
    // Predicated region
    $region18: #{tpu_custom_call.1} parent=1 // pred_check
      _
    $region19: #{tpu_custom_call.1} parent=1 // pred_check_branch
      %58 = sbr.rel (0) target = $region21
    $region20: #{tpu_custom_call.1} parent=1 // pred_region
      %s60 = ssub.s32 14336, 14336
      %61 = vsyncadd [#allocation13], %s60
      %s62 = sshll.u32 [#allocation14], 4
      %s63 = int_to_ptr.vmem [resolvable:$true] %s62
      %68 = dma.hbm_to_vmem [thread:$0]  %s4, 14336, %s63, [#allocation13], 896, 896, 56
    $region21: #{tpu_custom_call.1} parent=1 // pred_fallthru
      _
    // Predicated region
    $region22: #{tpu_custom_call.1} parent=1 // pred_check
      _
    $region23: #{tpu_custom_call.1} parent=1 // pred_check_branch
      %70 = sbr.rel (0) target = $region25
    $region24: #{tpu_custom_call.1} parent=1 // pred_region
      _
    $region25: #{tpu_custom_call.1} parent=1 // pred_fallthru
      _
    // Predicated region
    $region26: #{tpu_custom_call.1} parent=1 // pred_check
      _
    $region27: #{tpu_custom_call.1} parent=1 // pred_check_branch
      %72 = sbr.rel (0) target = $region29
    $region28: #{tpu_custom_call.1} parent=1 // pred_region
      _
    $region29: #{tpu_custom_call.1} parent=1 // pred_fallthru
      _
    // Predicated region
    $region30: #{tpu_custom_call.1} parent=1 // pred_check
      _
    $region31: #{tpu_custom_call.1} parent=1 // pred_check_branch
      %74 = sbr.rel (0) target = $region33
    $region32: #{tpu_custom_call.1} parent=1 // pred_region
      _
    $region33: #{tpu_custom_call.1} parent=1 // pred_fallthru
      _
    // Predicated region
    $region34: #{tpu_custom_call.1} parent=1 // pred_check
      _
    $region35: #{tpu_custom_call.1} parent=1 // pred_check_branch
      %76 = sbr.rel (0) target = $region37
    $region36: #{tpu_custom_call.1} parent=1 // pred_region
      %77 = dma.done [#allocation7], 128
    $region37: #{tpu_custom_call.1} parent=1 // pred_fallthru
      _
    // Predicated region
    $region38: #{tpu_custom_call.1} parent=1 // pred_check
      _
    $region39: #{tpu_custom_call.1} parent=1 // pred_check_branch
      %79 = sbr.rel (0) target = $region41
    $region40: #{tpu_custom_call.1} parent=1 // pred_region
      %80 = dma.done [#allocation10], 128
    $region41: #{tpu_custom_call.1} parent=1 // pred_fallthru
      _
    // Predicated region
    $region42: #{tpu_custom_call.1} parent=1 // pred_check
      _
    $region43: #{tpu_custom_call.1} parent=1 // pred_check_branch
      %82 = sbr.rel (0) target = $region45
    $region44: #{tpu_custom_call.1} parent=1 // pred_region
      %83 = dma.done [#allocation10], 384
    $region45: #{tpu_custom_call.1} parent=1 // pred_fallthru
      _
    // Predicated region
    $region46: #{tpu_custom_call.1} parent=1 // pred_check
      _
    $region47: #{tpu_custom_call.1} parent=1 // pred_check_branch
      %85 = sbr.rel (0) target = $region49
    $region48: #{tpu_custom_call.1} parent=1 // pred_region
      %86 = dma.done [#allocation13], 384
    $region49: #{tpu_custom_call.1} parent=1 // pred_fallthru
      _
    // Predicated region
    $region50: #{tpu_custom_call.1} parent=1 // pred_check
      _
    $region51: #{tpu_custom_call.1} parent=1 // pred_check_branch
      %88 = sbr.rel (0) target = $region53
    $region52: #{tpu_custom_call.1} parent=1 // pred_region
      %89 = dma.done [#allocation13], 14336
    $region53: #{tpu_custom_call.1} parent=1 // pred_fallthru
      _
    %p90 = scmp.eq.s32.totalorder 0, 0
    // Predicated region
    $region54: #{tpu_custom_call.1} parent=1 // pred_check
      %p91 = pneg %p90
    $region55: #{tpu_custom_call.1} parent=1 // pred_check_branch
      %93 = sbr.rel (%p91) target = $region57
    $region56: #{tpu_custom_call.1} parent=1 // pred_region
      %v94 = vld [vmem:[#allocation6] sm:$0xff]
      %95 = vst [vmem:[#allocation2] sm:$0xff] %v94
      %v96 = vld [vmem:[#allocation9] sm:$0xff]
      %97 = vst [vmem:[#allocation3] sm:$0xff] %v96
      %v98 = vld [vmem:[#allocation11] sm:$0xff]
      %v99 = vld [vmem:[#allocation11 + $0x8] sm:$0xff]
      %v100 = vld [vmem:[#allocation11 + $0x10] sm:$0xff]
      %101 = vst [vmem:[#allocation4] sm:$0xff] %v98
      %102 = vst [vmem:[#allocation4 + $0x8] sm:$0xff] %v99
      %103 = vst [vmem:[#allocation4 + $0x10] sm:$0xff] %v100
      %v104 = vld [vmem:[#allocation12] sm:$0xff]
      %v105 = vld [vmem:[#allocation12 + $0x8] sm:$0xff]
      %v106 = vld [vmem:[#allocation12 + $0x10] sm:$0xff]
      %107 = vst [vmem:[#allocation5] sm:$0xff] %v104
      %108 = vst [vmem:[#allocation5 + $0x8] sm:$0xff] %v105
      %109 = vst [vmem:[#allocation5 + $0x10] sm:$0xff] %v106
    $region57: #{tpu_custom_call.1} parent=1 // pred_fallthru
      _
    %v110 = vld [vmem:[#allocation14] sm:$0xff]
    %v111 = vld [vmem:[#allocation14 + $0x8] sm:$0xff]
    %v112 = vld [vmem:[#allocation14 + $0x10] sm:$0xff]
    %v113 = vld [vmem:[#allocation14 + $0x18] sm:$0xff]
    %v114 = vld [vmem:[#allocation14 + $0x20] sm:$0xff]
    %v115 = vld [vmem:[#allocation14 + $0x28] sm:$0xff]
    %v116 = vld [vmem:[#allocation14 + $0x30] sm:$0xff]
    %v117 = vld [vmem:[#allocation14 + $0x38] sm:$0xff]
    %v118 = vld [vmem:[#allocation14 + $0x40] sm:$0xff]
    %v119 = vld [vmem:[#allocation14 + $0x48] sm:$0xff]
    %v120 = vld [vmem:[#allocation14 + $0x50] sm:$0xff]
    %v121 = vld [vmem:[#allocation14 + $0x58] sm:$0xff]
    %v122 = vld [vmem:[#allocation14 + $0x60] sm:$0xff]
    %v123 = vld [vmem:[#allocation14 + $0x68] sm:$0xff]
    %v124 = vld [vmem:[#allocation14 + $0x70] sm:$0xff]
    %v125 = vld [vmem:[#allocation14 + $0x78] sm:$0xff]
    %v126 = vld [vmem:[#allocation14 + $0x80] sm:$0xff]
    %v127 = vld [vmem:[#allocation14 + $0x88] sm:$0xff]
    %v128 = vld [vmem:[#allocation14 + $0x90] sm:$0xff]
    %v129 = vld [vmem:[#allocation14 + $0x98] sm:$0xff]
    %v130 = vld [vmem:[#allocation14 + $0xa0] sm:$0xff]
    %v131 = vld [vmem:[#allocation14 + $0xa8] sm:$0xff]
    %v132 = vld [vmem:[#allocation14 + $0xb0] sm:$0xff]
    %v133 = vld [vmem:[#allocation14 + $0xb8] sm:$0xff]
    %v134 = vld [vmem:[#allocation14 + $0xc0] sm:$0xff]
    %v135 = vld [vmem:[#allocation14 + $0xc8] sm:$0xff]
    %v136 = vld [vmem:[#allocation14 + $0xd0] sm:$0xff]
    %v137 = vld [vmem:[#allocation14 + $0xd8] sm:$0xff]
    %v138 = vld [vmem:[#allocation14 + $0xe0] sm:$0xff]
    %v139 = vld [vmem:[#allocation14 + $0xe8] sm:$0xff]
    %v140 = vld [vmem:[#allocation14 + $0xf0] sm:$0xff]
    %v141 = vld [vmem:[#allocation14 + $0xf8] sm:$0xff]
    %v142 = vld [vmem:[#allocation14 + $0x100] sm:$0xff]
    %v143 = vld [vmem:[#allocation14 + $0x108] sm:$0xff]
    %v144 = vld [vmem:[#allocation14 + $0x110] sm:$0xff]
    %v145 = vld [vmem:[#allocation14 + $0x118] sm:$0xff]
    %v146 = vld [vmem:[#allocation14 + $0x120] sm:$0xff]
    %v147 = vld [vmem:[#allocation14 + $0x128] sm:$0xff]
    %v148 = vld [vmem:[#allocation14 + $0x130] sm:$0xff]
    %v149 = vld [vmem:[#allocation14 + $0x138] sm:$0xff]
    %v150 = vld [vmem:[#allocation14 + $0x140] sm:$0xff]
    %v151 = vld [vmem:[#allocation14 + $0x148] sm:$0xff]
    %v152 = vld [vmem:[#allocation14 + $0x150] sm:$0xff]
    %v153 = vld [vmem:[#allocation14 + $0x158] sm:$0xff]
    %v154 = vld [vmem:[#allocation14 + $0x160] sm:$0xff]
    %v155 = vld [vmem:[#allocation14 + $0x168] sm:$0xff]
    %v156 = vld [vmem:[#allocation14 + $0x170] sm:$0xff]
    %v157 = vld [vmem:[#allocation14 + $0x178] sm:$0xff]
    %v158 = vld [vmem:[#allocation14 + $0x180] sm:$0xff]
    %v159 = vld [vmem:[#allocation14 + $0x188] sm:$0xff]
    %v160 = vld [vmem:[#allocation14 + $0x190] sm:$0xff]
    %v161 = vld [vmem:[#allocation14 + $0x198] sm:$0xff]
    %v162 = vld [vmem:[#allocation14 + $0x1a0] sm:$0xff]
    %v163 = vld [vmem:[#allocation14 + $0x1a8] sm:$0xff]
    %v164 = vld [vmem:[#allocation14 + $0x1b0] sm:$0xff]
    %v165 = vld [vmem:[#allocation14 + $0x1b8] sm:$0xff]
    %v166 = vld [vmem:[#allocation14 + $0x1c0] sm:$0xff]
    %v167 = vld [vmem:[#allocation14 + $0x1c8] sm:$0xff]
    %v168 = vld [vmem:[#allocation14 + $0x1d0] sm:$0xff]
    %v169 = vld [vmem:[#allocation14 + $0x1d8] sm:$0xff]
    %v170 = vld [vmem:[#allocation14 + $0x1e0] sm:$0xff]
    %v171 = vld [vmem:[#allocation14 + $0x1e8] sm:$0xff]
    %v172 = vld [vmem:[#allocation14 + $0x1f0] sm:$0xff]
    %v173 = vld [vmem:[#allocation14 + $0x1f8] sm:$0xff]
    %v174 = vld [vmem:[#allocation14 + $0x200] sm:$0xff]
    %v175 = vld [vmem:[#allocation14 + $0x208] sm:$0xff]
    %v176 = vld [vmem:[#allocation14 + $0x210] sm:$0xff]
    %v177 = vld [vmem:[#allocation14 + $0x218] sm:$0xff]
    %v178 = vld [vmem:[#allocation14 + $0x220] sm:$0xff]
    %v179 = vld [vmem:[#allocation14 + $0x228] sm:$0xff]
    %v180 = vld [vmem:[#allocation14 + $0x230] sm:$0xff]
    %v181 = vld [vmem:[#allocation14 + $0x238] sm:$0xff]
    %v182 = vld [vmem:[#allocation14 + $0x240] sm:$0xff]
    %v183 = vld [vmem:[#allocation14 + $0x248] sm:$0xff]
    %v184 = vld [vmem:[#allocation14 + $0x250] sm:$0xff]
    %v185 = vld [vmem:[#allocation14 + $0x258] sm:$0xff]
    %v186 = vld [vmem:[#allocation14 + $0x260] sm:$0xff]
    %v187 = vld [vmem:[#allocation14 + $0x268] sm:$0xff]
    %v188 = vld [vmem:[#allocation14 + $0x270] sm:$0xff]
    %v189 = vld [vmem:[#allocation14 + $0x278] sm:$0xff]
    %v190 = vld [vmem:[#allocation14 + $0x280] sm:$0xff]
    %v191 = vld [vmem:[#allocation14 + $0x288] sm:$0xff]
    %v192 = vld [vmem:[#allocation14 + $0x290] sm:$0xff]
    %v193 = vld [vmem:[#allocation14 + $0x298] sm:$0xff]
    %v194 = vld [vmem:[#allocation14 + $0x2a0] sm:$0xff]
    %v195 = vld [vmem:[#allocation14 + $0x2a8] sm:$0xff]
    %v196 = vld [vmem:[#allocation14 + $0x2b0] sm:$0xff]
    %v197 = vld [vmem:[#allocation14 + $0x2b8] sm:$0xff]
    %v198 = vld [vmem:[#allocation14 + $0x2c0] sm:$0xff]
    %v199 = vld [vmem:[#allocation14 + $0x2c8] sm:$0xff]
    %v200 = vld [vmem:[#allocation14 + $0x2d0] sm:$0xff]
    %v201 = vld [vmem:[#allocation14 + $0x2d8] sm:$0xff]
    %v202 = vld [vmem:[#allocation14 + $0x2e0] sm:$0xff]
    %v203 = vld [vmem:[#allocation14 + $0x2e8] sm:$0xff]
    %v204 = vld [vmem:[#allocation14 + $0x2f0] sm:$0xff]
    %v205 = vld [vmem:[#allocation14 + $0x2f8] sm:$0xff]
    %v206 = vld [vmem:[#allocation14 + $0x300] sm:$0xff]
    %v207 = vld [vmem:[#allocation14 + $0x308] sm:$0xff]
    %v208 = vld [vmem:[#allocation14 + $0x310] sm:$0xff]
    %v209 = vld [vmem:[#allocation14 + $0x318] sm:$0xff]
    %v210 = vld [vmem:[#allocation14 + $0x320] sm:$0xff]
    %v211 = vld [vmem:[#allocation14 + $0x328] sm:$0xff]
    %v212 = vld [vmem:[#allocation14 + $0x330] sm:$0xff]
    %v213 = vld [vmem:[#allocation14 + $0x338] sm:$0xff]
    %v214 = vld [vmem:[#allocation14 + $0x340] sm:$0xff]
    %v215 = vld [vmem:[#allocation14 + $0x348] sm:$0xff]
    %v216 = vld [vmem:[#allocation14 + $0x350] sm:$0xff]
    %v217 = vld [vmem:[#allocation14 + $0x358] sm:$0xff]
    %v218 = vld [vmem:[#allocation14 + $0x360] sm:$0xff]
    %v219 = vld [vmem:[#allocation14 + $0x368] sm:$0xff]
    %v220 = vld [vmem:[#allocation14 + $0x370] sm:$0xff]
    %v221 = vld [vmem:[#allocation14 + $0x378] sm:$0xff]
    %v222 = vld [vmem:[%s5] sm:$0x1]
    %v224 = vlaneseq
    %v225 = vshrl.u32 %v224, 7
    %v226 = vsub.s32 0, %v225
    %v227 = vrot.slane %v222, %v226
    %v229 = vld [vmem:[%s6] sm:$0x7]
    %v231 = vlaneseq
    %v232 = vshrl.u32 %v231, 7
    %v233 = vsub.s32 0, %v232
    %v234 = vrot.slane %v229, %v233
    %v235 = vlaneseq
    %v236 = vshrl.u32 %v235, 7
    %v237 = vsub.s32 1, %v236
    %v238 = vrot.slane %v229, %v237
    %v239 = vlaneseq
    %v240 = vshrl.u32 %v239, 7
    %v241 = vsub.s32 2, %v240
    %v242 = vrot.slane %v229, %v241
    %v246 = vld [vmem:[%s7] sm:$0x1]
    %v248 = vlaneseq
    %v249 = vshrl.u32 %v248, 7
    %v250 = vsub.s32 0, %v249
    %v251 = vrot.slane %v246, %v250
    %v253 = vld [vmem:[#allocation2] sm:$0xff]
    %v254 = vld [vmem:[#allocation3] sm:$0xff]
    %v255 = vld [vmem:[#allocation4] sm:$0xff]
    %v256 = vld [vmem:[#allocation4 + $0x8] sm:$0xff]
    %v257 = vld [vmem:[#allocation4 + $0x10] sm:$0xff]
    %v258 = vld [vmem:[#allocation5] sm:$0xff]
    %v259 = vld [vmem:[#allocation5 + $0x8] sm:$0xff]
    %v260 = vld [vmem:[#allocation5 + $0x10] sm:$0xff]
    %v261 = vadd.f32 %v255, %v258
    %v262 = vxor.u32 %v261, 2147483648
    %v263 = vmul.f32 %v262, 1.442695
    %v264 = vpow.pop %v263
    %v265 = vadd.f32 %v264, 1.0
    %v266 = vrcp.pop %v265
    %v267 = vmul.f32 1.0, %v266
    %v268 = vadd.f32 %v256, %v259
    %v269 = vxor.u32 %v268, 2147483648
    %v270 = vmul.f32 %v269, 1.442695
    %v271 = vpow.pop %v270
    %v272 = vadd.f32 %v271, 1.0
    %v273 = vrcp.pop %v272
    %v274 = vmul.f32 1.0, %v273
    %v275 = vadd.f32 %v260, %v227
    %v276 = vmul.f32 %v267, %v275
    %v277 = vadd.f32 %v257, %v276
    %v278 = vtanh.pop %v277
    %v279 = vsub.f32 1.0, %v274
    %v280 = vmul.f32 %v279, %v278
    %v281 = vmul.f32 %v274, %v254
    %v282 = vadd.f32 %v280, %v281
    %283 = vmatprep.subr.mxu0 %v216
    %284 = vmatpush1.msra.mxu0 %v215
    %285 = vmatprep.subr.mxu0 %v209
    %286 = vmatpush1.msra.mxu0 %v208
    %287 = vmatprep.subr.mxu0 %v202
    %288 = vmatpush1.msra.mxu0 %v201
    %289 = vmatprep.subr.mxu0 %v195
    %290 = vmatpush1.msra.mxu0 %v194
    %291 = vmatprep.subr.mxu0 %v188
    %292 = vmatpush1.msra.mxu0 %v187
    %293 = vmatprep.subr.mxu0 %v181
    %294 = vmatpush1.msra.mxu0 %v180
    %295 = vmatprep.subr.mxu0 %v174
    %296 = vmatpush1.msra.mxu0 %v173
    %297 = vmatprep.subr.mxu0 %v167
    %298 = vmatpush1.msra.mxu0 %v166
    %299 = vmatprep.subr.mxu0 %v160
    %300 = vmatpush1.msra.mxu0 %v159
    %301 = vmatprep.subr.mxu0 %v153
    %302 = vmatpush1.msra.mxu0 %v152
    %303 = vmatprep.subr.mxu0 %v146
    %304 = vmatpush1.msra.mxu0 %v145
    %305 = vmatprep.subr.mxu0 %v139
    %306 = vmatpush1.msra.mxu0 %v138
    %307 = vmatprep.subr.mxu0 %v132
    %308 = vmatpush1.msra.mxu0 %v131
    %309 = vmatprep.subr.mxu0 %v125
    %310 = vmatpush1.msra.mxu0 %v124
    %311 = vmatprep.subr.mxu0 %v118
    %312 = vmatpush1.msra.mxu0 %v117
    %313 = vmatprep.subr.mxu0 %v111
    %314 = vmatpush1.msra.mxu0 %v110
    %315 = vmatprep.subr.mxu0 0.0
    %316 = vmatpush2.msra.mxu0 0.0
    %317 = vmatprep.subr.mxu0 0.0
    %318 = vmatpush2.msra.mxu0 0.0
    %319 = vmatprep.subr.mxu0 0.0
    %320 = vmatpush2.msra.mxu0 0.0
    %321 = vmatprep.subr.mxu0 0.0
    %322 = vmatpush2.msra.mxu0 0.0
    %323 = vmatprep.subr.mxu0 0.0
    %324 = vmatpush2.msra.mxu0 0.0
    %325 = vmatprep.subr.mxu0 0.0
    %326 = vmatpush2.msra.mxu0 0.0
    %327 = vmatprep.subr.mxu0 0.0
    %328 = vmatpush2.msra.mxu0 0.0
    %329 = vmatprep.subr.mxu0 0.0
    %330 = vmatpush2.msra.mxu0 0.0
    %331 = vmatprep.subr.mxu0 0.0
    %332 = vmatpush2.msra.mxu0 0.0
    %333 = vmatprep.subr.mxu0 0.0
    %334 = vmatpush2.msra.mxu0 0.0
    %335 = vmatprep.subr.mxu0 0.0
    %336 = vmatpush2.msra.mxu0 0.0
    %337 = vmatprep.subr.mxu0 0.0
    %338 = vmatpush2.msra.mxu0 0.0
    %339 = vmatprep.subr.mxu0 0.0
    %340 = vmatpush2.msra.mxu0 0.0
    %341 = vmatprep.subr.mxu0 0.0
    %342 = vmatpush2.msra.mxu0 0.0
    %343 = vmatprep.subr.mxu0 0.0
    %344 = vmatpush2.msra.mxu0 0.0
    %345 = vmatprep.subr.mxu0 0.0
    %346 = vmatpush2.msra.mxu0 0.0
    %347 = vmatprep.mubr.f32.mxu0 0.0
    %348 = vmatmul.mubr.f32.gmra.mxu0 %v282
    %v349 = vpop.f32.mrf.mxu0
    %v350 = vadd.f32 0.0, %v349
    %v351 = vpop.f32.mrf.mxu0
    %v352 = vadd.f32 0.0, %v351
    %353 = vdwg.mxu0
    %354 = vmatprep.subr.mxu0 %v218
    %355 = vmatpush1.msra.mxu0 %v217
    %356 = vmatprep.subr.mxu0 %v211
    %357 = vmatpush1.msra.mxu0 %v210
    %358 = vmatprep.subr.mxu0 %v204
    %359 = vmatpush1.msra.mxu0 %v203
    %360 = vmatprep.subr.mxu0 %v197
    %361 = vmatpush1.msra.mxu0 %v196
    %362 = vmatprep.subr.mxu0 %v190
    %363 = vmatpush1.msra.mxu0 %v189
    %364 = vmatprep.subr.mxu0 %v183
    %365 = vmatpush1.msra.mxu0 %v182
    %366 = vmatprep.subr.mxu0 %v176
    %367 = vmatpush1.msra.mxu0 %v175
    %368 = vmatprep.subr.mxu0 %v169
    %369 = vmatpush1.msra.mxu0 %v168
    %370 = vmatprep.subr.mxu0 %v162
    %371 = vmatpush1.msra.mxu0 %v161
    %372 = vmatprep.subr.mxu0 %v155
    %373 = vmatpush1.msra.mxu0 %v154
    %374 = vmatprep.subr.mxu0 %v148
    %375 = vmatpush1.msra.mxu0 %v147
    %376 = vmatprep.subr.mxu0 %v141
    %377 = vmatpush1.msra.mxu0 %v140
    %378 = vmatprep.subr.mxu0 %v134
    %379 = vmatpush1.msra.mxu0 %v133
    %380 = vmatprep.subr.mxu0 %v127
    %381 = vmatpush1.msra.mxu0 %v126
    %382 = vmatprep.subr.mxu0 %v120
    %383 = vmatpush1.msra.mxu0 %v119
    %384 = vmatprep.subr.mxu0 %v113
    %385 = vmatpush1.msra.mxu0 %v112
    %386 = vmatprep.subr.mxu0 0.0
    %387 = vmatpush2.msra.mxu0 0.0
    %388 = vmatprep.subr.mxu0 0.0
    %389 = vmatpush2.msra.mxu0 0.0
    %390 = vmatprep.subr.mxu0 0.0
    %391 = vmatpush2.msra.mxu0 0.0
    %392 = vmatprep.subr.mxu0 0.0
    %393 = vmatpush2.msra.mxu0 0.0
    %394 = vmatprep.subr.mxu0 0.0
    %395 = vmatpush2.msra.mxu0 0.0
    %396 = vmatprep.subr.mxu0 0.0
    %397 = vmatpush2.msra.mxu0 0.0
    %398 = vmatprep.subr.mxu0 0.0
    %399 = vmatpush2.msra.mxu0 0.0
    %400 = vmatprep.subr.mxu0 0.0
    %401 = vmatpush2.msra.mxu0 0.0
    %402 = vmatprep.subr.mxu0 0.0
    %403 = vmatpush2.msra.mxu0 0.0
    %404 = vmatprep.subr.mxu0 0.0
    %405 = vmatpush2.msra.mxu0 0.0
    %406 = vmatprep.subr.mxu0 0.0
    %407 = vmatpush2.msra.mxu0 0.0
    %408 = vmatprep.subr.mxu0 0.0
    %409 = vmatpush2.msra.mxu0 0.0
    %410 = vmatprep.subr.mxu0 0.0
    %411 = vmatpush2.msra.mxu0 0.0
    %412 = vmatprep.subr.mxu0 0.0
    %413 = vmatpush2.msra.mxu0 0.0
    %414 = vmatprep.subr.mxu0 0.0
    %415 = vmatpush2.msra.mxu0 0.0
    %416 = vmatprep.subr.mxu0 0.0
    %417 = vmatpush2.msra.mxu0 0.0
    %418 = vmatprep.mubr.f32.mxu0 0.0
    %419 = vmatmul.mubr.f32.gmra.mxu0 %v282
    %v420 = vpop.f32.mrf.mxu0
    %v421 = vadd.f32 0.0, %v420
    %v422 = vpop.f32.mrf.mxu0
    %v423 = vadd.f32 0.0, %v422
    %424 = vdwg.mxu0
    %425 = vmatprep.subr.mxu0 %v220
    %426 = vmatpush1.msra.mxu0 %v219
    %427 = vmatprep.subr.mxu0 %v213
    %428 = vmatpush1.msra.mxu0 %v212
    %429 = vmatprep.subr.mxu0 %v206
    %430 = vmatpush1.msra.mxu0 %v205
    %431 = vmatprep.subr.mxu0 %v199
    %432 = vmatpush1.msra.mxu0 %v198
    %433 = vmatprep.subr.mxu0 %v192
    %434 = vmatpush1.msra.mxu0 %v191
    %435 = vmatprep.subr.mxu0 %v185
    %436 = vmatpush1.msra.mxu0 %v184
    %437 = vmatprep.subr.mxu0 %v178
    %438 = vmatpush1.msra.mxu0 %v177
    %439 = vmatprep.subr.mxu0 %v171
    %440 = vmatpush1.msra.mxu0 %v170
    %441 = vmatprep.subr.mxu0 %v164
    %442 = vmatpush1.msra.mxu0 %v163
    %443 = vmatprep.subr.mxu0 %v157
    %444 = vmatpush1.msra.mxu0 %v156
    %445 = vmatprep.subr.mxu0 %v150
    %446 = vmatpush1.msra.mxu0 %v149
    %447 = vmatprep.subr.mxu0 %v143
    %448 = vmatpush1.msra.mxu0 %v142
    %449 = vmatprep.subr.mxu0 %v136
    %450 = vmatpush1.msra.mxu0 %v135
    %451 = vmatprep.subr.mxu0 %v129
    %452 = vmatpush1.msra.mxu0 %v128
    %453 = vmatprep.subr.mxu0 %v122
    %454 = vmatpush1.msra.mxu0 %v121
    %455 = vmatprep.subr.mxu0 %v115
    %456 = vmatpush1.msra.mxu0 %v114
    %457 = vmatprep.subr.mxu0 0.0
    %458 = vmatpush2.msra.mxu0 0.0
    %459 = vmatprep.subr.mxu0 0.0
    %460 = vmatpush2.msra.mxu0 0.0
    %461 = vmatprep.subr.mxu0 0.0
    %462 = vmatpush2.msra.mxu0 0.0
    %463 = vmatprep.subr.mxu0 0.0
    %464 = vmatpush2.msra.mxu0 0.0
    %465 = vmatprep.subr.mxu0 0.0
    %466 = vmatpush2.msra.mxu0 0.0
    %467 = vmatprep.subr.mxu0 0.0
    %468 = vmatpush2.msra.mxu0 0.0
    %469 = vmatprep.subr.mxu0 0.0
    %470 = vmatpush2.msra.mxu0 0.0
    %471 = vmatprep.subr.mxu0 0.0
    %472 = vmatpush2.msra.mxu0 0.0
    %473 = vmatprep.subr.mxu0 0.0
    %474 = vmatpush2.msra.mxu0 0.0
    %475 = vmatprep.subr.mxu0 0.0
    %476 = vmatpush2.msra.mxu0 0.0
    %477 = vmatprep.subr.mxu0 0.0
    %478 = vmatpush2.msra.mxu0 0.0
    %479 = vmatprep.subr.mxu0 0.0
    %480 = vmatpush2.msra.mxu0 0.0
    %481 = vmatprep.subr.mxu0 0.0
    %482 = vmatpush2.msra.mxu0 0.0
    %483 = vmatprep.subr.mxu0 0.0
    %484 = vmatpush2.msra.mxu0 0.0
    %485 = vmatprep.subr.mxu0 0.0
    %486 = vmatpush2.msra.mxu0 0.0
    %487 = vmatprep.subr.mxu0 0.0
    %488 = vmatpush2.msra.mxu0 0.0
    %489 = vmatprep.mubr.f32.mxu0 0.0
    %490 = vmatmul.mubr.f32.gmra.mxu0 %v282
    %v491 = vpop.f32.mrf.mxu0
    %v492 = vadd.f32 0.0, %v491
    %v493 = vpop.f32.mrf.mxu0
    %v494 = vadd.f32 0.0, %v493
    %495 = vdwg.mxu0
    %496 = vmatprep.subr.mxu0 0.0
    %497 = vmatpush1.msra.mxu0 %v221
    %498 = vmatprep.subr.mxu0 0.0
    %499 = vmatpush1.msra.mxu0 %v214
    %500 = vmatprep.subr.mxu0 0.0
    %501 = vmatpush1.msra.mxu0 %v207
    %502 = vmatprep.subr.mxu0 0.0
    %503 = vmatpush1.msra.mxu0 %v200
    %504 = vmatprep.subr.mxu0 0.0
    %505 = vmatpush1.msra.mxu0 %v193
    %506 = vmatprep.subr.mxu0 0.0
    %507 = vmatpush1.msra.mxu0 %v186
    %508 = vmatprep.subr.mxu0 0.0
    %509 = vmatpush1.msra.mxu0 %v179
    %510 = vmatprep.subr.mxu0 0.0
    %511 = vmatpush1.msra.mxu0 %v172
    %512 = vmatprep.subr.mxu0 0.0
    %513 = vmatpush1.msra.mxu0 %v165
    %514 = vmatprep.subr.mxu0 0.0
    %515 = vmatpush1.msra.mxu0 %v158
    %516 = vmatprep.subr.mxu0 0.0
    %517 = vmatpush1.msra.mxu0 %v151
    %518 = vmatprep.subr.mxu0 0.0
    %519 = vmatpush1.msra.mxu0 %v144
    %520 = vmatprep.subr.mxu0 0.0
    %521 = vmatpush1.msra.mxu0 %v137
    %522 = vmatprep.subr.mxu0 0.0
    %523 = vmatpush1.msra.mxu0 %v130
    %524 = vmatprep.subr.mxu0 0.0
    %525 = vmatpush1.msra.mxu0 %v123
    %526 = vmatprep.subr.mxu0 0.0
    %527 = vmatpush1.msra.mxu0 %v116
    %528 = vmatprep.subr.mxu0 0.0
    %529 = vmatpush2.msra.mxu0 0.0
    %530 = vmatprep.subr.mxu0 0.0
    %531 = vmatpush2.msra.mxu0 0.0
    %532 = vmatprep.subr.mxu0 0.0
    %533 = vmatpush2.msra.mxu0 0.0
    %534 = vmatprep.subr.mxu0 0.0
    %535 = vmatpush2.msra.mxu0 0.0
    %536 = vmatprep.subr.mxu0 0.0
    %537 = vmatpush2.msra.mxu0 0.0
    %538 = vmatprep.subr.mxu0 0.0
    %539 = vmatpush2.msra.mxu0 0.0
    %540 = vmatprep.subr.mxu0 0.0
    %541 = vmatpush2.msra.mxu0 0.0
    %542 = vmatprep.subr.mxu0 0.0
    %543 = vmatpush2.msra.mxu0 0.0
    %544 = vmatprep.subr.mxu0 0.0
    %545 = vmatpush2.msra.mxu0 0.0
    %546 = vmatprep.subr.mxu0 0.0
    %547 = vmatpush2.msra.mxu0 0.0
    %548 = vmatprep.subr.mxu0 0.0
    %549 = vmatpush2.msra.mxu0 0.0
    %550 = vmatprep.subr.mxu0 0.0
    %551 = vmatpush2.msra.mxu0 0.0
    %552 = vmatprep.subr.mxu0 0.0
    %553 = vmatpush2.msra.mxu0 0.0
    %554 = vmatprep.subr.mxu0 0.0
    %555 = vmatpush2.msra.mxu0 0.0
    %556 = vmatprep.subr.mxu0 0.0
    %557 = vmatpush2.msra.mxu0 0.0
    %558 = vmatprep.subr.mxu0 0.0
    %559 = vmatpush2.msra.mxu0 0.0
    %560 = vmatprep.mubr.f32.mxu0 0.0
    %561 = vmatmul.mubr.f32.gmra.mxu0 %v282
    %v562 = vpop.f32.mrf.mxu0
    %v563 = vadd.f32 0.0, %v562
    %v564 = vpop.f32.mrf.mxu0
    %565 = vdwg.mxu0
    %v566 = vadd.f32 %v255, %v423
    %v567 = vadd.f32 %v256, %v492
    %v568 = vadd.f32 %v257, %v494
    %v569 = vadd.f32 %v566, %v234
    %v570 = vadd.f32 %v567, %v238
    %v571 = vadd.f32 %v568, %v242
    %v572 = vadd.f32 %v253, %v563
    %v573 = vadd.f32 %v572, %v251
    %574 = vst [vmem:[#allocation15] sm:$0xff] %v573
    %v575 = vadd.f32 %v569, %v350
    %v576 = vxor.u32 %v575, 2147483648
    %v577 = vmul.f32 %v576, 1.442695
    %v578 = vpow.pop %v577
    %v579 = vadd.f32 %v578, 1.0
    %v580 = vrcp.pop %v579
    %v581 = vmul.f32 1.0, %v580
    %v582 = vadd.f32 %v570, %v352
    %v583 = vxor.u32 %v582, 2147483648
    %v584 = vmul.f32 %v583, 1.442695
    %v585 = vpow.pop %v584
    %v586 = vadd.f32 %v585, 1.0
    %v587 = vrcp.pop %v586
    %v588 = vmul.f32 1.0, %v587
    %v589 = vadd.f32 %v421, %v227
    %v590 = vmul.f32 %v581, %v589
    %v591 = vadd.f32 %v571, %v590
    %v592 = vtanh.pop %v591
    %v593 = vsub.f32 1.0, %v588
    %v594 = vmul.f32 %v593, %v592
    %v595 = vmul.f32 %v588, %v282
    %v596 = vadd.f32 %v594, %v595
    %597 = vmatprep.subr.mxu0 %v216
    %598 = vmatpush1.msra.mxu0 %v215
    %599 = vmatprep.subr.mxu0 %v209
    %600 = vmatpush1.msra.mxu0 %v208
    %601 = vmatprep.subr.mxu0 %v202
    %602 = vmatpush1.msra.mxu0 %v201
    %603 = vmatprep.subr.mxu0 %v195
    %604 = vmatpush1.msra.mxu0 %v194
    %605 = vmatprep.subr.mxu0 %v188
    %606 = vmatpush1.msra.mxu0 %v187
    %607 = vmatprep.subr.mxu0 %v181
    %608 = vmatpush1.msra.mxu0 %v180
    %609 = vmatprep.subr.mxu0 %v174
    %610 = vmatpush1.msra.mxu0 %v173
    %611 = vmatprep.subr.mxu0 %v167
    %612 = vmatpush1.msra.mxu0 %v166
    %613 = vmatprep.subr.mxu0 %v160
    %614 = vmatpush1.msra.mxu0 %v159
    %615 = vmatprep.subr.mxu0 %v153
    %616 = vmatpush1.msra.mxu0 %v152
    %617 = vmatprep.subr.mxu0 %v146
    %618 = vmatpush1.msra.mxu0 %v145
    %619 = vmatprep.subr.mxu0 %v139
    %620 = vmatpush1.msra.mxu0 %v138
    %621 = vmatprep.subr.mxu0 %v132
    %622 = vmatpush1.msra.mxu0 %v131
    %623 = vmatprep.subr.mxu0 %v125
    %624 = vmatpush1.msra.mxu0 %v124
    %625 = vmatprep.subr.mxu0 %v118
    %626 = vmatpush1.msra.mxu0 %v117
    %627 = vmatprep.subr.mxu0 %v111
    %628 = vmatpush1.msra.mxu0 %v110
    %629 = vmatprep.subr.mxu0 0.0
    %630 = vmatpush2.msra.mxu0 0.0
    %631 = vmatprep.subr.mxu0 0.0
    %632 = vmatpush2.msra.mxu0 0.0
    %633 = vmatprep.subr.mxu0 0.0
    %634 = vmatpush2.msra.mxu0 0.0
    %635 = vmatprep.subr.mxu0 0.0
    %636 = vmatpush2.msra.mxu0 0.0
    %637 = vmatprep.subr.mxu0 0.0
    %638 = vmatpush2.msra.mxu0 0.0
    %639 = vmatprep.subr.mxu0 0.0
    %640 = vmatpush2.msra.mxu0 0.0
    %641 = vmatprep.subr.mxu0 0.0
    %642 = vmatpush2.msra.mxu0 0.0
    %643 = vmatprep.subr.mxu0 0.0
    %644 = vmatpush2.msra.mxu0 0.0
    %645 = vmatprep.subr.mxu0 0.0
    %646 = vmatpush2.msra.mxu0 0.0
    %647 = vmatprep.subr.mxu0 0.0
    %648 = vmatpush2.msra.mxu0 0.0
    %649 = vmatprep.subr.mxu0 0.0
    %650 = vmatpush2.msra.mxu0 0.0
    %651 = vmatprep.subr.mxu0 0.0
    %652 = vmatpush2.msra.mxu0 0.0
    %653 = vmatprep.subr.mxu0 0.0
    %654 = vmatpush2.msra.mxu0 0.0
    %655 = vmatprep.subr.mxu0 0.0
    %656 = vmatpush2.msra.mxu0 0.0
    %657 = vmatprep.subr.mxu0 0.0
    %658 = vmatpush2.msra.mxu0 0.0
    %659 = vmatprep.subr.mxu0 0.0
    %660 = vmatpush2.msra.mxu0 0.0
    %661 = vmatprep.mubr.f32.mxu0 0.0
    %662 = vmatmul.mubr.f32.gmra.mxu0 %v596
    %v663 = vpop.f32.mrf.mxu0
    %v664 = vadd.f32 0.0, %v663
    %v665 = vpop.f32.mrf.mxu0
    %v666 = vadd.f32 0.0, %v665
    %667 = vdwg.mxu0
    %668 = vmatprep.subr.mxu0 %v218
    %669 = vmatpush1.msra.mxu0 %v217
    %670 = vmatprep.subr.mxu0 %v211
    %671 = vmatpush1.msra.mxu0 %v210
    %672 = vmatprep.subr.mxu0 %v204
    %673 = vmatpush1.msra.mxu0 %v203
    %674 = vmatprep.subr.mxu0 %v197
    %675 = vmatpush1.msra.mxu0 %v196
    %676 = vmatprep.subr.mxu0 %v190
    %677 = vmatpush1.msra.mxu0 %v189
    %678 = vmatprep.subr.mxu0 %v183
    %679 = vmatpush1.msra.mxu0 %v182
    %680 = vmatprep.subr.mxu0 %v176
    %681 = vmatpush1.msra.mxu0 %v175
    %682 = vmatprep.subr.mxu0 %v169
    %683 = vmatpush1.msra.mxu0 %v168
    %684 = vmatprep.subr.mxu0 %v162
    %685 = vmatpush1.msra.mxu0 %v161
    %686 = vmatprep.subr.mxu0 %v155
    %687 = vmatpush1.msra.mxu0 %v154
    %688 = vmatprep.subr.mxu0 %v148
    %689 = vmatpush1.msra.mxu0 %v147
    %690 = vmatprep.subr.mxu0 %v141
    %691 = vmatpush1.msra.mxu0 %v140
    %692 = vmatprep.subr.mxu0 %v134
    %693 = vmatpush1.msra.mxu0 %v133
    %694 = vmatprep.subr.mxu0 %v127
    %695 = vmatpush1.msra.mxu0 %v126
    %696 = vmatprep.subr.mxu0 %v120
    %697 = vmatpush1.msra.mxu0 %v119
    %698 = vmatprep.subr.mxu0 %v113
    %699 = vmatpush1.msra.mxu0 %v112
    %700 = vmatprep.subr.mxu0 0.0
    %701 = vmatpush2.msra.mxu0 0.0
    %702 = vmatprep.subr.mxu0 0.0
    %703 = vmatpush2.msra.mxu0 0.0
    %704 = vmatprep.subr.mxu0 0.0
    %705 = vmatpush2.msra.mxu0 0.0
    %706 = vmatprep.subr.mxu0 0.0
    %707 = vmatpush2.msra.mxu0 0.0
    %708 = vmatprep.subr.mxu0 0.0
    %709 = vmatpush2.msra.mxu0 0.0
    %710 = vmatprep.subr.mxu0 0.0
    %711 = vmatpush2.msra.mxu0 0.0
    %712 = vmatprep.subr.mxu0 0.0
    %713 = vmatpush2.msra.mxu0 0.0
    %714 = vmatprep.subr.mxu0 0.0
    %715 = vmatpush2.msra.mxu0 0.0
    %716 = vmatprep.subr.mxu0 0.0
    %717 = vmatpush2.msra.mxu0 0.0
    %718 = vmatprep.subr.mxu0 0.0
    %719 = vmatpush2.msra.mxu0 0.0
    %720 = vmatprep.subr.mxu0 0.0
    %721 = vmatpush2.msra.mxu0 0.0
    %722 = vmatprep.subr.mxu0 0.0
    %723 = vmatpush2.msra.mxu0 0.0
    %724 = vmatprep.subr.mxu0 0.0
    %725 = vmatpush2.msra.mxu0 0.0
    %726 = vmatprep.subr.mxu0 0.0
    %727 = vmatpush2.msra.mxu0 0.0
    %728 = vmatprep.subr.mxu0 0.0
    %729 = vmatpush2.msra.mxu0 0.0
    %730 = vmatprep.subr.mxu0 0.0
    %731 = vmatpush2.msra.mxu0 0.0
    %732 = vmatprep.mubr.f32.mxu0 0.0
    %733 = vmatmul.mubr.f32.gmra.mxu0 %v596
    %v734 = vpop.f32.mrf.mxu0
    %v735 = vadd.f32 0.0, %v734
    %v736 = vpop.f32.mrf.mxu0
    %v737 = vadd.f32 0.0, %v736
    %738 = vdwg.mxu0
    %739 = vmatprep.subr.mxu0 %v220
    %740 = vmatpush1.msra.mxu0 %v219
    %741 = vmatprep.subr.mxu0 %v213
    %742 = vmatpush1.msra.mxu0 %v212
    %743 = vmatprep.subr.mxu0 %v206
    %744 = vmatpush1.msra.mxu0 %v205
    %745 = vmatprep.subr.mxu0 %v199
    %746 = vmatpush1.msra.mxu0 %v198
    %747 = vmatprep.subr.mxu0 %v192
    %748 = vmatpush1.msra.mxu0 %v191
    %749 = vmatprep.subr.mxu0 %v185
    %750 = vmatpush1.msra.mxu0 %v184
    %751 = vmatprep.subr.mxu0 %v178
    %752 = vmatpush1.msra.mxu0 %v177
    %753 = vmatprep.subr.mxu0 %v171
    %754 = vmatpush1.msra.mxu0 %v170
    %755 = vmatprep.subr.mxu0 %v164
    %756 = vmatpush1.msra.mxu0 %v163
    %757 = vmatprep.subr.mxu0 %v157
    %758 = vmatpush1.msra.mxu0 %v156
    %759 = vmatprep.subr.mxu0 %v150
    %760 = vmatpush1.msra.mxu0 %v149
    %761 = vmatprep.subr.mxu0 %v143
    %762 = vmatpush1.msra.mxu0 %v142
    %763 = vmatprep.subr.mxu0 %v136
    %764 = vmatpush1.msra.mxu0 %v135
    %765 = vmatprep.subr.mxu0 %v129
    %766 = vmatpush1.msra.mxu0 %v128
    %767 = vmatprep.subr.mxu0 %v122
    %768 = vmatpush1.msra.mxu0 %v121
    %769 = vmatprep.subr.mxu0 %v115
    %770 = vmatpush1.msra.mxu0 %v114
    %771 = vmatprep.subr.mxu0 0.0
    %772 = vmatpush2.msra.mxu0 0.0
    %773 = vmatprep.subr.mxu0 0.0
    %774 = vmatpush2.msra.mxu0 0.0
    %775 = vmatprep.subr.mxu0 0.0
    %776 = vmatpush2.msra.mxu0 0.0
    %777 = vmatprep.subr.mxu0 0.0
    %778 = vmatpush2.msra.mxu0 0.0
    %779 = vmatprep.subr.mxu0 0.0
    %780 = vmatpush2.msra.mxu0 0.0
    %781 = vmatprep.subr.mxu0 0.0
    %782 = vmatpush2.msra.mxu0 0.0
    %783 = vmatprep.subr.mxu0 0.0
    %784 = vmatpush2.msra.mxu0 0.0
    %785 = vmatprep.subr.mxu0 0.0
    %786 = vmatpush2.msra.mxu0 0.0
    %787 = vmatprep.subr.mxu0 0.0
    %788 = vmatpush2.msra.mxu0 0.0
    %789 = vmatprep.subr.mxu0 0.0
    %790 = vmatpush2.msra.mxu0 0.0
    %791 = vmatprep.subr.mxu0 0.0
    %792 = vmatpush2.msra.mxu0 0.0
    %793 = vmatprep.subr.mxu0 0.0
    %794 = vmatpush2.msra.mxu0 0.0
    %795 = vmatprep.subr.mxu0 0.0
    %796 = vmatpush2.msra.mxu0 0.0
    %797 = vmatprep.subr.mxu0 0.0
    %798 = vmatpush2.msra.mxu0 0.0
    %799 = vmatprep.subr.mxu0 0.0
    %800 = vmatpush2.msra.mxu0 0.0
    %801 = vmatprep.subr.mxu0 0.0
    %802 = vmatpush2.msra.mxu0 0.0
    %803 = vmatprep.mubr.f32.mxu0 0.0
    %804 = vmatmul.mubr.f32.gmra.mxu0 %v596
    %v805 = vpop.f32.mrf.mxu0
    %v806 = vadd.f32 0.0, %v805
    %v807 = vpop.f32.mrf.mxu0
    %v808 = vadd.f32 0.0, %v807
    %809 = vdwg.mxu0
    %810 = vmatprep.subr.mxu0 0.0
    %811 = vmatpush1.msra.mxu0 %v221
    %812 = vmatprep.subr.mxu0 0.0
    %813 = vmatpush1.msra.mxu0 %v214
    %814 = vmatprep.subr.mxu0 0.0
    %815 = vmatpush1.msra.mxu0 %v207
    %816 = vmatprep.subr.mxu0 0.0
    %817 = vmatpush1.msra.mxu0 %v200
    %818 = vmatprep.subr.mxu0 0.0
    %819 = vmatpush1.msra.mxu0 %v193
    %820 = vmatprep.subr.mxu0 0.0
    %821 = vmatpush1.msra.mxu0 %v186
    %822 = vmatprep.subr.mxu0 0.0
    %823 = vmatpush1.msra.mxu0 %v179
    %824 = vmatprep.subr.mxu0 0.0
    %825 = vmatpush1.msra.mxu0 %v172
    %826 = vmatprep.subr.mxu0 0.0
    %827 = vmatpush1.msra.mxu0 %v165
    %828 = vmatprep.subr.mxu0 0.0
    %829 = vmatpush1.msra.mxu0 %v158
    %830 = vmatprep.subr.mxu0 0.0
    %831 = vmatpush1.msra.mxu0 %v151
    %832 = vmatprep.subr.mxu0 0.0
    %833 = vmatpush1.msra.mxu0 %v144
    %834 = vmatprep.subr.mxu0 0.0
    %835 = vmatpush1.msra.mxu0 %v137
    %836 = vmatprep.subr.mxu0 0.0
    %837 = vmatpush1.msra.mxu0 %v130
    %838 = vmatprep.subr.mxu0 0.0
    %839 = vmatpush1.msra.mxu0 %v123
    %840 = vmatprep.subr.mxu0 0.0
    %841 = vmatpush1.msra.mxu0 %v116
    %842 = vmatprep.subr.mxu0 0.0
    %843 = vmatpush2.msra.mxu0 0.0
    %844 = vmatprep.subr.mxu0 0.0
    %845 = vmatpush2.msra.mxu0 0.0
    %846 = vmatprep.subr.mxu0 0.0
    %847 = vmatpush2.msra.mxu0 0.0
    %848 = vmatprep.subr.mxu0 0.0
    %849 = vmatpush2.msra.mxu0 0.0
    %850 = vmatprep.subr.mxu0 0.0
    %851 = vmatpush2.msra.mxu0 0.0
    %852 = vmatprep.subr.mxu0 0.0
    %853 = vmatpush2.msra.mxu0 0.0
    %854 = vmatprep.subr.mxu0 0.0
    %855 = vmatpush2.msra.mxu0 0.0
    %856 = vmatprep.subr.mxu0 0.0
    %857 = vmatpush2.msra.mxu0 0.0
    %858 = vmatprep.subr.mxu0 0.0
    %859 = vmatpush2.msra.mxu0 0.0
    %860 = vmatprep.subr.mxu0 0.0
    %861 = vmatpush2.msra.mxu0 0.0
    %862 = vmatprep.subr.mxu0 0.0
    %863 = vmatpush2.msra.mxu0 0.0
    %864 = vmatprep.subr.mxu0 0.0
    %865 = vmatpush2.msra.mxu0 0.0
    %866 = vmatprep.subr.mxu0 0.0
    %867 = vmatpush2.msra.mxu0 0.0
    %868 = vmatprep.subr.mxu0 0.0
    %869 = vmatpush2.msra.mxu0 0.0
    %870 = vmatprep.subr.mxu0 0.0
    %871 = vmatpush2.msra.mxu0 0.0
    %872 = vmatprep.subr.mxu0 0.0
    %873 = vmatpush2.msra.mxu0 0.0
    %874 = vmatprep.mubr.f32.mxu0 0.0
    %875 = vmatmul.mubr.f32.gmra.mxu0 %v596
    %v876 = vpop.f32.mrf.mxu0
    %v877 = vadd.f32 0.0, %v876
    %v878 = vpop.f32.mrf.mxu0
    %879 = vdwg.mxu0
    %v880 = vadd.f32 %v569, %v737
    %v881 = vadd.f32 %v570, %v806
    %v882 = vadd.f32 %v571, %v808
    %v883 = vadd.f32 %v880, %v234
    %v884 = vadd.f32 %v881, %v238
    %v885 = vadd.f32 %v882, %v242
    %v886 = vadd.f32 %v573, %v877
    %v887 = vadd.f32 %v886, %v251
    %888 = vst [vmem:[#allocation15 + $0x8] sm:$0xff] %v887
    %v889 = vadd.f32 %v883, %v664
    %v890 = vxor.u32 %v889, 2147483648
    %v891 = vmul.f32 %v890, 1.442695
    %v892 = vpow.pop %v891
    %v893 = vadd.f32 %v892, 1.0
    %v894 = vrcp.pop %v893
    %v895 = vmul.f32 1.0, %v894
    %v896 = vadd.f32 %v884, %v666
    %v897 = vxor.u32 %v896, 2147483648
    %v898 = vmul.f32 %v897, 1.442695
    %v899 = vpow.pop %v898
    %v900 = vadd.f32 %v899, 1.0
    %v901 = vrcp.pop %v900
    %v902 = vmul.f32 1.0, %v901
    %v903 = vadd.f32 %v735, %v227
    %v904 = vmul.f32 %v895, %v903
    %v905 = vadd.f32 %v885, %v904
    %v906 = vtanh.pop %v905
    %v907 = vsub.f32 1.0, %v902
    %v908 = vmul.f32 %v907, %v906
    %v909 = vmul.f32 %v902, %v596
    %v910 = vadd.f32 %v908, %v909
    %911 = vmatprep.subr.mxu0 %v216
    %912 = vmatpush1.msra.mxu0 %v215
    %913 = vmatprep.subr.mxu0 %v209
    %914 = vmatpush1.msra.mxu0 %v208
    %915 = vmatprep.subr.mxu0 %v202
    %916 = vmatpush1.msra.mxu0 %v201
    %917 = vmatprep.subr.mxu0 %v195
    %918 = vmatpush1.msra.mxu0 %v194
    %919 = vmatprep.subr.mxu0 %v188
    %920 = vmatpush1.msra.mxu0 %v187
    %921 = vmatprep.subr.mxu0 %v181
    %922 = vmatpush1.msra.mxu0 %v180
    %923 = vmatprep.subr.mxu0 %v174
    %924 = vmatpush1.msra.mxu0 %v173
    %925 = vmatprep.subr.mxu0 %v167
    %926 = vmatpush1.msra.mxu0 %v166
    %927 = vmatprep.subr.mxu0 %v160
    %928 = vmatpush1.msra.mxu0 %v159
    %929 = vmatprep.subr.mxu0 %v153
    %930 = vmatpush1.msra.mxu0 %v152
    %931 = vmatprep.subr.mxu0 %v146
    %932 = vmatpush1.msra.mxu0 %v145
    %933 = vmatprep.subr.mxu0 %v139
    %934 = vmatpush1.msra.mxu0 %v138
    %935 = vmatprep.subr.mxu0 %v132
    %936 = vmatpush1.msra.mxu0 %v131
    %937 = vmatprep.subr.mxu0 %v125
    %938 = vmatpush1.msra.mxu0 %v124
    %939 = vmatprep.subr.mxu0 %v118
    %940 = vmatpush1.msra.mxu0 %v117
    %941 = vmatprep.subr.mxu0 %v111
    %942 = vmatpush1.msra.mxu0 %v110
    %943 = vmatprep.subr.mxu0 0.0
    %944 = vmatpush2.msra.mxu0 0.0
    %945 = vmatprep.subr.mxu0 0.0
    %946 = vmatpush2.msra.mxu0 0.0
    %947 = vmatprep.subr.mxu0 0.0
    %948 = vmatpush2.msra.mxu0 0.0
    %949 = vmatprep.subr.mxu0 0.0
    %950 = vmatpush2.msra.mxu0 0.0
    %951 = vmatprep.subr.mxu0 0.0
    %952 = vmatpush2.msra.mxu0 0.0
    %953 = vmatprep.subr.mxu0 0.0
    %954 = vmatpush2.msra.mxu0 0.0
    %955 = vmatprep.subr.mxu0 0.0
    %956 = vmatpush2.msra.mxu0 0.0
    %957 = vmatprep.subr.mxu0 0.0
    %958 = vmatpush2.msra.mxu0 0.0
    %959 = vmatprep.subr.mxu0 0.0
    %960 = vmatpush2.msra.mxu0 0.0
    %961 = vmatprep.subr.mxu0 0.0
    %962 = vmatpush2.msra.mxu0 0.0
    %963 = vmatprep.subr.mxu0 0.0
    %964 = vmatpush2.msra.mxu0 0.0
    %965 = vmatprep.subr.mxu0 0.0
    %966 = vmatpush2.msra.mxu0 0.0
    %967 = vmatprep.subr.mxu0 0.0
    %968 = vmatpush2.msra.mxu0 0.0
    %969 = vmatprep.subr.mxu0 0.0
    %970 = vmatpush2.msra.mxu0 0.0
    %971 = vmatprep.subr.mxu0 0.0
    %972 = vmatpush2.msra.mxu0 0.0
    %973 = vmatprep.subr.mxu0 0.0
    %974 = vmatpush2.msra.mxu0 0.0
    %975 = vmatprep.mubr.f32.mxu0 0.0
    %976 = vmatmul.mubr.f32.gmra.mxu0 %v910
    %v977 = vpop.f32.mrf.mxu0
    %v978 = vadd.f32 0.0, %v977
    %v979 = vpop.f32.mrf.mxu0
    %v980 = vadd.f32 0.0, %v979
    %981 = vdwg.mxu0
    %982 = vmatprep.subr.mxu0 %v218
    %983 = vmatpush1.msra.mxu0 %v217
    %984 = vmatprep.subr.mxu0 %v211
    %985 = vmatpush1.msra.mxu0 %v210
    %986 = vmatprep.subr.mxu0 %v204
    %987 = vmatpush1.msra.mxu0 %v203
    %988 = vmatprep.subr.mxu0 %v197
    %989 = vmatpush1.msra.mxu0 %v196
    %990 = vmatprep.subr.mxu0 %v190
    %991 = vmatpush1.msra.mxu0 %v189
    %992 = vmatprep.subr.mxu0 %v183
    %993 = vmatpush1.msra.mxu0 %v182
    %994 = vmatprep.subr.mxu0 %v176
    %995 = vmatpush1.msra.mxu0 %v175
    %996 = vmatprep.subr.mxu0 %v169
    %997 = vmatpush1.msra.mxu0 %v168
    %998 = vmatprep.subr.mxu0 %v162
    %999 = vmatpush1.msra.mxu0 %v161
    %1000 = vmatprep.subr.mxu0 %v155
    %1001 = vmatpush1.msra.mxu0 %v154
    %1002 = vmatprep.subr.mxu0 %v148
    %1003 = vmatpush1.msra.mxu0 %v147
    %1004 = vmatprep.subr.mxu0 %v141
    %1005 = vmatpush1.msra.mxu0 %v140
    %1006 = vmatprep.subr.mxu0 %v134
    %1007 = vmatpush1.msra.mxu0 %v133
    %1008 = vmatprep.subr.mxu0 %v127
    %1009 = vmatpush1.msra.mxu0 %v126
    %1010 = vmatprep.subr.mxu0 %v120
    %1011 = vmatpush1.msra.mxu0 %v119
    %1012 = vmatprep.subr.mxu0 %v113
    %1013 = vmatpush1.msra.mxu0 %v112
    %1014 = vmatprep.subr.mxu0 0.0
    %1015 = vmatpush2.msra.mxu0 0.0
    %1016 = vmatprep.subr.mxu0 0.0
    %1017 = vmatpush2.msra.mxu0 0.0
    %1018 = vmatprep.subr.mxu0 0.0
    %1019 = vmatpush2.msra.mxu0 0.0
    %1020 = vmatprep.subr.mxu0 0.0
    %1021 = vmatpush2.msra.mxu0 0.0
    %1022 = vmatprep.subr.mxu0 0.0
    %1023 = vmatpush2.msra.mxu0 0.0
    %1024 = vmatprep.subr.mxu0 0.0
    %1025 = vmatpush2.msra.mxu0 0.0
    %1026 = vmatprep.subr.mxu0 0.0
    %1027 = vmatpush2.msra.mxu0 0.0
    %1028 = vmatprep.subr.mxu0 0.0
    %1029 = vmatpush2.msra.mxu0 0.0
    %1030 = vmatprep.subr.mxu0 0.0
    %1031 = vmatpush2.msra.mxu0 0.0
    %1032 = vmatprep.subr.mxu0 0.0
    %1033 = vmatpush2.msra.mxu0 0.0
    %1034 = vmatprep.subr.mxu0 0.0
    %1035 = vmatpush2.msra.mxu0 0.0
    %1036 = vmatprep.subr.mxu0 0.0
    %1037 = vmatpush2.msra.mxu0 0.0
    %1038 = vmatprep.subr.mxu0 0.0
    %1039 = vmatpush2.msra.mxu0 0.0
    %1040 = vmatprep.subr.mxu0 0.0
    %1041 = vmatpush2.msra.mxu0 0.0
    %1042 = vmatprep.subr.mxu0 0.0
    %1043 = vmatpush2.msra.mxu0 0.0
    %1044 = vmatprep.subr.mxu0 0.0
    %1045 = vmatpush2.msra.mxu0 0.0
    %1046 = vmatprep.mubr.f32.mxu0 0.0
    %1047 = vmatmul.mubr.f32.gmra.mxu0 %v910
    %v1048 = vpop.f32.mrf.mxu0
    %v1049 = vadd.f32 0.0, %v1048
    %v1050 = vpop.f32.mrf.mxu0
    %v1051 = vadd.f32 0.0, %v1050
    %1052 = vdwg.mxu0
    %1053 = vmatprep.subr.mxu0 %v220
    %1054 = vmatpush1.msra.mxu0 %v219
    %1055 = vmatprep.subr.mxu0 %v213
    %1056 = vmatpush1.msra.mxu0 %v212
    %1057 = vmatprep.subr.mxu0 %v206
    %1058 = vmatpush1.msra.mxu0 %v205
    %1059 = vmatprep.subr.mxu0 %v199
    %1060 = vmatpush1.msra.mxu0 %v198
    %1061 = vmatprep.subr.mxu0 %v192
    %1062 = vmatpush1.msra.mxu0 %v191
    %1063 = vmatprep.subr.mxu0 %v185
    %1064 = vmatpush1.msra.mxu0 %v184
    %1065 = vmatprep.subr.mxu0 %v178
    %1066 = vmatpush1.msra.mxu0 %v177
    %1067 = vmatprep.subr.mxu0 %v171
    %1068 = vmatpush1.msra.mxu0 %v170
    %1069 = vmatprep.subr.mxu0 %v164
    %1070 = vmatpush1.msra.mxu0 %v163
    %1071 = vmatprep.subr.mxu0 %v157
    %1072 = vmatpush1.msra.mxu0 %v156
    %1073 = vmatprep.subr.mxu0 %v150
    %1074 = vmatpush1.msra.mxu0 %v149
    %1075 = vmatprep.subr.mxu0 %v143
    %1076 = vmatpush1.msra.mxu0 %v142
    %1077 = vmatprep.subr.mxu0 %v136
    %1078 = vmatpush1.msra.mxu0 %v135
    %1079 = vmatprep.subr.mxu0 %v129
    %1080 = vmatpush1.msra.mxu0 %v128
    %1081 = vmatprep.subr.mxu0 %v122
    %1082 = vmatpush1.msra.mxu0 %v121
    %1083 = vmatprep.subr.mxu0 %v115
    %1084 = vmatpush1.msra.mxu0 %v114
    %1085 = vmatprep.subr.mxu0 0.0
    %1086 = vmatpush2.msra.mxu0 0.0
    %1087 = vmatprep.subr.mxu0 0.0
    %1088 = vmatpush2.msra.mxu0 0.0
    %1089 = vmatprep.subr.mxu0 0.0
    %1090 = vmatpush2.msra.mxu0 0.0
    %1091 = vmatprep.subr.mxu0 0.0
    %1092 = vmatpush2.msra.mxu0 0.0
    %1093 = vmatprep.subr.mxu0 0.0
    %1094 = vmatpush2.msra.mxu0 0.0
    %1095 = vmatprep.subr.mxu0 0.0
    %1096 = vmatpush2.msra.mxu0 0.0
    %1097 = vmatprep.subr.mxu0 0.0
    %1098 = vmatpush2.msra.mxu0 0.0
    %1099 = vmatprep.subr.mxu0 0.0
    %1100 = vmatpush2.msra.mxu0 0.0
    %1101 = vmatprep.subr.mxu0 0.0
    %1102 = vmatpush2.msra.mxu0 0.0
    %1103 = vmatprep.subr.mxu0 0.0
    %1104 = vmatpush2.msra.mxu0 0.0
    %1105 = vmatprep.subr.mxu0 0.0
    %1106 = vmatpush2.msra.mxu0 0.0
    %1107 = vmatprep.subr.mxu0 0.0
    %1108 = vmatpush2.msra.mxu0 0.0
    %1109 = vmatprep.subr.mxu0 0.0
    %1110 = vmatpush2.msra.mxu0 0.0
    %1111 = vmatprep.subr.mxu0 0.0
    %1112 = vmatpush2.msra.mxu0 0.0
    %1113 = vmatprep.subr.mxu0 0.0
    %1114 = vmatpush2.msra.mxu0 0.0
    %1115 = vmatprep.subr.mxu0 0.0
    %1116 = vmatpush2.msra.mxu0 0.0
    %1117 = vmatprep.mubr.f32.mxu0 0.0
    %1118 = vmatmul.mubr.f32.gmra.mxu0 %v910
    %v1119 = vpop.f32.mrf.mxu0
    %v1120 = vadd.f32 0.0, %v1119
    %v1121 = vpop.f32.mrf.mxu0
    %v1122 = vadd.f32 0.0, %v1121
    %1123 = vdwg.mxu0
    %1124 = vmatprep.subr.mxu0 0.0
    %1125 = vmatpush1.msra.mxu0 %v221
    %1126 = vmatprep.subr.mxu0 0.0
    %1127 = vmatpush1.msra.mxu0 %v214
    %1128 = vmatprep.subr.mxu0 0.0
    %1129 = vmatpush1.msra.mxu0 %v207
    %1130 = vmatprep.subr.mxu0 0.0
    %1131 = vmatpush1.msra.mxu0 %v200
    %1132 = vmatprep.subr.mxu0 0.0
    %1133 = vmatpush1.msra.mxu0 %v193
    %1134 = vmatprep.subr.mxu0 0.0
    %1135 = vmatpush1.msra.mxu0 %v186
    %1136 = vmatprep.subr.mxu0 0.0
    %1137 = vmatpush1.msra.mxu0 %v179
    %1138 = vmatprep.subr.mxu0 0.0
    %1139 = vmatpush1.msra.mxu0 %v172
    %1140 = vmatprep.subr.mxu0 0.0
    %1141 = vmatpush1.msra.mxu0 %v165
    %1142 = vmatprep.subr.mxu0 0.0
    %1143 = vmatpush1.msra.mxu0 %v158
    %1144 = vmatprep.subr.mxu0 0.0
    %1145 = vmatpush1.msra.mxu0 %v151
    %1146 = vmatprep.subr.mxu0 0.0
    %1147 = vmatpush1.msra.mxu0 %v144
    %1148 = vmatprep.subr.mxu0 0.0
    %1149 = vmatpush1.msra.mxu0 %v137
    %1150 = vmatprep.subr.mxu0 0.0
    %1151 = vmatpush1.msra.mxu0 %v130
    %1152 = vmatprep.subr.mxu0 0.0
    %1153 = vmatpush1.msra.mxu0 %v123
    %1154 = vmatprep.subr.mxu0 0.0
    %1155 = vmatpush1.msra.mxu0 %v116
    %1156 = vmatprep.subr.mxu0 0.0
    %1157 = vmatpush2.msra.mxu0 0.0
    %1158 = vmatprep.subr.mxu0 0.0
    %1159 = vmatpush2.msra.mxu0 0.0
    %1160 = vmatprep.subr.mxu0 0.0
    %1161 = vmatpush2.msra.mxu0 0.0
    %1162 = vmatprep.subr.mxu0 0.0
    %1163 = vmatpush2.msra.mxu0 0.0
    %1164 = vmatprep.subr.mxu0 0.0
    %1165 = vmatpush2.msra.mxu0 0.0
    %1166 = vmatprep.subr.mxu0 0.0
    %1167 = vmatpush2.msra.mxu0 0.0
    %1168 = vmatprep.subr.mxu0 0.0
    %1169 = vmatpush2.msra.mxu0 0.0
    %1170 = vmatprep.subr.mxu0 0.0
    %1171 = vmatpush2.msra.mxu0 0.0
    %1172 = vmatprep.subr.mxu0 0.0
    %1173 = vmatpush2.msra.mxu0 0.0
    %1174 = vmatprep.subr.mxu0 0.0
    %1175 = vmatpush2.msra.mxu0 0.0
    %1176 = vmatprep.subr.mxu0 0.0
    %1177 = vmatpush2.msra.mxu0 0.0
    %1178 = vmatprep.subr.mxu0 0.0
    %1179 = vmatpush2.msra.mxu0 0.0
    %1180 = vmatprep.subr.mxu0 0.0
    %1181 = vmatpush2.msra.mxu0 0.0
    %1182 = vmatprep.subr.mxu0 0.0
    %1183 = vmatpush2.msra.mxu0 0.0
    %1184 = vmatprep.subr.mxu0 0.0
    %1185 = vmatpush2.msra.mxu0 0.0
    %1186 = vmatprep.subr.mxu0 0.0
    %1187 = vmatpush2.msra.mxu0 0.0
    %1188 = vmatprep.mubr.f32.mxu0 0.0
    %1189 = vmatmul.mubr.f32.gmra.mxu0 %v910
    %v1190 = vpop.f32.mrf.mxu0
    %v1191 = vadd.f32 0.0, %v1190
    %v1192 = vpop.f32.mrf.mxu0
    %1193 = vdwg.mxu0
    %v1194 = vadd.f32 %v883, %v1051
    %v1195 = vadd.f32 %v884, %v1120
    %v1196 = vadd.f32 %v885, %v1122
    %v1197 = vadd.f32 %v1194, %v234
    %v1198 = vadd.f32 %v1195, %v238
    %v1199 = vadd.f32 %v1196, %v242
    %v1200 = vadd.f32 %v887, %v1191
    %v1201 = vadd.f32 %v1200, %v251
    %1202 = vst [vmem:[#allocation15 + $0x10] sm:$0xff] %v1201
    %v1203 = vadd.f32 %v1197, %v978
    %v1204 = vxor.u32 %v1203, 2147483648
    %v1205 = vmul.f32 %v1204, 1.442695
    %v1206 = vpow.pop %v1205
    %v1207 = vadd.f32 %v1206, 1.0
    %v1208 = vrcp.pop %v1207
    %v1209 = vmul.f32 1.0, %v1208
    %v1210 = vadd.f32 %v1198, %v980
    %v1211 = vxor.u32 %v1210, 2147483648
    %v1212 = vmul.f32 %v1211, 1.442695
    %v1213 = vpow.pop %v1212
    %v1214 = vadd.f32 %v1213, 1.0
    %v1215 = vrcp.pop %v1214
    %v1216 = vmul.f32 1.0, %v1215
    %v1217 = vadd.f32 %v1049, %v227
    %v1218 = vmul.f32 %v1209, %v1217
    %v1219 = vadd.f32 %v1199, %v1218
    %v1220 = vtanh.pop %v1219
    %v1221 = vsub.f32 1.0, %v1216
    %v1222 = vmul.f32 %v1221, %v1220
    %v1223 = vmul.f32 %v1216, %v910
    %v1224 = vadd.f32 %v1222, %v1223
    %1225 = vmatprep.subr.mxu0 %v216
    %1226 = vmatpush1.msra.mxu0 %v215
    %1227 = vmatprep.subr.mxu0 %v209
    %1228 = vmatpush1.msra.mxu0 %v208
    %1229 = vmatprep.subr.mxu0 %v202
    %1230 = vmatpush1.msra.mxu0 %v201
    %1231 = vmatprep.subr.mxu0 %v195
    %1232 = vmatpush1.msra.mxu0 %v194
    %1233 = vmatprep.subr.mxu0 %v188
    %1234 = vmatpush1.msra.mxu0 %v187
    %1235 = vmatprep.subr.mxu0 %v181
    %1236 = vmatpush1.msra.mxu0 %v180
    %1237 = vmatprep.subr.mxu0 %v174
    %1238 = vmatpush1.msra.mxu0 %v173
    %1239 = vmatprep.subr.mxu0 %v167
    %1240 = vmatpush1.msra.mxu0 %v166
    %1241 = vmatprep.subr.mxu0 %v160
    %1242 = vmatpush1.msra.mxu0 %v159
    %1243 = vmatprep.subr.mxu0 %v153
    %1244 = vmatpush1.msra.mxu0 %v152
    %1245 = vmatprep.subr.mxu0 %v146
    %1246 = vmatpush1.msra.mxu0 %v145
    %1247 = vmatprep.subr.mxu0 %v139
    %1248 = vmatpush1.msra.mxu0 %v138
    %1249 = vmatprep.subr.mxu0 %v132
    %1250 = vmatpush1.msra.mxu0 %v131
    %1251 = vmatprep.subr.mxu0 %v125
    %1252 = vmatpush1.msra.mxu0 %v124
    %1253 = vmatprep.subr.mxu0 %v118
    %1254 = vmatpush1.msra.mxu0 %v117
    %1255 = vmatprep.subr.mxu0 %v111
    %1256 = vmatpush1.msra.mxu0 %v110
    %1257 = vmatprep.subr.mxu0 0.0
    %1258 = vmatpush2.msra.mxu0 0.0
    %1259 = vmatprep.subr.mxu0 0.0
    %1260 = vmatpush2.msra.mxu0 0.0
    %1261 = vmatprep.subr.mxu0 0.0
    %1262 = vmatpush2.msra.mxu0 0.0
    %1263 = vmatprep.subr.mxu0 0.0
    %1264 = vmatpush2.msra.mxu0 0.0
    %1265 = vmatprep.subr.mxu0 0.0
    %1266 = vmatpush2.msra.mxu0 0.0
    %1267 = vmatprep.subr.mxu0 0.0
    %1268 = vmatpush2.msra.mxu0 0.0
    %1269 = vmatprep.subr.mxu0 0.0
    %1270 = vmatpush2.msra.mxu0 0.0
    %1271 = vmatprep.subr.mxu0 0.0
    %1272 = vmatpush2.msra.mxu0 0.0
    %1273 = vmatprep.subr.mxu0 0.0
    %1274 = vmatpush2.msra.mxu0 0.0
    %1275 = vmatprep.subr.mxu0 0.0
    %1276 = vmatpush2.msra.mxu0 0.0
    %1277 = vmatprep.subr.mxu0 0.0
    %1278 = vmatpush2.msra.mxu0 0.0
    %1279 = vmatprep.subr.mxu0 0.0
    %1280 = vmatpush2.msra.mxu0 0.0
    %1281 = vmatprep.subr.mxu0 0.0
    %1282 = vmatpush2.msra.mxu0 0.0
    %1283 = vmatprep.subr.mxu0 0.0
    %1284 = vmatpush2.msra.mxu0 0.0
    %1285 = vmatprep.subr.mxu0 0.0
    %1286 = vmatpush2.msra.mxu0 0.0
    %1287 = vmatprep.subr.mxu0 0.0
    %1288 = vmatpush2.msra.mxu0 0.0
    %1289 = vmatprep.mubr.f32.mxu0 0.0
    %1290 = vmatmul.mubr.f32.gmra.mxu0 %v1224
    %v1291 = vpop.f32.mrf.mxu0
    %v1292 = vadd.f32 0.0, %v1291
    %v1293 = vpop.f32.mrf.mxu0
    %v1294 = vadd.f32 0.0, %v1293
    %1295 = vdwg.mxu0
    %1296 = vmatprep.subr.mxu0 %v218
    %1297 = vmatpush1.msra.mxu0 %v217
    %1298 = vmatprep.subr.mxu0 %v211
    %1299 = vmatpush1.msra.mxu0 %v210
    %1300 = vmatprep.subr.mxu0 %v204
    %1301 = vmatpush1.msra.mxu0 %v203
    %1302 = vmatprep.subr.mxu0 %v197
    %1303 = vmatpush1.msra.mxu0 %v196
    %1304 = vmatprep.subr.mxu0 %v190
    %1305 = vmatpush1.msra.mxu0 %v189
    %1306 = vmatprep.subr.mxu0 %v183
    %1307 = vmatpush1.msra.mxu0 %v182
    %1308 = vmatprep.subr.mxu0 %v176
    %1309 = vmatpush1.msra.mxu0 %v175
    %1310 = vmatprep.subr.mxu0 %v169
    %1311 = vmatpush1.msra.mxu0 %v168
    %1312 = vmatprep.subr.mxu0 %v162
    %1313 = vmatpush1.msra.mxu0 %v161
    %1314 = vmatprep.subr.mxu0 %v155
    %1315 = vmatpush1.msra.mxu0 %v154
    %1316 = vmatprep.subr.mxu0 %v148
    %1317 = vmatpush1.msra.mxu0 %v147
    %1318 = vmatprep.subr.mxu0 %v141
    %1319 = vmatpush1.msra.mxu0 %v140
    %1320 = vmatprep.subr.mxu0 %v134
    %1321 = vmatpush1.msra.mxu0 %v133
    %1322 = vmatprep.subr.mxu0 %v127
    %1323 = vmatpush1.msra.mxu0 %v126
    %1324 = vmatprep.subr.mxu0 %v120
    %1325 = vmatpush1.msra.mxu0 %v119
    %1326 = vmatprep.subr.mxu0 %v113
    %1327 = vmatpush1.msra.mxu0 %v112
    %1328 = vmatprep.subr.mxu0 0.0
    %1329 = vmatpush2.msra.mxu0 0.0
    %1330 = vmatprep.subr.mxu0 0.0
    %1331 = vmatpush2.msra.mxu0 0.0
    %1332 = vmatprep.subr.mxu0 0.0
    %1333 = vmatpush2.msra.mxu0 0.0
    %1334 = vmatprep.subr.mxu0 0.0
    %1335 = vmatpush2.msra.mxu0 0.0
    %1336 = vmatprep.subr.mxu0 0.0
    %1337 = vmatpush2.msra.mxu0 0.0
    %1338 = vmatprep.subr.mxu0 0.0
    %1339 = vmatpush2.msra.mxu0 0.0
    %1340 = vmatprep.subr.mxu0 0.0
    %1341 = vmatpush2.msra.mxu0 0.0
    %1342 = vmatprep.subr.mxu0 0.0
    %1343 = vmatpush2.msra.mxu0 0.0
    %1344 = vmatprep.subr.mxu0 0.0
    %1345 = vmatpush2.msra.mxu0 0.0
    %1346 = vmatprep.subr.mxu0 0.0
    %1347 = vmatpush2.msra.mxu0 0.0
    %1348 = vmatprep.subr.mxu0 0.0
    %1349 = vmatpush2.msra.mxu0 0.0
    %1350 = vmatprep.subr.mxu0 0.0
    %1351 = vmatpush2.msra.mxu0 0.0
    %1352 = vmatprep.subr.mxu0 0.0
    %1353 = vmatpush2.msra.mxu0 0.0
    %1354 = vmatprep.subr.mxu0 0.0
    %1355 = vmatpush2.msra.mxu0 0.0
    %1356 = vmatprep.subr.mxu0 0.0
    %1357 = vmatpush2.msra.mxu0 0.0
    %1358 = vmatprep.subr.mxu0 0.0
    %1359 = vmatpush2.msra.mxu0 0.0
    %1360 = vmatprep.mubr.f32.mxu0 0.0
    %1361 = vmatmul.mubr.f32.gmra.mxu0 %v1224
    %v1362 = vpop.f32.mrf.mxu0
    %v1363 = vadd.f32 0.0, %v1362
    %v1364 = vpop.f32.mrf.mxu0
    %v1365 = vadd.f32 0.0, %v1364
    %1366 = vdwg.mxu0
    %1367 = vmatprep.subr.mxu0 %v220
    %1368 = vmatpush1.msra.mxu0 %v219
    %1369 = vmatprep.subr.mxu0 %v213
    %1370 = vmatpush1.msra.mxu0 %v212
    %1371 = vmatprep.subr.mxu0 %v206
    %1372 = vmatpush1.msra.mxu0 %v205
    %1373 = vmatprep.subr.mxu0 %v199
    %1374 = vmatpush1.msra.mxu0 %v198
    %1375 = vmatprep.subr.mxu0 %v192
    %1376 = vmatpush1.msra.mxu0 %v191
    %1377 = vmatprep.subr.mxu0 %v185
    %1378 = vmatpush1.msra.mxu0 %v184
    %1379 = vmatprep.subr.mxu0 %v178
    %1380 = vmatpush1.msra.mxu0 %v177
    %1381 = vmatprep.subr.mxu0 %v171
    %1382 = vmatpush1.msra.mxu0 %v170
    %1383 = vmatprep.subr.mxu0 %v164
    %1384 = vmatpush1.msra.mxu0 %v163
    %1385 = vmatprep.subr.mxu0 %v157
    %1386 = vmatpush1.msra.mxu0 %v156
    %1387 = vmatprep.subr.mxu0 %v150
    %1388 = vmatpush1.msra.mxu0 %v149
    %1389 = vmatprep.subr.mxu0 %v143
    %1390 = vmatpush1.msra.mxu0 %v142
    %1391 = vmatprep.subr.mxu0 %v136
    %1392 = vmatpush1.msra.mxu0 %v135
    %1393 = vmatprep.subr.mxu0 %v129
    %1394 = vmatpush1.msra.mxu0 %v128
    %1395 = vmatprep.subr.mxu0 %v122
    %1396 = vmatpush1.msra.mxu0 %v121
    %1397 = vmatprep.subr.mxu0 %v115
    %1398 = vmatpush1.msra.mxu0 %v114
    %1399 = vmatprep.subr.mxu0 0.0
    %1400 = vmatpush2.msra.mxu0 0.0
    %1401 = vmatprep.subr.mxu0 0.0
    %1402 = vmatpush2.msra.mxu0 0.0
    %1403 = vmatprep.subr.mxu0 0.0
    %1404 = vmatpush2.msra.mxu0 0.0
    %1405 = vmatprep.subr.mxu0 0.0
    %1406 = vmatpush2.msra.mxu0 0.0
    %1407 = vmatprep.subr.mxu0 0.0
    %1408 = vmatpush2.msra.mxu0 0.0
    %1409 = vmatprep.subr.mxu0 0.0
    %1410 = vmatpush2.msra.mxu0 0.0
    %1411 = vmatprep.subr.mxu0 0.0
    %1412 = vmatpush2.msra.mxu0 0.0
    %1413 = vmatprep.subr.mxu0 0.0
    %1414 = vmatpush2.msra.mxu0 0.0
    %1415 = vmatprep.subr.mxu0 0.0
    %1416 = vmatpush2.msra.mxu0 0.0
    %1417 = vmatprep.subr.mxu0 0.0
    %1418 = vmatpush2.msra.mxu0 0.0
    %1419 = vmatprep.subr.mxu0 0.0
    %1420 = vmatpush2.msra.mxu0 0.0
    %1421 = vmatprep.subr.mxu0 0.0
    %1422 = vmatpush2.msra.mxu0 0.0
    %1423 = vmatprep.subr.mxu0 0.0
    %1424 = vmatpush2.msra.mxu0 0.0
    %1425 = vmatprep.subr.mxu0 0.0
    %1426 = vmatpush2.msra.mxu0 0.0
    %1427 = vmatprep.subr.mxu0 0.0
    %1428 = vmatpush2.msra.mxu0 0.0
    %1429 = vmatprep.subr.mxu0 0.0
    %1430 = vmatpush2.msra.mxu0 0.0
    %1431 = vmatprep.mubr.f32.mxu0 0.0
    %1432 = vmatmul.mubr.f32.gmra.mxu0 %v1224
    %v1433 = vpop.f32.mrf.mxu0
    %v1434 = vadd.f32 0.0, %v1433
    %v1435 = vpop.f32.mrf.mxu0
    %v1436 = vadd.f32 0.0, %v1435
    %1437 = vdwg.mxu0
    %1438 = vmatprep.subr.mxu0 0.0
    %1439 = vmatpush1.msra.mxu0 %v221
    %1440 = vmatprep.subr.mxu0 0.0
    %1441 = vmatpush1.msra.mxu0 %v214
    %1442 = vmatprep.subr.mxu0 0.0
    %1443 = vmatpush1.msra.mxu0 %v207
    %1444 = vmatprep.subr.mxu0 0.0
    %1445 = vmatpush1.msra.mxu0 %v200
    %1446 = vmatprep.subr.mxu0 0.0
    %1447 = vmatpush1.msra.mxu0 %v193
    %1448 = vmatprep.subr.mxu0 0.0
    %1449 = vmatpush1.msra.mxu0 %v186
    %1450 = vmatprep.subr.mxu0 0.0
    %1451 = vmatpush1.msra.mxu0 %v179
    %1452 = vmatprep.subr.mxu0 0.0
    %1453 = vmatpush1.msra.mxu0 %v172
    %1454 = vmatprep.subr.mxu0 0.0
    %1455 = vmatpush1.msra.mxu0 %v165
    %1456 = vmatprep.subr.mxu0 0.0
    %1457 = vmatpush1.msra.mxu0 %v158
    %1458 = vmatprep.subr.mxu0 0.0
    %1459 = vmatpush1.msra.mxu0 %v151
    %1460 = vmatprep.subr.mxu0 0.0
    %1461 = vmatpush1.msra.mxu0 %v144
    %1462 = vmatprep.subr.mxu0 0.0
    %1463 = vmatpush1.msra.mxu0 %v137
    %1464 = vmatprep.subr.mxu0 0.0
    %1465 = vmatpush1.msra.mxu0 %v130
    %1466 = vmatprep.subr.mxu0 0.0
    %1467 = vmatpush1.msra.mxu0 %v123
    %1468 = vmatprep.subr.mxu0 0.0
    %1469 = vmatpush1.msra.mxu0 %v116
    %1470 = vmatprep.subr.mxu0 0.0
    %1471 = vmatpush2.msra.mxu0 0.0
    %1472 = vmatprep.subr.mxu0 0.0
    %1473 = vmatpush2.msra.mxu0 0.0
    %1474 = vmatprep.subr.mxu0 0.0
    %1475 = vmatpush2.msra.mxu0 0.0
    %1476 = vmatprep.subr.mxu0 0.0
    %1477 = vmatpush2.msra.mxu0 0.0
    %1478 = vmatprep.subr.mxu0 0.0
    %1479 = vmatpush2.msra.mxu0 0.0
    %1480 = vmatprep.subr.mxu0 0.0
    %1481 = vmatpush2.msra.mxu0 0.0
    %1482 = vmatprep.subr.mxu0 0.0
    %1483 = vmatpush2.msra.mxu0 0.0
    %1484 = vmatprep.subr.mxu0 0.0
    %1485 = vmatpush2.msra.mxu0 0.0
    %1486 = vmatprep.subr.mxu0 0.0
    %1487 = vmatpush2.msra.mxu0 0.0
    %1488 = vmatprep.subr.mxu0 0.0
    %1489 = vmatpush2.msra.mxu0 0.0
    %1490 = vmatprep.subr.mxu0 0.0
    %1491 = vmatpush2.msra.mxu0 0.0
    %1492 = vmatprep.subr.mxu0 0.0
    %1493 = vmatpush2.msra.mxu0 0.0
    %1494 = vmatprep.subr.mxu0 0.0
    %1495 = vmatpush2.msra.mxu0 0.0
    %1496 = vmatprep.subr.mxu0 0.0
    %1497 = vmatpush2.msra.mxu0 0.0
    %1498 = vmatprep.subr.mxu0 0.0
    %1499 = vmatpush2.msra.mxu0 0.0
    %1500 = vmatprep.subr.mxu0 0.0
    %1501 = vmatpush2.msra.mxu0 0.0
    %1502 = vmatprep.mubr.f32.mxu0 0.0
    %1503 = vmatmul.mubr.f32.gmra.mxu0 %v1224
    %v1504 = vpop.f32.mrf.mxu0
    %v1505 = vadd.f32 0.0, %v1504
    %v1506 = vpop.f32.mrf.mxu0
    %1507 = vdwg.mxu0
    %v1508 = vadd.f32 %v1197, %v1365
    %v1509 = vadd.f32 %v1198, %v1434
    %v1510 = vadd.f32 %v1199, %v1436
    %v1511 = vadd.f32 %v1508, %v234
    %v1512 = vadd.f32 %v1509, %v238
    %v1513 = vadd.f32 %v1510, %v242
    %v1514 = vadd.f32 %v1201, %v1505
    %v1515 = vadd.f32 %v1514, %v251
    %1516 = vst [vmem:[#allocation15 + $0x18] sm:$0xff] %v1515
    %v1517 = vadd.f32 %v1511, %v1292
    %v1518 = vxor.u32 %v1517, 2147483648
    %v1519 = vmul.f32 %v1518, 1.442695
    %v1520 = vpow.pop %v1519
    %v1521 = vadd.f32 %v1520, 1.0
    %v1522 = vrcp.pop %v1521
    %v1523 = vmul.f32 1.0, %v1522
    %v1524 = vadd.f32 %v1512, %v1294
    %v1525 = vxor.u32 %v1524, 2147483648
    %v1526 = vmul.f32 %v1525, 1.442695
    %v1527 = vpow.pop %v1526
    %v1528 = vadd.f32 %v1527, 1.0
    %v1529 = vrcp.pop %v1528
    %v1530 = vmul.f32 1.0, %v1529
    %v1531 = vadd.f32 %v1363, %v227
    %v1532 = vmul.f32 %v1523, %v1531
    %v1533 = vadd.f32 %v1513, %v1532
    %v1534 = vtanh.pop %v1533
    %v1535 = vsub.f32 1.0, %v1530
    %v1536 = vmul.f32 %v1535, %v1534
    %v1537 = vmul.f32 %v1530, %v1224
    %v1538 = vadd.f32 %v1536, %v1537
    %1539 = vmatprep.subr.mxu0 %v216
    %1540 = vmatpush1.msra.mxu0 %v215
    %1541 = vmatprep.subr.mxu0 %v209
    %1542 = vmatpush1.msra.mxu0 %v208
    %1543 = vmatprep.subr.mxu0 %v202
    %1544 = vmatpush1.msra.mxu0 %v201
    %1545 = vmatprep.subr.mxu0 %v195
    %1546 = vmatpush1.msra.mxu0 %v194
    %1547 = vmatprep.subr.mxu0 %v188
    %1548 = vmatpush1.msra.mxu0 %v187
    %1549 = vmatprep.subr.mxu0 %v181
    %1550 = vmatpush1.msra.mxu0 %v180
    %1551 = vmatprep.subr.mxu0 %v174
    %1552 = vmatpush1.msra.mxu0 %v173
    %1553 = vmatprep.subr.mxu0 %v167
    %1554 = vmatpush1.msra.mxu0 %v166
    %1555 = vmatprep.subr.mxu0 %v160
    %1556 = vmatpush1.msra.mxu0 %v159
    %1557 = vmatprep.subr.mxu0 %v153
    %1558 = vmatpush1.msra.mxu0 %v152
    %1559 = vmatprep.subr.mxu0 %v146
    %1560 = vmatpush1.msra.mxu0 %v145
    %1561 = vmatprep.subr.mxu0 %v139
    %1562 = vmatpush1.msra.mxu0 %v138
    %1563 = vmatprep.subr.mxu0 %v132
    %1564 = vmatpush1.msra.mxu0 %v131
    %1565 = vmatprep.subr.mxu0 %v125
    %1566 = vmatpush1.msra.mxu0 %v124
    %1567 = vmatprep.subr.mxu0 %v118
    %1568 = vmatpush1.msra.mxu0 %v117
    %1569 = vmatprep.subr.mxu0 %v111
    %1570 = vmatpush1.msra.mxu0 %v110
    %1571 = vmatprep.subr.mxu0 0.0
    %1572 = vmatpush2.msra.mxu0 0.0
    %1573 = vmatprep.subr.mxu0 0.0
    %1574 = vmatpush2.msra.mxu0 0.0
    %1575 = vmatprep.subr.mxu0 0.0
    %1576 = vmatpush2.msra.mxu0 0.0
    %1577 = vmatprep.subr.mxu0 0.0
    %1578 = vmatpush2.msra.mxu0 0.0
    %1579 = vmatprep.subr.mxu0 0.0
    %1580 = vmatpush2.msra.mxu0 0.0
    %1581 = vmatprep.subr.mxu0 0.0
    %1582 = vmatpush2.msra.mxu0 0.0
    %1583 = vmatprep.subr.mxu0 0.0
    %1584 = vmatpush2.msra.mxu0 0.0
    %1585 = vmatprep.subr.mxu0 0.0
    %1586 = vmatpush2.msra.mxu0 0.0
    %1587 = vmatprep.subr.mxu0 0.0
    %1588 = vmatpush2.msra.mxu0 0.0
    %1589 = vmatprep.subr.mxu0 0.0
    %1590 = vmatpush2.msra.mxu0 0.0
    %1591 = vmatprep.subr.mxu0 0.0
    %1592 = vmatpush2.msra.mxu0 0.0
    %1593 = vmatprep.subr.mxu0 0.0
    %1594 = vmatpush2.msra.mxu0 0.0
    %1595 = vmatprep.subr.mxu0 0.0
    %1596 = vmatpush2.msra.mxu0 0.0
    %1597 = vmatprep.subr.mxu0 0.0
    %1598 = vmatpush2.msra.mxu0 0.0
    %1599 = vmatprep.subr.mxu0 0.0
    %1600 = vmatpush2.msra.mxu0 0.0
    %1601 = vmatprep.subr.mxu0 0.0
    %1602 = vmatpush2.msra.mxu0 0.0
    %1603 = vmatprep.mubr.f32.mxu0 0.0
    %1604 = vmatmul.mubr.f32.gmra.mxu0 %v1538
    %v1605 = vpop.f32.mrf.mxu0
    %v1606 = vadd.f32 0.0, %v1605
    %v1607 = vpop.f32.mrf.mxu0
    %v1608 = vadd.f32 0.0, %v1607
    %1609 = vdwg.mxu0
    %1610 = vmatprep.subr.mxu0 %v218
    %1611 = vmatpush1.msra.mxu0 %v217
    %1612 = vmatprep.subr.mxu0 %v211
    %1613 = vmatpush1.msra.mxu0 %v210
    %1614 = vmatprep.subr.mxu0 %v204
    %1615 = vmatpush1.msra.mxu0 %v203
    %1616 = vmatprep.subr.mxu0 %v197
    %1617 = vmatpush1.msra.mxu0 %v196
    %1618 = vmatprep.subr.mxu0 %v190
    %1619 = vmatpush1.msra.mxu0 %v189
    %1620 = vmatprep.subr.mxu0 %v183
    %1621 = vmatpush1.msra.mxu0 %v182
    %1622 = vmatprep.subr.mxu0 %v176
    %1623 = vmatpush1.msra.mxu0 %v175
    %1624 = vmatprep.subr.mxu0 %v169
    %1625 = vmatpush1.msra.mxu0 %v168
    %1626 = vmatprep.subr.mxu0 %v162
    %1627 = vmatpush1.msra.mxu0 %v161
    %1628 = vmatprep.subr.mxu0 %v155
    %1629 = vmatpush1.msra.mxu0 %v154
    %1630 = vmatprep.subr.mxu0 %v148
    %1631 = vmatpush1.msra.mxu0 %v147
    %1632 = vmatprep.subr.mxu0 %v141
    %1633 = vmatpush1.msra.mxu0 %v140
    %1634 = vmatprep.subr.mxu0 %v134
    %1635 = vmatpush1.msra.mxu0 %v133
    %1636 = vmatprep.subr.mxu0 %v127
    %1637 = vmatpush1.msra.mxu0 %v126
    %1638 = vmatprep.subr.mxu0 %v120
    %1639 = vmatpush1.msra.mxu0 %v119
    %1640 = vmatprep.subr.mxu0 %v113
    %1641 = vmatpush1.msra.mxu0 %v112
    %1642 = vmatprep.subr.mxu0 0.0
    %1643 = vmatpush2.msra.mxu0 0.0
    %1644 = vmatprep.subr.mxu0 0.0
    %1645 = vmatpush2.msra.mxu0 0.0
    %1646 = vmatprep.subr.mxu0 0.0
    %1647 = vmatpush2.msra.mxu0 0.0
    %1648 = vmatprep.subr.mxu0 0.0
    %1649 = vmatpush2.msra.mxu0 0.0
    %1650 = vmatprep.subr.mxu0 0.0
    %1651 = vmatpush2.msra.mxu0 0.0
    %1652 = vmatprep.subr.mxu0 0.0
    %1653 = vmatpush2.msra.mxu0 0.0
    %1654 = vmatprep.subr.mxu0 0.0
    %1655 = vmatpush2.msra.mxu0 0.0
    %1656 = vmatprep.subr.mxu0 0.0
    %1657 = vmatpush2.msra.mxu0 0.0
    %1658 = vmatprep.subr.mxu0 0.0
    %1659 = vmatpush2.msra.mxu0 0.0
    %1660 = vmatprep.subr.mxu0 0.0
    %1661 = vmatpush2.msra.mxu0 0.0
    %1662 = vmatprep.subr.mxu0 0.0
    %1663 = vmatpush2.msra.mxu0 0.0
    %1664 = vmatprep.subr.mxu0 0.0
    %1665 = vmatpush2.msra.mxu0 0.0
    %1666 = vmatprep.subr.mxu0 0.0
    %1667 = vmatpush2.msra.mxu0 0.0
    %1668 = vmatprep.subr.mxu0 0.0
    %1669 = vmatpush2.msra.mxu0 0.0
    %1670 = vmatprep.subr.mxu0 0.0
    %1671 = vmatpush2.msra.mxu0 0.0
    %1672 = vmatprep.subr.mxu0 0.0
    %1673 = vmatpush2.msra.mxu0 0.0
    %1674 = vmatprep.mubr.f32.mxu0 0.0
    %1675 = vmatmul.mubr.f32.gmra.mxu0 %v1538
    %v1676 = vpop.f32.mrf.mxu0
    %v1677 = vadd.f32 0.0, %v1676
    %v1678 = vpop.f32.mrf.mxu0
    %v1679 = vadd.f32 0.0, %v1678
    %1680 = vdwg.mxu0
    %1681 = vmatprep.subr.mxu0 %v220
    %1682 = vmatpush1.msra.mxu0 %v219
    %1683 = vmatprep.subr.mxu0 %v213
    %1684 = vmatpush1.msra.mxu0 %v212
    %1685 = vmatprep.subr.mxu0 %v206
    %1686 = vmatpush1.msra.mxu0 %v205
    %1687 = vmatprep.subr.mxu0 %v199
    %1688 = vmatpush1.msra.mxu0 %v198
    %1689 = vmatprep.subr.mxu0 %v192
    %1690 = vmatpush1.msra.mxu0 %v191
    %1691 = vmatprep.subr.mxu0 %v185
    %1692 = vmatpush1.msra.mxu0 %v184
    %1693 = vmatprep.subr.mxu0 %v178
    %1694 = vmatpush1.msra.mxu0 %v177
    %1695 = vmatprep.subr.mxu0 %v171
    %1696 = vmatpush1.msra.mxu0 %v170
    %1697 = vmatprep.subr.mxu0 %v164
    %1698 = vmatpush1.msra.mxu0 %v163
    %1699 = vmatprep.subr.mxu0 %v157
    %1700 = vmatpush1.msra.mxu0 %v156
    %1701 = vmatprep.subr.mxu0 %v150
    %1702 = vmatpush1.msra.mxu0 %v149
    %1703 = vmatprep.subr.mxu0 %v143
    %1704 = vmatpush1.msra.mxu0 %v142
    %1705 = vmatprep.subr.mxu0 %v136
    %1706 = vmatpush1.msra.mxu0 %v135
    %1707 = vmatprep.subr.mxu0 %v129
    %1708 = vmatpush1.msra.mxu0 %v128
    %1709 = vmatprep.subr.mxu0 %v122
    %1710 = vmatpush1.msra.mxu0 %v121
    %1711 = vmatprep.subr.mxu0 %v115
    %1712 = vmatpush1.msra.mxu0 %v114
    %1713 = vmatprep.subr.mxu0 0.0
    %1714 = vmatpush2.msra.mxu0 0.0
    %1715 = vmatprep.subr.mxu0 0.0
    %1716 = vmatpush2.msra.mxu0 0.0
    %1717 = vmatprep.subr.mxu0 0.0
    %1718 = vmatpush2.msra.mxu0 0.0
    %1719 = vmatprep.subr.mxu0 0.0
    %1720 = vmatpush2.msra.mxu0 0.0
    %1721 = vmatprep.subr.mxu0 0.0
    %1722 = vmatpush2.msra.mxu0 0.0
    %1723 = vmatprep.subr.mxu0 0.0
    %1724 = vmatpush2.msra.mxu0 0.0
    %1725 = vmatprep.subr.mxu0 0.0
    %1726 = vmatpush2.msra.mxu0 0.0
    %1727 = vmatprep.subr.mxu0 0.0
    %1728 = vmatpush2.msra.mxu0 0.0
    %1729 = vmatprep.subr.mxu0 0.0
    %1730 = vmatpush2.msra.mxu0 0.0
    %1731 = vmatprep.subr.mxu0 0.0
    %1732 = vmatpush2.msra.mxu0 0.0
    %1733 = vmatprep.subr.mxu0 0.0
    %1734 = vmatpush2.msra.mxu0 0.0
    %1735 = vmatprep.subr.mxu0 0.0
    %1736 = vmatpush2.msra.mxu0 0.0
    %1737 = vmatprep.subr.mxu0 0.0
    %1738 = vmatpush2.msra.mxu0 0.0
    %1739 = vmatprep.subr.mxu0 0.0
    %1740 = vmatpush2.msra.mxu0 0.0
    %1741 = vmatprep.subr.mxu0 0.0
    %1742 = vmatpush2.msra.mxu0 0.0
    %1743 = vmatprep.subr.mxu0 0.0
    %1744 = vmatpush2.msra.mxu0 0.0
    %1745 = vmatprep.mubr.f32.mxu0 0.0
    %1746 = vmatmul.mubr.f32.gmra.mxu0 %v1538
    %v1747 = vpop.f32.mrf.mxu0
    %v1748 = vadd.f32 0.0, %v1747
    %v1749 = vpop.f32.mrf.mxu0
    %v1750 = vadd.f32 0.0, %v1749
    %1751 = vdwg.mxu0
    %1752 = vmatprep.subr.mxu0 0.0
    %1753 = vmatpush1.msra.mxu0 %v221
    %1754 = vmatprep.subr.mxu0 0.0
    %1755 = vmatpush1.msra.mxu0 %v214
    %1756 = vmatprep.subr.mxu0 0.0
    %1757 = vmatpush1.msra.mxu0 %v207
    %1758 = vmatprep.subr.mxu0 0.0
    %1759 = vmatpush1.msra.mxu0 %v200
    %1760 = vmatprep.subr.mxu0 0.0
    %1761 = vmatpush1.msra.mxu0 %v193
    %1762 = vmatprep.subr.mxu0 0.0
    %1763 = vmatpush1.msra.mxu0 %v186
    %1764 = vmatprep.subr.mxu0 0.0
    %1765 = vmatpush1.msra.mxu0 %v179
    %1766 = vmatprep.subr.mxu0 0.0
    %1767 = vmatpush1.msra.mxu0 %v172
    %1768 = vmatprep.subr.mxu0 0.0
    %1769 = vmatpush1.msra.mxu0 %v165
    %1770 = vmatprep.subr.mxu0 0.0
    %1771 = vmatpush1.msra.mxu0 %v158
    %1772 = vmatprep.subr.mxu0 0.0
    %1773 = vmatpush1.msra.mxu0 %v151
    %1774 = vmatprep.subr.mxu0 0.0
    %1775 = vmatpush1.msra.mxu0 %v144
    %1776 = vmatprep.subr.mxu0 0.0
    %1777 = vmatpush1.msra.mxu0 %v137
    %1778 = vmatprep.subr.mxu0 0.0
    %1779 = vmatpush1.msra.mxu0 %v130
    %1780 = vmatprep.subr.mxu0 0.0
    %1781 = vmatpush1.msra.mxu0 %v123
    %1782 = vmatprep.subr.mxu0 0.0
    %1783 = vmatpush1.msra.mxu0 %v116
    %1784 = vmatprep.subr.mxu0 0.0
    %1785 = vmatpush2.msra.mxu0 0.0
    %1786 = vmatprep.subr.mxu0 0.0
    %1787 = vmatpush2.msra.mxu0 0.0
    %1788 = vmatprep.subr.mxu0 0.0
    %1789 = vmatpush2.msra.mxu0 0.0
    %1790 = vmatprep.subr.mxu0 0.0
    %1791 = vmatpush2.msra.mxu0 0.0
    %1792 = vmatprep.subr.mxu0 0.0
    %1793 = vmatpush2.msra.mxu0 0.0
    %1794 = vmatprep.subr.mxu0 0.0
    %1795 = vmatpush2.msra.mxu0 0.0
    %1796 = vmatprep.subr.mxu0 0.0
    %1797 = vmatpush2.msra.mxu0 0.0
    %1798 = vmatprep.subr.mxu0 0.0
    %1799 = vmatpush2.msra.mxu0 0.0
    %1800 = vmatprep.subr.mxu0 0.0
    %1801 = vmatpush2.msra.mxu0 0.0
    %1802 = vmatprep.subr.mxu0 0.0
    %1803 = vmatpush2.msra.mxu0 0.0
    %1804 = vmatprep.subr.mxu0 0.0
    %1805 = vmatpush2.msra.mxu0 0.0
    %1806 = vmatprep.subr.mxu0 0.0
    %1807 = vmatpush2.msra.mxu0 0.0
    %1808 = vmatprep.subr.mxu0 0.0
    %1809 = vmatpush2.msra.mxu0 0.0
    %1810 = vmatprep.subr.mxu0 0.0
    %1811 = vmatpush2.msra.mxu0 0.0
    %1812 = vmatprep.subr.mxu0 0.0
    %1813 = vmatpush2.msra.mxu0 0.0
    %1814 = vmatprep.subr.mxu0 0.0
    %1815 = vmatpush2.msra.mxu0 0.0
    %1816 = vmatprep.mubr.f32.mxu0 0.0
    %1817 = vmatmul.mubr.f32.gmra.mxu0 %v1538
    %v1818 = vpop.f32.mrf.mxu0
    %v1819 = vadd.f32 0.0, %v1818
    %v1820 = vpop.f32.mrf.mxu0
    %1821 = vdwg.mxu0
    %v1822 = vadd.f32 %v1511, %v1679
    %v1823 = vadd.f32 %v1512, %v1748
    %v1824 = vadd.f32 %v1513, %v1750
    %v1825 = vadd.f32 %v1822, %v234
    %v1826 = vadd.f32 %v1823, %v238
    %v1827 = vadd.f32 %v1824, %v242
    %v1828 = vadd.f32 %v1515, %v1819
    %v1829 = vadd.f32 %v1828, %v251
    %1830 = vst [vmem:[#allocation15 + $0x20] sm:$0xff] %v1829
    %v1831 = vadd.f32 %v1825, %v1606
    %v1832 = vxor.u32 %v1831, 2147483648
    %v1833 = vmul.f32 %v1832, 1.442695
    %v1834 = vpow.pop %v1833
    %v1835 = vadd.f32 %v1834, 1.0
    %v1836 = vrcp.pop %v1835
    %v1837 = vmul.f32 1.0, %v1836
    %v1838 = vadd.f32 %v1826, %v1608
    %v1839 = vxor.u32 %v1838, 2147483648
    %v1840 = vmul.f32 %v1839, 1.442695
    %v1841 = vpow.pop %v1840
    %v1842 = vadd.f32 %v1841, 1.0
    %v1843 = vrcp.pop %v1842
    %v1844 = vmul.f32 1.0, %v1843
    %v1845 = vadd.f32 %v1677, %v227
    %v1846 = vmul.f32 %v1837, %v1845
    %v1847 = vadd.f32 %v1827, %v1846
    %v1848 = vtanh.pop %v1847
    %v1849 = vsub.f32 1.0, %v1844
    %v1850 = vmul.f32 %v1849, %v1848
    %v1851 = vmul.f32 %v1844, %v1538
    %v1852 = vadd.f32 %v1850, %v1851
    %1853 = vmatprep.subr.mxu0 %v216
    %1854 = vmatpush1.msra.mxu0 %v215
    %1855 = vmatprep.subr.mxu0 %v209
    %1856 = vmatpush1.msra.mxu0 %v208
    %1857 = vmatprep.subr.mxu0 %v202
    %1858 = vmatpush1.msra.mxu0 %v201
    %1859 = vmatprep.subr.mxu0 %v195
    %1860 = vmatpush1.msra.mxu0 %v194
    %1861 = vmatprep.subr.mxu0 %v188
    %1862 = vmatpush1.msra.mxu0 %v187
    %1863 = vmatprep.subr.mxu0 %v181
    %1864 = vmatpush1.msra.mxu0 %v180
    %1865 = vmatprep.subr.mxu0 %v174
    %1866 = vmatpush1.msra.mxu0 %v173
    %1867 = vmatprep.subr.mxu0 %v167
    %1868 = vmatpush1.msra.mxu0 %v166
    %1869 = vmatprep.subr.mxu0 %v160
    %1870 = vmatpush1.msra.mxu0 %v159
    %1871 = vmatprep.subr.mxu0 %v153
    %1872 = vmatpush1.msra.mxu0 %v152
    %1873 = vmatprep.subr.mxu0 %v146
    %1874 = vmatpush1.msra.mxu0 %v145
    %1875 = vmatprep.subr.mxu0 %v139
    %1876 = vmatpush1.msra.mxu0 %v138
    %1877 = vmatprep.subr.mxu0 %v132
    %1878 = vmatpush1.msra.mxu0 %v131
    %1879 = vmatprep.subr.mxu0 %v125
    %1880 = vmatpush1.msra.mxu0 %v124
    %1881 = vmatprep.subr.mxu0 %v118
    %1882 = vmatpush1.msra.mxu0 %v117
    %1883 = vmatprep.subr.mxu0 %v111
    %1884 = vmatpush1.msra.mxu0 %v110
    %1885 = vmatprep.subr.mxu0 0.0
    %1886 = vmatpush2.msra.mxu0 0.0
    %1887 = vmatprep.subr.mxu0 0.0
    %1888 = vmatpush2.msra.mxu0 0.0
    %1889 = vmatprep.subr.mxu0 0.0
    %1890 = vmatpush2.msra.mxu0 0.0
    %1891 = vmatprep.subr.mxu0 0.0
    %1892 = vmatpush2.msra.mxu0 0.0
    %1893 = vmatprep.subr.mxu0 0.0
    %1894 = vmatpush2.msra.mxu0 0.0
    %1895 = vmatprep.subr.mxu0 0.0
    %1896 = vmatpush2.msra.mxu0 0.0
    %1897 = vmatprep.subr.mxu0 0.0
    %1898 = vmatpush2.msra.mxu0 0.0
    %1899 = vmatprep.subr.mxu0 0.0
    %1900 = vmatpush2.msra.mxu0 0.0
    %1901 = vmatprep.subr.mxu0 0.0
    %1902 = vmatpush2.msra.mxu0 0.0
    %1903 = vmatprep.subr.mxu0 0.0
    %1904 = vmatpush2.msra.mxu0 0.0
    %1905 = vmatprep.subr.mxu0 0.0
    %1906 = vmatpush2.msra.mxu0 0.0
    %1907 = vmatprep.subr.mxu0 0.0
    %1908 = vmatpush2.msra.mxu0 0.0
    %1909 = vmatprep.subr.mxu0 0.0
    %1910 = vmatpush2.msra.mxu0 0.0
    %1911 = vmatprep.subr.mxu0 0.0
    %1912 = vmatpush2.msra.mxu0 0.0
    %1913 = vmatprep.subr.mxu0 0.0
    %1914 = vmatpush2.msra.mxu0 0.0
    %1915 = vmatprep.subr.mxu0 0.0
    %1916 = vmatpush2.msra.mxu0 0.0
    %1917 = vmatprep.mubr.f32.mxu0 0.0
    %1918 = vmatmul.mubr.f32.gmra.mxu0 %v1852
    %v1919 = vpop.f32.mrf.mxu0
    %v1920 = vadd.f32 0.0, %v1919
    %v1921 = vpop.f32.mrf.mxu0
    %v1922 = vadd.f32 0.0, %v1921
    %1923 = vdwg.mxu0
    %1924 = vmatprep.subr.mxu0 %v218
    %1925 = vmatpush1.msra.mxu0 %v217
    %1926 = vmatprep.subr.mxu0 %v211
    %1927 = vmatpush1.msra.mxu0 %v210
    %1928 = vmatprep.subr.mxu0 %v204
    %1929 = vmatpush1.msra.mxu0 %v203
    %1930 = vmatprep.subr.mxu0 %v197
    %1931 = vmatpush1.msra.mxu0 %v196
    %1932 = vmatprep.subr.mxu0 %v190
    %1933 = vmatpush1.msra.mxu0 %v189
    %1934 = vmatprep.subr.mxu0 %v183
    %1935 = vmatpush1.msra.mxu0 %v182
    %1936 = vmatprep.subr.mxu0 %v176
    %1937 = vmatpush1.msra.mxu0 %v175
    %1938 = vmatprep.subr.mxu0 %v169
    %1939 = vmatpush1.msra.mxu0 %v168
    %1940 = vmatprep.subr.mxu0 %v162
    %1941 = vmatpush1.msra.mxu0 %v161
    %1942 = vmatprep.subr.mxu0 %v155
    %1943 = vmatpush1.msra.mxu0 %v154
    %1944 = vmatprep.subr.mxu0 %v148
    %1945 = vmatpush1.msra.mxu0 %v147
    %1946 = vmatprep.subr.mxu0 %v141
    %1947 = vmatpush1.msra.mxu0 %v140
    %1948 = vmatprep.subr.mxu0 %v134
    %1949 = vmatpush1.msra.mxu0 %v133
    %1950 = vmatprep.subr.mxu0 %v127
    %1951 = vmatpush1.msra.mxu0 %v126
    %1952 = vmatprep.subr.mxu0 %v120
    %1953 = vmatpush1.msra.mxu0 %v119
    %1954 = vmatprep.subr.mxu0 %v113
    %1955 = vmatpush1.msra.mxu0 %v112
    %1956 = vmatprep.subr.mxu0 0.0
    %1957 = vmatpush2.msra.mxu0 0.0
    %1958 = vmatprep.subr.mxu0 0.0
    %1959 = vmatpush2.msra.mxu0 0.0
    %1960 = vmatprep.subr.mxu0 0.0
    %1961 = vmatpush2.msra.mxu0 0.0
    %1962 = vmatprep.subr.mxu0 0.0
    %1963 = vmatpush2.msra.mxu0 0.0
    %1964 = vmatprep.subr.mxu0 0.0
    %1965 = vmatpush2.msra.mxu0 0.0
    %1966 = vmatprep.subr.mxu0 0.0
    %1967 = vmatpush2.msra.mxu0 0.0
    %1968 = vmatprep.subr.mxu0 0.0
    %1969 = vmatpush2.msra.mxu0 0.0
    %1970 = vmatprep.subr.mxu0 0.0
    %1971 = vmatpush2.msra.mxu0 0.0
    %1972 = vmatprep.subr.mxu0 0.0
    %1973 = vmatpush2.msra.mxu0 0.0
    %1974 = vmatprep.subr.mxu0 0.0
    %1975 = vmatpush2.msra.mxu0 0.0
    %1976 = vmatprep.subr.mxu0 0.0
    %1977 = vmatpush2.msra.mxu0 0.0
    %1978 = vmatprep.subr.mxu0 0.0
    %1979 = vmatpush2.msra.mxu0 0.0
    %1980 = vmatprep.subr.mxu0 0.0
    %1981 = vmatpush2.msra.mxu0 0.0
    %1982 = vmatprep.subr.mxu0 0.0
    %1983 = vmatpush2.msra.mxu0 0.0
    %1984 = vmatprep.subr.mxu0 0.0
    %1985 = vmatpush2.msra.mxu0 0.0
    %1986 = vmatprep.subr.mxu0 0.0
    %1987 = vmatpush2.msra.mxu0 0.0
    %1988 = vmatprep.mubr.f32.mxu0 0.0
    %1989 = vmatmul.mubr.f32.gmra.mxu0 %v1852
    %v1990 = vpop.f32.mrf.mxu0
    %v1991 = vadd.f32 0.0, %v1990
    %v1992 = vpop.f32.mrf.mxu0
    %v1993 = vadd.f32 0.0, %v1992
    %1994 = vdwg.mxu0
    %1995 = vmatprep.subr.mxu0 %v220
    %1996 = vmatpush1.msra.mxu0 %v219
    %1997 = vmatprep.subr.mxu0 %v213
    %1998 = vmatpush1.msra.mxu0 %v212
    %1999 = vmatprep.subr.mxu0 %v206
    %2000 = vmatpush1.msra.mxu0 %v205
    %2001 = vmatprep.subr.mxu0 %v199
    %2002 = vmatpush1.msra.mxu0 %v198
    %2003 = vmatprep.subr.mxu0 %v192
    %2004 = vmatpush1.msra.mxu0 %v191
    %2005 = vmatprep.subr.mxu0 %v185
    %2006 = vmatpush1.msra.mxu0 %v184
    %2007 = vmatprep.subr.mxu0 %v178
    %2008 = vmatpush1.msra.mxu0 %v177
    %2009 = vmatprep.subr.mxu0 %v171
    %2010 = vmatpush1.msra.mxu0 %v170
    %2011 = vmatprep.subr.mxu0 %v164
    %2012 = vmatpush1.msra.mxu0 %v163
    %2013 = vmatprep.subr.mxu0 %v157
    %2014 = vmatpush1.msra.mxu0 %v156
    %2015 = vmatprep.subr.mxu0 %v150
    %2016 = vmatpush1.msra.mxu0 %v149
    %2017 = vmatprep.subr.mxu0 %v143
    %2018 = vmatpush1.msra.mxu0 %v142
    %2019 = vmatprep.subr.mxu0 %v136
    %2020 = vmatpush1.msra.mxu0 %v135
    %2021 = vmatprep.subr.mxu0 %v129
    %2022 = vmatpush1.msra.mxu0 %v128
    %2023 = vmatprep.subr.mxu0 %v122
    %2024 = vmatpush1.msra.mxu0 %v121
    %2025 = vmatprep.subr.mxu0 %v115
    %2026 = vmatpush1.msra.mxu0 %v114
    %2027 = vmatprep.subr.mxu0 0.0
    %2028 = vmatpush2.msra.mxu0 0.0
    %2029 = vmatprep.subr.mxu0 0.0
    %2030 = vmatpush2.msra.mxu0 0.0
    %2031 = vmatprep.subr.mxu0 0.0
    %2032 = vmatpush2.msra.mxu0 0.0
    %2033 = vmatprep.subr.mxu0 0.0
    %2034 = vmatpush2.msra.mxu0 0.0
    %2035 = vmatprep.subr.mxu0 0.0
    %2036 = vmatpush2.msra.mxu0 0.0
    %2037 = vmatprep.subr.mxu0 0.0
    %2038 = vmatpush2.msra.mxu0 0.0
    %2039 = vmatprep.subr.mxu0 0.0
    %2040 = vmatpush2.msra.mxu0 0.0
    %2041 = vmatprep.subr.mxu0 0.0
    %2042 = vmatpush2.msra.mxu0 0.0
    %2043 = vmatprep.subr.mxu0 0.0
    %2044 = vmatpush2.msra.mxu0 0.0
    %2045 = vmatprep.subr.mxu0 0.0
    %2046 = vmatpush2.msra.mxu0 0.0
    %2047 = vmatprep.subr.mxu0 0.0
    %2048 = vmatpush2.msra.mxu0 0.0
    %2049 = vmatprep.subr.mxu0 0.0
    %2050 = vmatpush2.msra.mxu0 0.0
    %2051 = vmatprep.subr.mxu0 0.0
    %2052 = vmatpush2.msra.mxu0 0.0
    %2053 = vmatprep.subr.mxu0 0.0
    %2054 = vmatpush2.msra.mxu0 0.0
    %2055 = vmatprep.subr.mxu0 0.0
    %2056 = vmatpush2.msra.mxu0 0.0
    %2057 = vmatprep.subr.mxu0 0.0
    %2058 = vmatpush2.msra.mxu0 0.0
    %2059 = vmatprep.mubr.f32.mxu0 0.0
    %2060 = vmatmul.mubr.f32.gmra.mxu0 %v1852
    %v2061 = vpop.f32.mrf.mxu0
    %v2062 = vadd.f32 0.0, %v2061
    %v2063 = vpop.f32.mrf.mxu0
    %v2064 = vadd.f32 0.0, %v2063
    %2065 = vdwg.mxu0
    %2066 = vmatprep.subr.mxu0 0.0
    %2067 = vmatpush1.msra.mxu0 %v221
    %2068 = vmatprep.subr.mxu0 0.0
    %2069 = vmatpush1.msra.mxu0 %v214
    %2070 = vmatprep.subr.mxu0 0.0
    %2071 = vmatpush1.msra.mxu0 %v207
    %2072 = vmatprep.subr.mxu0 0.0
    %2073 = vmatpush1.msra.mxu0 %v200
    %2074 = vmatprep.subr.mxu0 0.0
    %2075 = vmatpush1.msra.mxu0 %v193
    %2076 = vmatprep.subr.mxu0 0.0
    %2077 = vmatpush1.msra.mxu0 %v186
    %2078 = vmatprep.subr.mxu0 0.0
    %2079 = vmatpush1.msra.mxu0 %v179
    %2080 = vmatprep.subr.mxu0 0.0
    %2081 = vmatpush1.msra.mxu0 %v172
    %2082 = vmatprep.subr.mxu0 0.0
    %2083 = vmatpush1.msra.mxu0 %v165
    %2084 = vmatprep.subr.mxu0 0.0
    %2085 = vmatpush1.msra.mxu0 %v158
    %2086 = vmatprep.subr.mxu0 0.0
    %2087 = vmatpush1.msra.mxu0 %v151
    %2088 = vmatprep.subr.mxu0 0.0
    %2089 = vmatpush1.msra.mxu0 %v144
    %2090 = vmatprep.subr.mxu0 0.0
    %2091 = vmatpush1.msra.mxu0 %v137
    %2092 = vmatprep.subr.mxu0 0.0
    %2093 = vmatpush1.msra.mxu0 %v130
    %2094 = vmatprep.subr.mxu0 0.0
    %2095 = vmatpush1.msra.mxu0 %v123
    %2096 = vmatprep.subr.mxu0 0.0
    %2097 = vmatpush1.msra.mxu0 %v116
    %2098 = vmatprep.subr.mxu0 0.0
    %2099 = vmatpush2.msra.mxu0 0.0
    %2100 = vmatprep.subr.mxu0 0.0
    %2101 = vmatpush2.msra.mxu0 0.0
    %2102 = vmatprep.subr.mxu0 0.0
    %2103 = vmatpush2.msra.mxu0 0.0
    %2104 = vmatprep.subr.mxu0 0.0
    %2105 = vmatpush2.msra.mxu0 0.0
    %2106 = vmatprep.subr.mxu0 0.0
    %2107 = vmatpush2.msra.mxu0 0.0
    %2108 = vmatprep.subr.mxu0 0.0
    %2109 = vmatpush2.msra.mxu0 0.0
    %2110 = vmatprep.subr.mxu0 0.0
    %2111 = vmatpush2.msra.mxu0 0.0
    %2112 = vmatprep.subr.mxu0 0.0
    %2113 = vmatpush2.msra.mxu0 0.0
    %2114 = vmatprep.subr.mxu0 0.0
    %2115 = vmatpush2.msra.mxu0 0.0
    %2116 = vmatprep.subr.mxu0 0.0
    %2117 = vmatpush2.msra.mxu0 0.0
    %2118 = vmatprep.subr.mxu0 0.0
    %2119 = vmatpush2.msra.mxu0 0.0
    %2120 = vmatprep.subr.mxu0 0.0
    %2121 = vmatpush2.msra.mxu0 0.0
    %2122 = vmatprep.subr.mxu0 0.0
    %2123 = vmatpush2.msra.mxu0 0.0
    %2124 = vmatprep.subr.mxu0 0.0
    %2125 = vmatpush2.msra.mxu0 0.0
    %2126 = vmatprep.subr.mxu0 0.0
    %2127 = vmatpush2.msra.mxu0 0.0
    %2128 = vmatprep.subr.mxu0 0.0
    %2129 = vmatpush2.msra.mxu0 0.0
    %2130 = vmatprep.mubr.f32.mxu0 0.0
    %2131 = vmatmul.mubr.f32.gmra.mxu0 %v1852
    %v2132 = vpop.f32.mrf.mxu0
    %v2133 = vadd.f32 0.0, %v2132
    %v2134 = vpop.f32.mrf.mxu0
    %2135 = vdwg.mxu0
    %v2136 = vadd.f32 %v1825, %v1993
    %v2137 = vadd.f32 %v1826, %v2062
    %v2138 = vadd.f32 %v1827, %v2064
    %v2139 = vadd.f32 %v2136, %v234
    %v2140 = vadd.f32 %v2137, %v238
    %v2141 = vadd.f32 %v2138, %v242
    %v2142 = vadd.f32 %v1829, %v2133
    %v2143 = vadd.f32 %v2142, %v251
    %2144 = vst [vmem:[#allocation15 + $0x28] sm:$0xff] %v2143
    %v2145 = vadd.f32 %v2139, %v1920
    %v2146 = vxor.u32 %v2145, 2147483648
    %v2147 = vmul.f32 %v2146, 1.442695
    %v2148 = vpow.pop %v2147
    %v2149 = vadd.f32 %v2148, 1.0
    %v2150 = vrcp.pop %v2149
    %v2151 = vmul.f32 1.0, %v2150
    %v2152 = vadd.f32 %v2140, %v1922
    %v2153 = vxor.u32 %v2152, 2147483648
    %v2154 = vmul.f32 %v2153, 1.442695
    %v2155 = vpow.pop %v2154
    %v2156 = vadd.f32 %v2155, 1.0
    %v2157 = vrcp.pop %v2156
    %v2158 = vmul.f32 1.0, %v2157
    %v2159 = vadd.f32 %v1991, %v227
    %v2160 = vmul.f32 %v2151, %v2159
    %v2161 = vadd.f32 %v2141, %v2160
    %v2162 = vtanh.pop %v2161
    %v2163 = vsub.f32 1.0, %v2158
    %v2164 = vmul.f32 %v2163, %v2162
    %v2165 = vmul.f32 %v2158, %v1852
    %v2166 = vadd.f32 %v2164, %v2165
    %2167 = vmatprep.subr.mxu0 %v216
    %2168 = vmatpush1.msra.mxu0 %v215
    %2169 = vmatprep.subr.mxu0 %v209
    %2170 = vmatpush1.msra.mxu0 %v208
    %2171 = vmatprep.subr.mxu0 %v202
    %2172 = vmatpush1.msra.mxu0 %v201
    %2173 = vmatprep.subr.mxu0 %v195
    %2174 = vmatpush1.msra.mxu0 %v194
    %2175 = vmatprep.subr.mxu0 %v188
    %2176 = vmatpush1.msra.mxu0 %v187
    %2177 = vmatprep.subr.mxu0 %v181
    %2178 = vmatpush1.msra.mxu0 %v180
    %2179 = vmatprep.subr.mxu0 %v174
    %2180 = vmatpush1.msra.mxu0 %v173
    %2181 = vmatprep.subr.mxu0 %v167
    %2182 = vmatpush1.msra.mxu0 %v166
    %2183 = vmatprep.subr.mxu0 %v160
    %2184 = vmatpush1.msra.mxu0 %v159
    %2185 = vmatprep.subr.mxu0 %v153
    %2186 = vmatpush1.msra.mxu0 %v152
    %2187 = vmatprep.subr.mxu0 %v146
    %2188 = vmatpush1.msra.mxu0 %v145
    %2189 = vmatprep.subr.mxu0 %v139
    %2190 = vmatpush1.msra.mxu0 %v138
    %2191 = vmatprep.subr.mxu0 %v132
    %2192 = vmatpush1.msra.mxu0 %v131
    %2193 = vmatprep.subr.mxu0 %v125
    %2194 = vmatpush1.msra.mxu0 %v124
    %2195 = vmatprep.subr.mxu0 %v118
    %2196 = vmatpush1.msra.mxu0 %v117
    %2197 = vmatprep.subr.mxu0 %v111
    %2198 = vmatpush1.msra.mxu0 %v110
    %2199 = vmatprep.subr.mxu0 0.0
    %2200 = vmatpush2.msra.mxu0 0.0
    %2201 = vmatprep.subr.mxu0 0.0
    %2202 = vmatpush2.msra.mxu0 0.0
    %2203 = vmatprep.subr.mxu0 0.0
    %2204 = vmatpush2.msra.mxu0 0.0
    %2205 = vmatprep.subr.mxu0 0.0
    %2206 = vmatpush2.msra.mxu0 0.0
    %2207 = vmatprep.subr.mxu0 0.0
    %2208 = vmatpush2.msra.mxu0 0.0
    %2209 = vmatprep.subr.mxu0 0.0
    %2210 = vmatpush2.msra.mxu0 0.0
    %2211 = vmatprep.subr.mxu0 0.0
    %2212 = vmatpush2.msra.mxu0 0.0
    %2213 = vmatprep.subr.mxu0 0.0
    %2214 = vmatpush2.msra.mxu0 0.0
    %2215 = vmatprep.subr.mxu0 0.0
    %2216 = vmatpush2.msra.mxu0 0.0
    %2217 = vmatprep.subr.mxu0 0.0
    %2218 = vmatpush2.msra.mxu0 0.0
    %2219 = vmatprep.subr.mxu0 0.0
    %2220 = vmatpush2.msra.mxu0 0.0
    %2221 = vmatprep.subr.mxu0 0.0
    %2222 = vmatpush2.msra.mxu0 0.0
    %2223 = vmatprep.subr.mxu0 0.0
    %2224 = vmatpush2.msra.mxu0 0.0
    %2225 = vmatprep.subr.mxu0 0.0
    %2226 = vmatpush2.msra.mxu0 0.0
    %2227 = vmatprep.subr.mxu0 0.0
    %2228 = vmatpush2.msra.mxu0 0.0
    %2229 = vmatprep.subr.mxu0 0.0
    %2230 = vmatpush2.msra.mxu0 0.0
    %2231 = vmatprep.mubr.f32.mxu0 0.0
    %2232 = vmatmul.mubr.f32.gmra.mxu0 %v2166
    %v2233 = vpop.f32.mrf.mxu0
    %v2234 = vadd.f32 0.0, %v2233
    %v2235 = vpop.f32.mrf.mxu0
    %v2236 = vadd.f32 0.0, %v2235
    %2237 = vdwg.mxu0
    %2238 = vmatprep.subr.mxu0 %v218
    %2239 = vmatpush1.msra.mxu0 %v217
    %2240 = vmatprep.subr.mxu0 %v211
    %2241 = vmatpush1.msra.mxu0 %v210
    %2242 = vmatprep.subr.mxu0 %v204
    %2243 = vmatpush1.msra.mxu0 %v203
    %2244 = vmatprep.subr.mxu0 %v197
    %2245 = vmatpush1.msra.mxu0 %v196
    %2246 = vmatprep.subr.mxu0 %v190
    %2247 = vmatpush1.msra.mxu0 %v189
    %2248 = vmatprep.subr.mxu0 %v183
    %2249 = vmatpush1.msra.mxu0 %v182
    %2250 = vmatprep.subr.mxu0 %v176
    %2251 = vmatpush1.msra.mxu0 %v175
    %2252 = vmatprep.subr.mxu0 %v169
    %2253 = vmatpush1.msra.mxu0 %v168
    %2254 = vmatprep.subr.mxu0 %v162
    %2255 = vmatpush1.msra.mxu0 %v161
    %2256 = vmatprep.subr.mxu0 %v155
    %2257 = vmatpush1.msra.mxu0 %v154
    %2258 = vmatprep.subr.mxu0 %v148
    %2259 = vmatpush1.msra.mxu0 %v147
    %2260 = vmatprep.subr.mxu0 %v141
    %2261 = vmatpush1.msra.mxu0 %v140
    %2262 = vmatprep.subr.mxu0 %v134
    %2263 = vmatpush1.msra.mxu0 %v133
    %2264 = vmatprep.subr.mxu0 %v127
    %2265 = vmatpush1.msra.mxu0 %v126
    %2266 = vmatprep.subr.mxu0 %v120
    %2267 = vmatpush1.msra.mxu0 %v119
    %2268 = vmatprep.subr.mxu0 %v113
    %2269 = vmatpush1.msra.mxu0 %v112
    %2270 = vmatprep.subr.mxu0 0.0
    %2271 = vmatpush2.msra.mxu0 0.0
    %2272 = vmatprep.subr.mxu0 0.0
    %2273 = vmatpush2.msra.mxu0 0.0
    %2274 = vmatprep.subr.mxu0 0.0
    %2275 = vmatpush2.msra.mxu0 0.0
    %2276 = vmatprep.subr.mxu0 0.0
    %2277 = vmatpush2.msra.mxu0 0.0
    %2278 = vmatprep.subr.mxu0 0.0
    %2279 = vmatpush2.msra.mxu0 0.0
    %2280 = vmatprep.subr.mxu0 0.0
    %2281 = vmatpush2.msra.mxu0 0.0
    %2282 = vmatprep.subr.mxu0 0.0
    %2283 = vmatpush2.msra.mxu0 0.0
    %2284 = vmatprep.subr.mxu0 0.0
    %2285 = vmatpush2.msra.mxu0 0.0
    %2286 = vmatprep.subr.mxu0 0.0
    %2287 = vmatpush2.msra.mxu0 0.0
    %2288 = vmatprep.subr.mxu0 0.0
    %2289 = vmatpush2.msra.mxu0 0.0
    %2290 = vmatprep.subr.mxu0 0.0
    %2291 = vmatpush2.msra.mxu0 0.0
    %2292 = vmatprep.subr.mxu0 0.0
    %2293 = vmatpush2.msra.mxu0 0.0
    %2294 = vmatprep.subr.mxu0 0.0
    %2295 = vmatpush2.msra.mxu0 0.0
    %2296 = vmatprep.subr.mxu0 0.0
    %2297 = vmatpush2.msra.mxu0 0.0
    %2298 = vmatprep.subr.mxu0 0.0
    %2299 = vmatpush2.msra.mxu0 0.0
    %2300 = vmatprep.subr.mxu0 0.0
    %2301 = vmatpush2.msra.mxu0 0.0
    %2302 = vmatprep.mubr.f32.mxu0 0.0
    %2303 = vmatmul.mubr.f32.gmra.mxu0 %v2166
    %v2304 = vpop.f32.mrf.mxu0
    %v2305 = vadd.f32 0.0, %v2304
    %v2306 = vpop.f32.mrf.mxu0
    %v2307 = vadd.f32 0.0, %v2306
    %2308 = vdwg.mxu0
    %2309 = vmatprep.subr.mxu0 %v220
    %2310 = vmatpush1.msra.mxu0 %v219
    %2311 = vmatprep.subr.mxu0 %v213
    %2312 = vmatpush1.msra.mxu0 %v212
    %2313 = vmatprep.subr.mxu0 %v206
    %2314 = vmatpush1.msra.mxu0 %v205
    %2315 = vmatprep.subr.mxu0 %v199
    %2316 = vmatpush1.msra.mxu0 %v198
    %2317 = vmatprep.subr.mxu0 %v192
    %2318 = vmatpush1.msra.mxu0 %v191
    %2319 = vmatprep.subr.mxu0 %v185
    %2320 = vmatpush1.msra.mxu0 %v184
    %2321 = vmatprep.subr.mxu0 %v178
    %2322 = vmatpush1.msra.mxu0 %v177
    %2323 = vmatprep.subr.mxu0 %v171
    %2324 = vmatpush1.msra.mxu0 %v170
    %2325 = vmatprep.subr.mxu0 %v164
    %2326 = vmatpush1.msra.mxu0 %v163
    %2327 = vmatprep.subr.mxu0 %v157
    %2328 = vmatpush1.msra.mxu0 %v156
    %2329 = vmatprep.subr.mxu0 %v150
    %2330 = vmatpush1.msra.mxu0 %v149
    %2331 = vmatprep.subr.mxu0 %v143
    %2332 = vmatpush1.msra.mxu0 %v142
    %2333 = vmatprep.subr.mxu0 %v136
    %2334 = vmatpush1.msra.mxu0 %v135
    %2335 = vmatprep.subr.mxu0 %v129
    %2336 = vmatpush1.msra.mxu0 %v128
    %2337 = vmatprep.subr.mxu0 %v122
    %2338 = vmatpush1.msra.mxu0 %v121
    %2339 = vmatprep.subr.mxu0 %v115
    %2340 = vmatpush1.msra.mxu0 %v114
    %2341 = vmatprep.subr.mxu0 0.0
    %2342 = vmatpush2.msra.mxu0 0.0
    %2343 = vmatprep.subr.mxu0 0.0
    %2344 = vmatpush2.msra.mxu0 0.0
    %2345 = vmatprep.subr.mxu0 0.0
    %2346 = vmatpush2.msra.mxu0 0.0
    %2347 = vmatprep.subr.mxu0 0.0
    %2348 = vmatpush2.msra.mxu0 0.0
    %2349 = vmatprep.subr.mxu0 0.0
    %2350 = vmatpush2.msra.mxu0 0.0
    %2351 = vmatprep.subr.mxu0 0.0
    %2352 = vmatpush2.msra.mxu0 0.0
    %2353 = vmatprep.subr.mxu0 0.0
    %2354 = vmatpush2.msra.mxu0 0.0
    %2355 = vmatprep.subr.mxu0 0.0
    %2356 = vmatpush2.msra.mxu0 0.0
    %2357 = vmatprep.subr.mxu0 0.0
    %2358 = vmatpush2.msra.mxu0 0.0
    %2359 = vmatprep.subr.mxu0 0.0
    %2360 = vmatpush2.msra.mxu0 0.0
    %2361 = vmatprep.subr.mxu0 0.0
    %2362 = vmatpush2.msra.mxu0 0.0
    %2363 = vmatprep.subr.mxu0 0.0
    %2364 = vmatpush2.msra.mxu0 0.0
    %2365 = vmatprep.subr.mxu0 0.0
    %2366 = vmatpush2.msra.mxu0 0.0
    %2367 = vmatprep.subr.mxu0 0.0
    %2368 = vmatpush2.msra.mxu0 0.0
    %2369 = vmatprep.subr.mxu0 0.0
    %2370 = vmatpush2.msra.mxu0 0.0
    %2371 = vmatprep.subr.mxu0 0.0
    %2372 = vmatpush2.msra.mxu0 0.0
    %2373 = vmatprep.mubr.f32.mxu0 0.0
    %2374 = vmatmul.mubr.f32.gmra.mxu0 %v2166
    %v2375 = vpop.f32.mrf.mxu0
    %v2376 = vadd.f32 0.0, %v2375
    %v2377 = vpop.f32.mrf.mxu0
    %v2378 = vadd.f32 0.0, %v2377
    %2379 = vdwg.mxu0
    %2380 = vmatprep.subr.mxu0 0.0
    %2381 = vmatpush1.msra.mxu0 %v221
    %2382 = vmatprep.subr.mxu0 0.0
    %2383 = vmatpush1.msra.mxu0 %v214
    %2384 = vmatprep.subr.mxu0 0.0
    %2385 = vmatpush1.msra.mxu0 %v207
    %2386 = vmatprep.subr.mxu0 0.0
    %2387 = vmatpush1.msra.mxu0 %v200
    %2388 = vmatprep.subr.mxu0 0.0
    %2389 = vmatpush1.msra.mxu0 %v193
    %2390 = vmatprep.subr.mxu0 0.0
    %2391 = vmatpush1.msra.mxu0 %v186
    %2392 = vmatprep.subr.mxu0 0.0
    %2393 = vmatpush1.msra.mxu0 %v179
    %2394 = vmatprep.subr.mxu0 0.0
    %2395 = vmatpush1.msra.mxu0 %v172
    %2396 = vmatprep.subr.mxu0 0.0
    %2397 = vmatpush1.msra.mxu0 %v165
    %2398 = vmatprep.subr.mxu0 0.0
    %2399 = vmatpush1.msra.mxu0 %v158
    %2400 = vmatprep.subr.mxu0 0.0
    %2401 = vmatpush1.msra.mxu0 %v151
    %2402 = vmatprep.subr.mxu0 0.0
    %2403 = vmatpush1.msra.mxu0 %v144
    %2404 = vmatprep.subr.mxu0 0.0
    %2405 = vmatpush1.msra.mxu0 %v137
    %2406 = vmatprep.subr.mxu0 0.0
    %2407 = vmatpush1.msra.mxu0 %v130
    %2408 = vmatprep.subr.mxu0 0.0
    %2409 = vmatpush1.msra.mxu0 %v123
    %2410 = vmatprep.subr.mxu0 0.0
    %2411 = vmatpush1.msra.mxu0 %v116
    %2412 = vmatprep.subr.mxu0 0.0
    %2413 = vmatpush2.msra.mxu0 0.0
    %2414 = vmatprep.subr.mxu0 0.0
    %2415 = vmatpush2.msra.mxu0 0.0
    %2416 = vmatprep.subr.mxu0 0.0
    %2417 = vmatpush2.msra.mxu0 0.0
    %2418 = vmatprep.subr.mxu0 0.0
    %2419 = vmatpush2.msra.mxu0 0.0
    %2420 = vmatprep.subr.mxu0 0.0
    %2421 = vmatpush2.msra.mxu0 0.0
    %2422 = vmatprep.subr.mxu0 0.0
    %2423 = vmatpush2.msra.mxu0 0.0
    %2424 = vmatprep.subr.mxu0 0.0
    %2425 = vmatpush2.msra.mxu0 0.0
    %2426 = vmatprep.subr.mxu0 0.0
    %2427 = vmatpush2.msra.mxu0 0.0
    %2428 = vmatprep.subr.mxu0 0.0
    %2429 = vmatpush2.msra.mxu0 0.0
    %2430 = vmatprep.subr.mxu0 0.0
    %2431 = vmatpush2.msra.mxu0 0.0
    %2432 = vmatprep.subr.mxu0 0.0
    %2433 = vmatpush2.msra.mxu0 0.0
    %2434 = vmatprep.subr.mxu0 0.0
    %2435 = vmatpush2.msra.mxu0 0.0
    %2436 = vmatprep.subr.mxu0 0.0
    %2437 = vmatpush2.msra.mxu0 0.0
    %2438 = vmatprep.subr.mxu0 0.0
    %2439 = vmatpush2.msra.mxu0 0.0
    %2440 = vmatprep.subr.mxu0 0.0
    %2441 = vmatpush2.msra.mxu0 0.0
    %2442 = vmatprep.subr.mxu0 0.0
    %2443 = vmatpush2.msra.mxu0 0.0
    %2444 = vmatprep.mubr.f32.mxu0 0.0
    %2445 = vmatmul.mubr.f32.gmra.mxu0 %v2166
    %v2446 = vpop.f32.mrf.mxu0
    %v2447 = vadd.f32 0.0, %v2446
    %v2448 = vpop.f32.mrf.mxu0
    %2449 = vdwg.mxu0
    %v2450 = vadd.f32 %v2139, %v2307
    %v2451 = vadd.f32 %v2140, %v2376
    %v2452 = vadd.f32 %v2141, %v2378
    %v2453 = vadd.f32 %v2450, %v234
    %v2454 = vadd.f32 %v2451, %v238
    %v2455 = vadd.f32 %v2452, %v242
    %v2456 = vadd.f32 %v2143, %v2447
    %v2457 = vadd.f32 %v2456, %v251
    %2458 = vst [vmem:[#allocation15 + $0x30] sm:$0xff] %v2457
    %v2459 = vadd.f32 %v2453, %v2234
    %v2460 = vxor.u32 %v2459, 2147483648
    %v2461 = vmul.f32 %v2460, 1.442695
    %v2462 = vpow.pop %v2461
    %v2463 = vadd.f32 %v2462, 1.0
    %v2464 = vrcp.pop %v2463
    %v2465 = vmul.f32 1.0, %v2464
    %v2466 = vadd.f32 %v2454, %v2236
    %v2467 = vxor.u32 %v2466, 2147483648
    %v2468 = vmul.f32 %v2467, 1.442695
    %v2469 = vpow.pop %v2468
    %v2470 = vadd.f32 %v2469, 1.0
    %v2471 = vrcp.pop %v2470
    %v2472 = vmul.f32 1.0, %v2471
    %v2473 = vadd.f32 %v2305, %v227
    %v2474 = vmul.f32 %v2465, %v2473
    %v2475 = vadd.f32 %v2455, %v2474
    %v2476 = vtanh.pop %v2475
    %v2477 = vsub.f32 1.0, %v2472
    %v2478 = vmul.f32 %v2477, %v2476
    %v2479 = vmul.f32 %v2472, %v2166
    %v2480 = vadd.f32 %v2478, %v2479
    %2481 = vmatprep.subr.mxu0 %v216
    %2482 = vmatpush1.msra.mxu0 %v215
    %2483 = vmatprep.subr.mxu0 %v209
    %2484 = vmatpush1.msra.mxu0 %v208
    %2485 = vmatprep.subr.mxu0 %v202
    %2486 = vmatpush1.msra.mxu0 %v201
    %2487 = vmatprep.subr.mxu0 %v195
    %2488 = vmatpush1.msra.mxu0 %v194
    %2489 = vmatprep.subr.mxu0 %v188
    %2490 = vmatpush1.msra.mxu0 %v187
    %2491 = vmatprep.subr.mxu0 %v181
    %2492 = vmatpush1.msra.mxu0 %v180
    %2493 = vmatprep.subr.mxu0 %v174
    %2494 = vmatpush1.msra.mxu0 %v173
    %2495 = vmatprep.subr.mxu0 %v167
    %2496 = vmatpush1.msra.mxu0 %v166
    %2497 = vmatprep.subr.mxu0 %v160
    %2498 = vmatpush1.msra.mxu0 %v159
    %2499 = vmatprep.subr.mxu0 %v153
    %2500 = vmatpush1.msra.mxu0 %v152
    %2501 = vmatprep.subr.mxu0 %v146
    %2502 = vmatpush1.msra.mxu0 %v145
    %2503 = vmatprep.subr.mxu0 %v139
    %2504 = vmatpush1.msra.mxu0 %v138
    %2505 = vmatprep.subr.mxu0 %v132
    %2506 = vmatpush1.msra.mxu0 %v131
    %2507 = vmatprep.subr.mxu0 %v125
    %2508 = vmatpush1.msra.mxu0 %v124
    %2509 = vmatprep.subr.mxu0 %v118
    %2510 = vmatpush1.msra.mxu0 %v117
    %2511 = vmatprep.subr.mxu0 %v111
    %2512 = vmatpush1.msra.mxu0 %v110
    %2513 = vmatprep.subr.mxu0 0.0
    %2514 = vmatpush2.msra.mxu0 0.0
    %2515 = vmatprep.subr.mxu0 0.0
    %2516 = vmatpush2.msra.mxu0 0.0
    %2517 = vmatprep.subr.mxu0 0.0
    %2518 = vmatpush2.msra.mxu0 0.0
    %2519 = vmatprep.subr.mxu0 0.0
    %2520 = vmatpush2.msra.mxu0 0.0
    %2521 = vmatprep.subr.mxu0 0.0
    %2522 = vmatpush2.msra.mxu0 0.0
    %2523 = vmatprep.subr.mxu0 0.0
    %2524 = vmatpush2.msra.mxu0 0.0
    %2525 = vmatprep.subr.mxu0 0.0
    %2526 = vmatpush2.msra.mxu0 0.0
    %2527 = vmatprep.subr.mxu0 0.0
    %2528 = vmatpush2.msra.mxu0 0.0
    %2529 = vmatprep.subr.mxu0 0.0
    %2530 = vmatpush2.msra.mxu0 0.0
    %2531 = vmatprep.subr.mxu0 0.0
    %2532 = vmatpush2.msra.mxu0 0.0
    %2533 = vmatprep.subr.mxu0 0.0
    %2534 = vmatpush2.msra.mxu0 0.0
    %2535 = vmatprep.subr.mxu0 0.0
    %2536 = vmatpush2.msra.mxu0 0.0
    %2537 = vmatprep.subr.mxu0 0.0
    %2538 = vmatpush2.msra.mxu0 0.0
    %2539 = vmatprep.subr.mxu0 0.0
    %2540 = vmatpush2.msra.mxu0 0.0
    %2541 = vmatprep.subr.mxu0 0.0
    %2542 = vmatpush2.msra.mxu0 0.0
    %2543 = vmatprep.subr.mxu0 0.0
    %2544 = vmatpush2.msra.mxu0 0.0
    %2545 = vmatprep.mubr.f32.mxu0 0.0
    %2546 = vmatmul.mubr.f32.gmra.mxu0 %v2480
    %v2547 = vpop.f32.mrf.mxu0
    %v2548 = vadd.f32 0.0, %v2547
    %v2549 = vpop.f32.mrf.mxu0
    %v2550 = vadd.f32 0.0, %v2549
    %2551 = vdwg.mxu0
    %2552 = vmatprep.subr.mxu0 %v218
    %2553 = vmatpush1.msra.mxu0 %v217
    %2554 = vmatprep.subr.mxu0 %v211
    %2555 = vmatpush1.msra.mxu0 %v210
    %2556 = vmatprep.subr.mxu0 %v204
    %2557 = vmatpush1.msra.mxu0 %v203
    %2558 = vmatprep.subr.mxu0 %v197
    %2559 = vmatpush1.msra.mxu0 %v196
    %2560 = vmatprep.subr.mxu0 %v190
    %2561 = vmatpush1.msra.mxu0 %v189
    %2562 = vmatprep.subr.mxu0 %v183
    %2563 = vmatpush1.msra.mxu0 %v182
    %2564 = vmatprep.subr.mxu0 %v176
    %2565 = vmatpush1.msra.mxu0 %v175
    %2566 = vmatprep.subr.mxu0 %v169
    %2567 = vmatpush1.msra.mxu0 %v168
    %2568 = vmatprep.subr.mxu0 %v162
    %2569 = vmatpush1.msra.mxu0 %v161
    %2570 = vmatprep.subr.mxu0 %v155
    %2571 = vmatpush1.msra.mxu0 %v154
    %2572 = vmatprep.subr.mxu0 %v148
    %2573 = vmatpush1.msra.mxu0 %v147
    %2574 = vmatprep.subr.mxu0 %v141
    %2575 = vmatpush1.msra.mxu0 %v140
    %2576 = vmatprep.subr.mxu0 %v134
    %2577 = vmatpush1.msra.mxu0 %v133
    %2578 = vmatprep.subr.mxu0 %v127
    %2579 = vmatpush1.msra.mxu0 %v126
    %2580 = vmatprep.subr.mxu0 %v120
    %2581 = vmatpush1.msra.mxu0 %v119
    %2582 = vmatprep.subr.mxu0 %v113
    %2583 = vmatpush1.msra.mxu0 %v112
    %2584 = vmatprep.subr.mxu0 0.0
    %2585 = vmatpush2.msra.mxu0 0.0
    %2586 = vmatprep.subr.mxu0 0.0
    %2587 = vmatpush2.msra.mxu0 0.0
    %2588 = vmatprep.subr.mxu0 0.0
    %2589 = vmatpush2.msra.mxu0 0.0
    %2590 = vmatprep.subr.mxu0 0.0
    %2591 = vmatpush2.msra.mxu0 0.0
    %2592 = vmatprep.subr.mxu0 0.0
    %2593 = vmatpush2.msra.mxu0 0.0
    %2594 = vmatprep.subr.mxu0 0.0
    %2595 = vmatpush2.msra.mxu0 0.0
    %2596 = vmatprep.subr.mxu0 0.0
    %2597 = vmatpush2.msra.mxu0 0.0
    %2598 = vmatprep.subr.mxu0 0.0
    %2599 = vmatpush2.msra.mxu0 0.0
    %2600 = vmatprep.subr.mxu0 0.0
    %2601 = vmatpush2.msra.mxu0 0.0
    %2602 = vmatprep.subr.mxu0 0.0
    %2603 = vmatpush2.msra.mxu0 0.0
    %2604 = vmatprep.subr.mxu0 0.0
    %2605 = vmatpush2.msra.mxu0 0.0
    %2606 = vmatprep.subr.mxu0 0.0
    %2607 = vmatpush2.msra.mxu0 0.0
    %2608 = vmatprep.subr.mxu0 0.0
    %2609 = vmatpush2.msra.mxu0 0.0
    %2610 = vmatprep.subr.mxu0 0.0
    %2611 = vmatpush2.msra.mxu0 0.0
    %2612 = vmatprep.subr.mxu0 0.0
    %2613 = vmatpush2.msra.mxu0 0.0
    %2614 = vmatprep.subr.mxu0 0.0
    %2615 = vmatpush2.msra.mxu0 0.0
    %2616 = vmatprep.mubr.f32.mxu0 0.0
    %2617 = vmatmul.mubr.f32.gmra.mxu0 %v2480
    %v2618 = vpop.f32.mrf.mxu0
    %v2619 = vadd.f32 0.0, %v2618
    %v2620 = vpop.f32.mrf.mxu0
    %v2621 = vadd.f32 0.0, %v2620
    %2622 = vdwg.mxu0
    %2623 = vmatprep.subr.mxu0 %v220
    %2624 = vmatpush1.msra.mxu0 %v219
    %2625 = vmatprep.subr.mxu0 %v213
    %2626 = vmatpush1.msra.mxu0 %v212
    %2627 = vmatprep.subr.mxu0 %v206
    %2628 = vmatpush1.msra.mxu0 %v205
    %2629 = vmatprep.subr.mxu0 %v199
    %2630 = vmatpush1.msra.mxu0 %v198
    %2631 = vmatprep.subr.mxu0 %v192
    %2632 = vmatpush1.msra.mxu0 %v191
    %2633 = vmatprep.subr.mxu0 %v185
    %2634 = vmatpush1.msra.mxu0 %v184
    %2635 = vmatprep.subr.mxu0 %v178
    %2636 = vmatpush1.msra.mxu0 %v177
    %2637 = vmatprep.subr.mxu0 %v171
    %2638 = vmatpush1.msra.mxu0 %v170
    %2639 = vmatprep.subr.mxu0 %v164
    %2640 = vmatpush1.msra.mxu0 %v163
    %2641 = vmatprep.subr.mxu0 %v157
    %2642 = vmatpush1.msra.mxu0 %v156
    %2643 = vmatprep.subr.mxu0 %v150
    %2644 = vmatpush1.msra.mxu0 %v149
    %2645 = vmatprep.subr.mxu0 %v143
    %2646 = vmatpush1.msra.mxu0 %v142
    %2647 = vmatprep.subr.mxu0 %v136
    %2648 = vmatpush1.msra.mxu0 %v135
    %2649 = vmatprep.subr.mxu0 %v129
    %2650 = vmatpush1.msra.mxu0 %v128
    %2651 = vmatprep.subr.mxu0 %v122
    %2652 = vmatpush1.msra.mxu0 %v121
    %2653 = vmatprep.subr.mxu0 %v115
    %2654 = vmatpush1.msra.mxu0 %v114
    %2655 = vmatprep.subr.mxu0 0.0
    %2656 = vmatpush2.msra.mxu0 0.0
    %2657 = vmatprep.subr.mxu0 0.0
    %2658 = vmatpush2.msra.mxu0 0.0
    %2659 = vmatprep.subr.mxu0 0.0
    %2660 = vmatpush2.msra.mxu0 0.0
    %2661 = vmatprep.subr.mxu0 0.0
    %2662 = vmatpush2.msra.mxu0 0.0
    %2663 = vmatprep.subr.mxu0 0.0
    %2664 = vmatpush2.msra.mxu0 0.0
    %2665 = vmatprep.subr.mxu0 0.0
    %2666 = vmatpush2.msra.mxu0 0.0
    %2667 = vmatprep.subr.mxu0 0.0
    %2668 = vmatpush2.msra.mxu0 0.0
    %2669 = vmatprep.subr.mxu0 0.0
    %2670 = vmatpush2.msra.mxu0 0.0
    %2671 = vmatprep.subr.mxu0 0.0
    %2672 = vmatpush2.msra.mxu0 0.0
    %2673 = vmatprep.subr.mxu0 0.0
    %2674 = vmatpush2.msra.mxu0 0.0
    %2675 = vmatprep.subr.mxu0 0.0
    %2676 = vmatpush2.msra.mxu0 0.0
    %2677 = vmatprep.subr.mxu0 0.0
    %2678 = vmatpush2.msra.mxu0 0.0
    %2679 = vmatprep.subr.mxu0 0.0
    %2680 = vmatpush2.msra.mxu0 0.0
    %2681 = vmatprep.subr.mxu0 0.0
    %2682 = vmatpush2.msra.mxu0 0.0
    %2683 = vmatprep.subr.mxu0 0.0
    %2684 = vmatpush2.msra.mxu0 0.0
    %2685 = vmatprep.subr.mxu0 0.0
    %2686 = vmatpush2.msra.mxu0 0.0
    %2687 = vmatprep.mubr.f32.mxu0 0.0
    %2688 = vmatmul.mubr.f32.gmra.mxu0 %v2480
    %v2689 = vpop.f32.mrf.mxu0
    %v2690 = vadd.f32 0.0, %v2689
    %v2691 = vpop.f32.mrf.mxu0
    %v2692 = vadd.f32 0.0, %v2691
    %2693 = vdwg.mxu0
    %2694 = vmatprep.subr.mxu0 0.0
    %2695 = vmatpush1.msra.mxu0 %v221
    %2696 = vmatprep.subr.mxu0 0.0
    %2697 = vmatpush1.msra.mxu0 %v214
    %2698 = vmatprep.subr.mxu0 0.0
    %2699 = vmatpush1.msra.mxu0 %v207
    %2700 = vmatprep.subr.mxu0 0.0
    %2701 = vmatpush1.msra.mxu0 %v200
    %2702 = vmatprep.subr.mxu0 0.0
    %2703 = vmatpush1.msra.mxu0 %v193
    %2704 = vmatprep.subr.mxu0 0.0
    %2705 = vmatpush1.msra.mxu0 %v186
    %2706 = vmatprep.subr.mxu0 0.0
    %2707 = vmatpush1.msra.mxu0 %v179
    %2708 = vmatprep.subr.mxu0 0.0
    %2709 = vmatpush1.msra.mxu0 %v172
    %2710 = vmatprep.subr.mxu0 0.0
    %2711 = vmatpush1.msra.mxu0 %v165
    %2712 = vmatprep.subr.mxu0 0.0
    %2713 = vmatpush1.msra.mxu0 %v158
    %2714 = vmatprep.subr.mxu0 0.0
    %2715 = vmatpush1.msra.mxu0 %v151
    %2716 = vmatprep.subr.mxu0 0.0
    %2717 = vmatpush1.msra.mxu0 %v144
    %2718 = vmatprep.subr.mxu0 0.0
    %2719 = vmatpush1.msra.mxu0 %v137
    %2720 = vmatprep.subr.mxu0 0.0
    %2721 = vmatpush1.msra.mxu0 %v130
    %2722 = vmatprep.subr.mxu0 0.0
    %2723 = vmatpush1.msra.mxu0 %v123
    %2724 = vmatprep.subr.mxu0 0.0
    %2725 = vmatpush1.msra.mxu0 %v116
    %2726 = vmatprep.subr.mxu0 0.0
    %2727 = vmatpush2.msra.mxu0 0.0
    %2728 = vmatprep.subr.mxu0 0.0
    %2729 = vmatpush2.msra.mxu0 0.0
    %2730 = vmatprep.subr.mxu0 0.0
    %2731 = vmatpush2.msra.mxu0 0.0
    %2732 = vmatprep.subr.mxu0 0.0
    %2733 = vmatpush2.msra.mxu0 0.0
    %2734 = vmatprep.subr.mxu0 0.0
    %2735 = vmatpush2.msra.mxu0 0.0
    %2736 = vmatprep.subr.mxu0 0.0
    %2737 = vmatpush2.msra.mxu0 0.0
    %2738 = vmatprep.subr.mxu0 0.0
    %2739 = vmatpush2.msra.mxu0 0.0
    %2740 = vmatprep.subr.mxu0 0.0
    %2741 = vmatpush2.msra.mxu0 0.0
    %2742 = vmatprep.subr.mxu0 0.0
    %2743 = vmatpush2.msra.mxu0 0.0
    %2744 = vmatprep.subr.mxu0 0.0
    %2745 = vmatpush2.msra.mxu0 0.0
    %2746 = vmatprep.subr.mxu0 0.0
    %2747 = vmatpush2.msra.mxu0 0.0
    %2748 = vmatprep.subr.mxu0 0.0
    %2749 = vmatpush2.msra.mxu0 0.0
    %2750 = vmatprep.subr.mxu0 0.0
    %2751 = vmatpush2.msra.mxu0 0.0
    %2752 = vmatprep.subr.mxu0 0.0
    %2753 = vmatpush2.msra.mxu0 0.0
    %2754 = vmatprep.subr.mxu0 0.0
    %2755 = vmatpush2.msra.mxu0 0.0
    %2756 = vmatprep.subr.mxu0 0.0
    %2757 = vmatpush2.msra.mxu0 0.0
    %2758 = vmatprep.mubr.f32.mxu0 0.0
    %2759 = vmatmul.mubr.f32.gmra.mxu0 %v2480
    %v2760 = vpop.f32.mrf.mxu0
    %v2761 = vadd.f32 0.0, %v2760
    %v2762 = vpop.f32.mrf.mxu0
    %2763 = vdwg.mxu0
    %v2764 = vadd.f32 %v2453, %v2621
    %v2765 = vadd.f32 %v2454, %v2690
    %v2766 = vadd.f32 %v2455, %v2692
    %v2767 = vadd.f32 %v2764, %v234
    %v2768 = vadd.f32 %v2765, %v238
    %v2769 = vadd.f32 %v2766, %v242
    %v2770 = vadd.f32 %v2457, %v2761
    %v2771 = vadd.f32 %v2770, %v251
    %2772 = vst [vmem:[#allocation15 + $0x38] sm:$0xff] %v2771
    %2773 = vst [vmem:[#allocation2] sm:$0xff] %v2771
    %2774 = vst [vmem:[#allocation3] sm:$0xff] %v2480
    %2775 = vst [vmem:[#allocation4] sm:$0xff] %v2767
    %2776 = vst [vmem:[#allocation4 + $0x8] sm:$0xff] %v2768
    %2777 = vst [vmem:[#allocation4 + $0x10] sm:$0xff] %v2769
    %2778 = vst [vmem:[#allocation5] sm:$0xff] %v2548
    %2779 = vst [vmem:[#allocation5 + $0x8] sm:$0xff] %v2550
    %2780 = vst [vmem:[#allocation5 + $0x10] sm:$0xff] %v2619
    // Predicated region
    $region58: #{tpu_custom_call.1} parent=1 // pred_check
      _
    $region59: #{tpu_custom_call.1} parent=1 // pred_check_branch
      %2782 = sbr.rel (0) target = $region61
    $region60: #{tpu_custom_call.1} parent=1 // pred_region
      %s2784 = ssub.s32 1024, 1024
      %2785 = vsyncadd [#allocation8], %s2784
      %s2787 = sshll.u32 [#allocation15], 4
      %s2788 = int_to_ptr.vmem [resolvable:$true] %s2787
      %2790 = dma.vmem_to_hbm [thread:$0]  %s2788, 1024, %s8, [#allocation8]
    $region61: #{tpu_custom_call.1} parent=1 // pred_fallthru
      _
    // Predicated region
    $region62: #{tpu_custom_call.1} parent=1 // pred_check
      _
    $region63: #{tpu_custom_call.1} parent=1 // pred_check_branch
      %2792 = sbr.rel (0) target = $region65
    $region64: #{tpu_custom_call.1} parent=1 // pred_region
      %2793 = dma.done [#allocation8], 1024
    $region65: #{tpu_custom_call.1} parent=1 // pred_fallthru
      _
    %2794 = vsyncpa [#allocation7], 1
    %2795 = vsyncpa [#allocation10], 1
    %2796 = vsyncpa [#allocation13], 1
    %2797 = vsyncpa [#allocation8], 1

</llo_original>
